<compile_context>
chip_gen: v6e
topology: v6e:2x2x1
jax: 0.10.0
libtpu: 0.0.40
codegen_flags: <defaults>
</compile_context>

<pallas_src>
import math
import functools

import jax
import jax.numpy as jnp
from jax import lax
from jax.experimental import pallas as pl
from jax.experimental.pallas import tpu as pltpu

BN_EPS = 1e-5


# ---------------------------------------------------------------------------
# Fused ConvBlockRes kernel (one batch element per grid step)
# ---------------------------------------------------------------------------
def _conv_block_res_kernel(x_ref, w1_ref, s1_ref, b1_ref,
                           w2_ref, s2_ref, b2_ref, *rest,
                           H, W, cin, cout, has_shortcut):
    """Refs:
      x_ref    : (1, H+2, W+2, cin)  f32  spatially zero-padded input tile
      w1_ref   : (9, cin,  cout)     bf16 conv1 weights, tap-major (dy, dx)
      w2_ref   : (9, cout, cout)     bf16 conv2 weights
      s*/b*    : (1, cout)           f32  folded eval-mode BatchNorm scale/bias
      wsc_ref  : (cin, cout)         bf16 1x1 shortcut weight   [if has_shortcut]
      bsc_ref  : (1, cout)           f32  1x1 shortcut bias     [if has_shortcut]
      o_ref    : (1, H, W, cout)     f32  output tile
      ypad_ref : (H+2, W+2, cout)    bf16 VMEM scratch (padded conv1 activation)
    """
    if has_shortcut:
        wsc_ref, bsc_ref, o_ref, ypad_ref = rest
    else:
        o_ref, ypad_ref = rest

    taps = [(dy, dx) for dy in range(3) for dx in range(3)]

    def conv3x3(img, w_ref, c):
        # 3x3 "same" conv as 9 shifted (H*W, c) x (c, cout) matmuls accumulated
        # in f32.  All patches stay in VMEM/vregs — no HBM im2col round trip.
        acc = None
        for t, (dy, dx) in enumerate(taps):
            patch = img[dy:dy + H, dx:dx + W, :].reshape(H * W, c)
            part = jnp.dot(patch, w_ref[t], preferred_element_type=jnp.float32)
            acc = part if acc is None else acc + part
        return acc

    x = x_ref[0]                                     # (H+2, W+2, cin) f32
    x_bf = x.astype(jnp.bfloat16)                    # bf16 MXU operands

    # conv1 -> folded BN -> ReLU
    y1 = conv3x3(x_bf, w1_ref, cin)
    y1 = jnp.maximum(y1 * s1_ref[...] + b1_ref[...], 0.0)

    # Re-pad the intermediate activation inside VMEM for the second 3x3 conv.
    ypad_ref[...] = jnp.zeros_like(ypad_ref)
    ypad_ref[pl.ds(1, H), pl.ds(1, W), :] = (
        y1.reshape(H, W, cout).astype(jnp.bfloat16))

    # conv2 -> folded BN -> ReLU
    y2 = conv3x3(ypad_ref[...], w2_ref, cout)
    y2 = jnp.maximum(y2 * s2_ref[...] + b2_ref[...], 0.0)

    # Residual path fused into the same epilogue (identity or 1x1 conv + bias).
    xc = x[1:H + 1, 1:W + 1, :].reshape(H * W, cin)
    if has_shortcut:
        res = jnp.dot(xc.astype(jnp.bfloat16), wsc_ref[...],
                      preferred_element_type=jnp.float32) + bsc_ref[...]
    else:
        res = xc                                     # cin == cout: identity (f32)

    o_ref[0] = (y2 + res).reshape(H, W, cout).astype(o_ref.dtype)


def _make_pallas_call(n, H, W, cin, cout, has_shortcut):
    # TODO(synk): feature maps whose (H+2)*(W+2)*C working set exceeds VMEM
    #             would need spatial row-tiling with halo DMA; not needed here.
    hp, wp = H + 2, W + 2
    kernel = functools.partial(_conv_block_res_kernel, H=H, W=W, cin=cin,
                               cout=cout, has_shortcut=has_shortcut)
    vec_spec = pl.BlockSpec((1, cout), lambda b: (0, 0))
    in_specs = [
        pl.BlockSpec((1, hp, wp, cin), lambda b: (b, 0, 0, 0)),
        pl.BlockSpec((9, cin, cout), lambda b: (0, 0, 0)),
        vec_spec, vec_spec,
        pl.BlockSpec((9, cout, cout), lambda b: (0, 0, 0)),
        vec_spec, vec_spec,
    ]
    if has_shortcut:
        in_specs += [pl.BlockSpec((cin, cout), lambda b: (0, 0)), vec_spec]
    return pl.pallas_call(
        kernel,
        out_shape=jax.ShapeDtypeStruct((n, H, W, cout), jnp.float32),
        grid_spec=pltpu.PrefetchScalarGridSpec(
            num_scalar_prefetch=0,
            grid=(n,),
            in_specs=in_specs,
            out_specs=pl.BlockSpec((1, H, W, cout), lambda b: (b, 0, 0, 0)),
            scratch_shapes=[pltpu.VMEM((hp, wp, cout), jnp.bfloat16)],
        ),
        compiler_params=pltpu.CompilerParams(
            dimension_semantics=("parallel",)),   # batch -> both TCs on v7x
    )


# ---------------------------------------------------------------------------
# Public forward (PyTorch NCHW in / NCHW out), fully under one jax.jit
# ---------------------------------------------------------------------------
@jax.jit
def conv_block_res_forward(x_nchw, params):
    n, cin, h, w = x_nchw.shape
    cout = params["s1"].shape[-1]
    has_shortcut = "wsc" in params
    x = jnp.transpose(x_nchw, (0, 2, 3, 1)).astype(jnp.float32)     # NHWC
    xp = jnp.pad(x, ((0, 0), (1, 1), (1, 1), (0, 0)))               # spatial halo
    args = [xp, params["w1"], params["s1"], params["b1"],
            params["w2"], params["s2"], params["b2"]]
    if has_shortcut:
        args += [params["wsc"], params["bsc"]]
    out = _make_pallas_call(n, h, w, cin, cout, has_shortcut)(*args)
    return jnp.transpose(out, (0, 3, 1, 2))                         # NCHW


# ---------------------------------------------------------------------------
# Parameter init / packing (transposes, reshapes, bf16 cast hoisted to init)
# ---------------------------------------------------------------------------
def _fold_bn_eval(cout):
    # torch BatchNorm2d init: weight=1, bias=0, running_mean=0, running_var=1
    scale = jnp.full((1, cout), 1.0 / math.sqrt(1.0 + BN_EPS), jnp.float32)
    bias = jnp.zeros((1, cout), jnp.float32)
    return scale, bias


def _pack_conv3x3(w_oihw):
    cout, cin = w_oihw.shape[0], w_oihw.shape[1]
    # (Cout, Cin, 3, 3) -> (9 taps [dy*3+dx], Cin, Cout), bf16 MXU operand
    return (jnp.transpose(w_oihw, (2, 3, 1, 0))
            .reshape(9, cin, cout).astype(jnp.bfloat16))


def init_conv_block_res(key, cin, cout):
    """Deterministic synthetic weights mirroring the torch module __init__."""
    k1, k2, k3 = jax.random.split(key, 3)
    raw = {
        "w1": math.sqrt(2.0 / (cin * 9)) *
              jax.random.normal(k1, (cout, cin, 3, 3), jnp.float32),
        "w2": math.sqrt(2.0 / (cout * 9)) *
              jax.random.normal(k2, (cout, cout, 3, 3), jnp.float32),
    }
    packed = {"w1": _pack_conv3x3(raw["w1"]), "w2": _pack_conv3x3(raw["w2"])}
    packed["s1"], packed["b1"] = _fold_bn_eval(cout)
    packed["s2"], packed["b2"] = _fold_bn_eval(cout)
    if cin != cout:
        raw["wsc"] = math.sqrt(1.0 / cin) * jax.random.normal(
            k3, (cout, cin, 1, 1), jnp.float32)
        raw["bsc"] = jnp.zeros((cout,), jnp.float32)
        packed["wsc"] = jnp.transpose(
            raw["wsc"].reshape(cout, cin)).astype(jnp.bfloat16)
        packed["bsc"] = raw["bsc"].reshape(1, cout)
    return packed, raw


# ---------------------------------------------------------------------------
# Pure-JAX f32 reference (for numeric validation of the Pallas kernel)
# ---------------------------------------------------------------------------
def reference_forward(x_nchw, raw):
    x = jnp.transpose(x_nchw, (0, 2, 3, 1)).astype(jnp.float32)

    def conv3x3(inp, w_oihw):
        return lax.conv_general_dilated(
            inp, jnp.transpose(w_oihw, (2, 3, 1, 0)),
            window_strides=(1, 1), padding=((1, 1), (1, 1)),
            dimension_numbers=("NHWC", "HWIO", "NHWC"))

    s = 1.0 / math.sqrt(1.0 + BN_EPS)
    y = jnp.maximum(conv3x3(x, raw["w1"]) * s, 0.0)
    y = jnp.maximum(conv3x3(y, raw["w2"]) * s, 0.0)
    if "wsc" in raw:
        cout, cin = raw["wsc"].shape[:2]
        res = jnp.einsum("nhwc,oc->nhwo", x,
                         raw["wsc"].reshape(cout, cin)) + raw["bsc"]
    else:
        res = x
    return jnp.transpose(y + res, (0, 3, 1, 2))


if __name__ == "__main__":
    key = jax.random.PRNGKey(0)
    kx1, kx2, kp1, kp2 = jax.random.split(key, 4)

    B, Cin, Cout, H, W = 2, 4, 8, 16, 16

    # 1) in_channels != out_channels -> 1x1-conv shortcut path
    x1 = jax.random.normal(kx1, (B, Cin, H, W), dtype=jnp.float32)
    p1, raw1 = init_conv_block_res(kp1, Cin, Cout)
    y1 = jax.block_until_ready(conv_block_res_forward(x1, p1))
    ref1 = reference_forward(x1, raw1)
    assert y1.shape == (B, Cout, H, W) and y1.dtype == jnp.float32
    assert bool(jnp.all(jnp.isfinite(y1)))
    err1 = float(jnp.max(jnp.abs(y1 - ref1)))
    tol1 = 0.03 * float(jnp.max(jnp.abs(ref1))) + 0.05
    assert err1 <= tol1, (err1, tol1)

    # 2) in_channels == out_channels -> identity residual path
    x2 = jax.random.normal(kx2, (B, Cout, H, W), dtype=jnp.float32)
    p2, raw2 = init_conv_block_res(kp2, Cout, Cout)
    y2 = jax.block_until_ready(conv_block_res_forward(x2, p2))
    ref2 = reference_forward(x2, raw2)
    assert y2.shape == (B, Cout, H, W) and y2.dtype == jnp.float32
    assert bool(jnp.all(jnp.isfinite(y2)))
    err2 = float(jnp.max(jnp.abs(y2 - ref2)))
    tol2 = 0.03 * float(jnp.max(jnp.abs(ref2))) + 0.05
    assert err2 <= tol2, (err2, tol2)

    print("KERNEL_OK")
</pallas_src>

<mosaic_0001>
module attributes {stable_mosaic.version = 11 : i64} {
  func.func @_conv_block_res_kernel(%arg0: i32, %arg1: memref<1x18x18x4xf32, #tpu.memory_space<vmem>>, %arg2: memref<9x4x8xbf16, #tpu.memory_space<vmem>>, %arg3: memref<1x8xf32, #tpu.memory_space<vmem>>, %arg4: memref<1x8xf32, #tpu.memory_space<vmem>>, %arg5: memref<9x8x8xbf16, #tpu.memory_space<vmem>>, %arg6: memref<1x8xf32, #tpu.memory_space<vmem>>, %arg7: memref<1x8xf32, #tpu.memory_space<vmem>>, %arg8: memref<4x8xbf16, #tpu.memory_space<vmem>>, %arg9: memref<1x8xf32, #tpu.memory_space<vmem>>, %arg10: memref<1x16x16x8xf32, #tpu.memory_space<vmem>>, %arg11: memref<18x18x8xbf16, #tpu.memory_space<vmem>>) attributes {dimension_semantics = [#tpu.dimension_semantics<parallel>], iteration_bounds = array<i64: 2>, scalar_prefetch = 0 : i64, scratch_operands = 1 : i64, tpu.core_type = #tpu.core_type<tc>, window_params = [{transform_indices = @transform_0, window_bounds = array<i64: 1, 18, 18, 4>}, {pipeline_mode = #tpu.pipeline_mode<synchronous>, transform_indices = @transform_1, window_bounds = array<i64: 9, 4, 8>}, {pipeline_mode = #tpu.pipeline_mode<synchronous>, transform_indices = @transform_2, window_bounds = array<i64: 1, 8>}, {pipeline_mode = #tpu.pipeline_mode<synchronous>, transform_indices = @transform_3, window_bounds = array<i64: 1, 8>}, {pipeline_mode = #tpu.pipeline_mode<synchronous>, transform_indices = @transform_4, window_bounds = array<i64: 9, 8, 8>}, {pipeline_mode = #tpu.pipeline_mode<synchronous>, transform_indices = @transform_5, window_bounds = array<i64: 1, 8>}, {pipeline_mode = #tpu.pipeline_mode<synchronous>, transform_indices = @transform_6, window_bounds = array<i64: 1, 8>}, {pipeline_mode = #tpu.pipeline_mode<synchronous>, transform_indices = @transform_7, window_bounds = array<i64: 4, 8>}, {pipeline_mode = #tpu.pipeline_mode<synchronous>, transform_indices = @transform_8, window_bounds = array<i64: 1, 8>}, {transform_indices = @transform_9, window_bounds = array<i64: 1, 16, 16, 8>}]} {
    %c0 = arith.constant 0 : index
    %c0_0 = arith.constant 0 : index
    %c0_1 = arith.constant 0 : index
    %c0_2 = arith.constant 0 : index
    %0 = vector.load %arg1[%c0, %c0_0, %c0_1, %c0_2] : memref<1x18x18x4xf32, #tpu.memory_space<vmem>>, vector<1x18x18x4xf32>
    %1 = vector.shape_cast %0 : vector<1x18x18x4xf32> to vector<18x18x4xf32>
    %2 = arith.truncf %1 : vector<18x18x4xf32> to vector<18x18x4xbf16>
    %3 = vector.extract_strided_slice %2 {offsets = [0, 0, 0], sizes = [16, 16, 4], strides = [1, 1, 1]} : vector<18x18x4xbf16> to vector<16x16x4xbf16>
    %4 = vector.shape_cast %3 : vector<16x16x4xbf16> to vector<256x4xbf16>
    %c0_3 = arith.constant 0 : index
    %c0_4 = arith.constant 0 : index
    %c0_5 = arith.constant 0 : index
    %5 = vector.load %arg2[%c0_3, %c0_4, %c0_5] : memref<9x4x8xbf16, #tpu.memory_space<vmem>>, vector<1x4x8xbf16>
    %6 = vector.shape_cast %5 : vector<1x4x8xbf16> to vector<4x8xbf16>
    %cst = arith.constant dense<0.000000e+00> : vector<256x8xf32>
    %7 = tpu.matmul %4, %6, %cst {dimension_numbers = #tpu.dot_dimension_numbers<[1], [0], [0], [1], [0, 0, 1, 1], [], []>} : vector<256x4xbf16>, vector<4x8xbf16>, vector<256x8xf32> -> vector<256x8xf32>
    %8 = vector.extract_strided_slice %2 {offsets = [0, 1, 0], sizes = [16, 16, 4], strides = [1, 1, 1]} : vector<18x18x4xbf16> to vector<16x16x4xbf16>
    %9 = vector.shape_cast %8 : vector<16x16x4xbf16> to vector<256x4xbf16>
    %c1 = arith.constant 1 : index
    %c0_6 = arith.constant 0 : index
    %c0_7 = arith.constant 0 : index
    %10 = vector.load %arg2[%c1, %c0_6, %c0_7] : memref<9x4x8xbf16, #tpu.memory_space<vmem>>, vector<1x4x8xbf16>
    %11 = vector.shape_cast %10 : vector<1x4x8xbf16> to vector<4x8xbf16>
    %cst_8 = arith.constant dense<0.000000e+00> : vector<256x8xf32>
    %12 = tpu.matmul %9, %11, %cst_8 {dimension_numbers = #tpu.dot_dimension_numbers<[1], [0], [0], [1], [0, 0, 1, 1], [], []>} : vector<256x4xbf16>, vector<4x8xbf16>, vector<256x8xf32> -> vector<256x8xf32>
    %13 = arith.addf %7, %12 : vector<256x8xf32>
    %14 = vector.extract_strided_slice %2 {offsets = [0, 2, 0], sizes = [16, 16, 4], strides = [1, 1, 1]} : vector<18x18x4xbf16> to vector<16x16x4xbf16>
    %15 = vector.shape_cast %14 : vector<16x16x4xbf16> to vector<256x4xbf16>
    %c2 = arith.constant 2 : index
    %c0_9 = arith.constant 0 : index
    %c0_10 = arith.constant 0 : index
    %16 = vector.load %arg2[%c2, %c0_9, %c0_10] : memref<9x4x8xbf16, #tpu.memory_space<vmem>>, vector<1x4x8xbf16>
    %17 = vector.shape_cast %16 : vector<1x4x8xbf16> to vector<4x8xbf16>
    %cst_11 = arith.constant dense<0.000000e+00> : vector<256x8xf32>
    %18 = tpu.matmul %15, %17, %cst_11 {dimension_numbers = #tpu.dot_dimension_numbers<[1], [0], [0], [1], [0, 0, 1, 1], [], []>} : vector<256x4xbf16>, vector<4x8xbf16>, vector<256x8xf32> -> vector<256x8xf32>
    %19 = arith.addf %13, %18 : vector<256x8xf32>
    %20 = vector.extract_strided_slice %2 {offsets = [1, 0, 0], sizes = [16, 16, 4], strides = [1, 1, 1]} : vector<18x18x4xbf16> to vector<16x16x4xbf16>
    %21 = vector.shape_cast %20 : vector<16x16x4xbf16> to vector<256x4xbf16>
    %c3 = arith.constant 3 : index
    %c0_12 = arith.constant 0 : index
    %c0_13 = arith.constant 0 : index
    %22 = vector.load %arg2[%c3, %c0_12, %c0_13] : memref<9x4x8xbf16, #tpu.memory_space<vmem>>, vector<1x4x8xbf16>
    %23 = vector.shape_cast %22 : vector<1x4x8xbf16> to vector<4x8xbf16>
    %cst_14 = arith.constant dense<0.000000e+00> : vector<256x8xf32>
    %24 = tpu.matmul %21, %23, %cst_14 {dimension_numbers = #tpu.dot_dimension_numbers<[1], [0], [0], [1], [0, 0, 1, 1], [], []>} : vector<256x4xbf16>, vector<4x8xbf16>, vector<256x8xf32> -> vector<256x8xf32>
    %25 = arith.addf %19, %24 : vector<256x8xf32>
    %26 = vector.extract_strided_slice %2 {offsets = [1, 1, 0], sizes = [16, 16, 4], strides = [1, 1, 1]} : vector<18x18x4xbf16> to vector<16x16x4xbf16>
    %27 = vector.shape_cast %26 : vector<16x16x4xbf16> to vector<256x4xbf16>
    %c4 = arith.constant 4 : index
    %c0_15 = arith.constant 0 : index
    %c0_16 = arith.constant 0 : index
    %28 = vector.load %arg2[%c4, %c0_15, %c0_16] : memref<9x4x8xbf16, #tpu.memory_space<vmem>>, vector<1x4x8xbf16>
    %29 = vector.shape_cast %28 : vector<1x4x8xbf16> to vector<4x8xbf16>
    %cst_17 = arith.constant dense<0.000000e+00> : vector<256x8xf32>
    %30 = tpu.matmul %27, %29, %cst_17 {dimension_numbers = #tpu.dot_dimension_numbers<[1], [0], [0], [1], [0, 0, 1, 1], [], []>} : vector<256x4xbf16>, vector<4x8xbf16>, vector<256x8xf32> -> vector<256x8xf32>
    %31 = arith.addf %25, %30 : vector<256x8xf32>
    %32 = vector.extract_strided_slice %2 {offsets = [1, 2, 0], sizes = [16, 16, 4], strides = [1, 1, 1]} : vector<18x18x4xbf16> to vector<16x16x4xbf16>
    %33 = vector.shape_cast %32 : vector<16x16x4xbf16> to vector<256x4xbf16>
    %c5 = arith.constant 5 : index
    %c0_18 = arith.constant 0 : index
    %c0_19 = arith.constant 0 : index
    %34 = vector.load %arg2[%c5, %c0_18, %c0_19] : memref<9x4x8xbf16, #tpu.memory_space<vmem>>, vector<1x4x8xbf16>
    %35 = vector.shape_cast %34 : vector<1x4x8xbf16> to vector<4x8xbf16>
    %cst_20 = arith.constant dense<0.000000e+00> : vector<256x8xf32>
    %36 = tpu.matmul %33, %35, %cst_20 {dimension_numbers = #tpu.dot_dimension_numbers<[1], [0], [0], [1], [0, 0, 1, 1], [], []>} : vector<256x4xbf16>, vector<4x8xbf16>, vector<256x8xf32> -> vector<256x8xf32>
    %37 = arith.addf %31, %36 : vector<256x8xf32>
    %38 = vector.extract_strided_slice %2 {offsets = [2, 0, 0], sizes = [16, 16, 4], strides = [1, 1, 1]} : vector<18x18x4xbf16> to vector<16x16x4xbf16>
    %39 = vector.shape_cast %38 : vector<16x16x4xbf16> to vector<256x4xbf16>
    %c6 = arith.constant 6 : index
    %c0_21 = arith.constant 0 : index
    %c0_22 = arith.constant 0 : index
    %40 = vector.load %arg2[%c6, %c0_21, %c0_22] : memref<9x4x8xbf16, #tpu.memory_space<vmem>>, vector<1x4x8xbf16>
    %41 = vector.shape_cast %40 : vector<1x4x8xbf16> to vector<4x8xbf16>
    %cst_23 = arith.constant dense<0.000000e+00> : vector<256x8xf32>
    %42 = tpu.matmul %39, %41, %cst_23 {dimension_numbers = #tpu.dot_dimension_numbers<[1], [0], [0], [1], [0, 0, 1, 1], [], []>} : vector<256x4xbf16>, vector<4x8xbf16>, vector<256x8xf32> -> vector<256x8xf32>
    %43 = arith.addf %37, %42 : vector<256x8xf32>
    %44 = vector.extract_strided_slice %2 {offsets = [2, 1, 0], sizes = [16, 16, 4], strides = [1, 1, 1]} : vector<18x18x4xbf16> to vector<16x16x4xbf16>
    %45 = vector.shape_cast %44 : vector<16x16x4xbf16> to vector<256x4xbf16>
    %c7 = arith.constant 7 : index
    %c0_24 = arith.constant 0 : index
    %c0_25 = arith.constant 0 : index
    %46 = vector.load %arg2[%c7, %c0_24, %c0_25] : memref<9x4x8xbf16, #tpu.memory_space<vmem>>, vector<1x4x8xbf16>
    %47 = vector.shape_cast %46 : vector<1x4x8xbf16> to vector<4x8xbf16>
    %cst_26 = arith.constant dense<0.000000e+00> : vector<256x8xf32>
    %48 = tpu.matmul %45, %47, %cst_26 {dimension_numbers = #tpu.dot_dimension_numbers<[1], [0], [0], [1], [0, 0, 1, 1], [], []>} : vector<256x4xbf16>, vector<4x8xbf16>, vector<256x8xf32> -> vector<256x8xf32>
    %49 = arith.addf %43, %48 : vector<256x8xf32>
    %50 = vector.extract_strided_slice %2 {offsets = [2, 2, 0], sizes = [16, 16, 4], strides = [1, 1, 1]} : vector<18x18x4xbf16> to vector<16x16x4xbf16>
    %51 = vector.shape_cast %50 : vector<16x16x4xbf16> to vector<256x4xbf16>
    %c8 = arith.constant 8 : index
    %c0_27 = arith.constant 0 : index
    %c0_28 = arith.constant 0 : index
    %52 = vector.load %arg2[%c8, %c0_27, %c0_28] : memref<9x4x8xbf16, #tpu.memory_space<vmem>>, vector<1x4x8xbf16>
    %53 = vector.shape_cast %52 : vector<1x4x8xbf16> to vector<4x8xbf16>
    %cst_29 = arith.constant dense<0.000000e+00> : vector<256x8xf32>
    %54 = tpu.matmul %51, %53, %cst_29 {dimension_numbers = #tpu.dot_dimension_numbers<[1], [0], [0], [1], [0, 0, 1, 1], [], []>} : vector<256x4xbf16>, vector<4x8xbf16>, vector<256x8xf32> -> vector<256x8xf32>
    %55 = arith.addf %49, %54 : vector<256x8xf32>
    %c0_30 = arith.constant 0 : index
    %c0_31 = arith.constant 0 : index
    %56 = vector.load %arg3[%c0_30, %c0_31] : memref<1x8xf32, #tpu.memory_space<vmem>>, vector<1x8xf32>
    %57 = vector.broadcast %56 : vector<1x8xf32> to vector<256x8xf32>
    %58 = arith.mulf %55, %57 : vector<256x8xf32>
    %c0_32 = arith.constant 0 : index
    %c0_33 = arith.constant 0 : index
    %59 = vector.load %arg4[%c0_32, %c0_33] : memref<1x8xf32, #tpu.memory_space<vmem>>, vector<1x8xf32>
    %60 = vector.broadcast %59 : vector<1x8xf32> to vector<256x8xf32>
    %61 = arith.addf %58, %60 : vector<256x8xf32>
    %cst_34 = arith.constant 0.000000e+00 : f32
    %62 = vector.broadcast %cst_34 : f32 to vector<256x8xf32>
    %63 = arith.maximumf %61, %62 : vector<256x8xf32>
    %cst_35 = arith.constant 0.000000e+00 : bf16
    %64 = vector.broadcast %cst_35 : bf16 to vector<18x18x8xbf16>
    %c0_36 = arith.constant 0 : index
    %c0_37 = arith.constant 0 : index
    %c0_38 = arith.constant 0 : index
    %65 = vector.load %arg11[%c0_36, %c0_37, %c0_38] : memref<18x18x8xbf16, #tpu.memory_space<vmem>>, vector<18x18x8xbf16>
    tpu.vector_store %arg11[%c0_36, %c0_37, %c0_38], %64 {strides = array<i32>} : memref<18x18x8xbf16, #tpu.memory_space<vmem>>, vector<18x18x8xbf16>,
    %66 = vector.shape_cast %63 : vector<256x8xf32> to vector<16x16x8xf32>
    %67 = arith.truncf %66 : vector<16x16x8xf32> to vector<16x16x8xbf16>
    %c1_39 = arith.constant 1 : index
    %c1_40 = arith.constant 1 : index
    %c0_41 = arith.constant 0 : index
    %68 = vector.load %arg11[%c1_39, %c1_40, %c0_41] : memref<18x18x8xbf16, #tpu.memory_space<vmem>>, vector<16x16x8xbf16>
    tpu.vector_store %arg11[%c1_39, %c1_40, %c0_41], %67 {strides = array<i32>} : memref<18x18x8xbf16, #tpu.memory_space<vmem>>, vector<16x16x8xbf16>,
    %c0_42 = arith.constant 0 : index
    %c0_43 = arith.constant 0 : index
    %c0_44 = arith.constant 0 : index
    %69 = vector.load %arg11[%c0_42, %c0_43, %c0_44] : memref<18x18x8xbf16, #tpu.memory_space<vmem>>, vector<18x18x8xbf16>
    %70 = vector.extract_strided_slice %69 {offsets = [0, 0, 0], sizes = [16, 16, 8], strides = [1, 1, 1]} : vector<18x18x8xbf16> to vector<16x16x8xbf16>
    %71 = vector.shape_cast %70 : vector<16x16x8xbf16> to vector<256x8xbf16>
    %c0_45 = arith.constant 0 : index
    %c0_46 = arith.constant 0 : index
    %c0_47 = arith.constant 0 : index
    %72 = vector.load %arg5[%c0_45, %c0_46, %c0_47] : memref<9x8x8xbf16, #tpu.memory_space<vmem>>, vector<1x8x8xbf16>
    %73 = vector.shape_cast %72 : vector<1x8x8xbf16> to vector<8x8xbf16>
    %cst_48 = arith.constant dense<0.000000e+00> : vector<256x8xf32>
    %74 = tpu.matmul %71, %73, %cst_48 {dimension_numbers = #tpu.dot_dimension_numbers<[1], [0], [0], [1], [0, 0, 1, 1], [], []>} : vector<256x8xbf16>, vector<8x8xbf16>, vector<256x8xf32> -> vector<256x8xf32>
    %75 = vector.extract_strided_slice %69 {offsets = [0, 1, 0], sizes = [16, 16, 8], strides = [1, 1, 1]} : vector<18x18x8xbf16> to vector<16x16x8xbf16>
    %76 = vector.shape_cast %75 : vector<16x16x8xbf16> to vector<256x8xbf16>
    %c1_49 = arith.constant 1 : index
    %c0_50 = arith.constant 0 : index
    %c0_51 = arith.constant 0 : index
    %77 = vector.load %arg5[%c1_49, %c0_50, %c0_51] : memref<9x8x8xbf16, #tpu.memory_space<vmem>>, vector<1x8x8xbf16>
    %78 = vector.shape_cast %77 : vector<1x8x8xbf16> to vector<8x8xbf16>
    %cst_52 = arith.constant dense<0.000000e+00> : vector<256x8xf32>
    %79 = tpu.matmul %76, %78, %cst_52 {dimension_numbers = #tpu.dot_dimension_numbers<[1], [0], [0], [1], [0, 0, 1, 1], [], []>} : vector<256x8xbf16>, vector<8x8xbf16>, vector<256x8xf32> -> vector<256x8xf32>
    %80 = arith.addf %74, %79 : vector<256x8xf32>
    %81 = vector.extract_strided_slice %69 {offsets = [0, 2, 0], sizes = [16, 16, 8], strides = [1, 1, 1]} : vector<18x18x8xbf16> to vector<16x16x8xbf16>
    %82 = vector.shape_cast %81 : vector<16x16x8xbf16> to vector<256x8xbf16>
    %c2_53 = arith.constant 2 : index
    %c0_54 = arith.constant 0 : index
    %c0_55 = arith.constant 0 : index
    %83 = vector.load %arg5[%c2_53, %c0_54, %c0_55] : memref<9x8x8xbf16, #tpu.memory_space<vmem>>, vector<1x8x8xbf16>
    %84 = vector.shape_cast %83 : vector<1x8x8xbf16> to vector<8x8xbf16>
    %cst_56 = arith.constant dense<0.000000e+00> : vector<256x8xf32>
    %85 = tpu.matmul %82, %84, %cst_56 {dimension_numbers = #tpu.dot_dimension_numbers<[1], [0], [0], [1], [0, 0, 1, 1], [], []>} : vector<256x8xbf16>, vector<8x8xbf16>, vector<256x8xf32> -> vector<256x8xf32>
    %86 = arith.addf %80, %85 : vector<256x8xf32>
    %87 = vector.extract_strided_slice %69 {offsets = [1, 0, 0], sizes = [16, 16, 8], strides = [1, 1, 1]} : vector<18x18x8xbf16> to vector<16x16x8xbf16>
    %88 = vector.shape_cast %87 : vector<16x16x8xbf16> to vector<256x8xbf16>
    %c3_57 = arith.constant 3 : index
    %c0_58 = arith.constant 0 : index
    %c0_59 = arith.constant 0 : index
    %89 = vector.load %arg5[%c3_57, %c0_58, %c0_59] : memref<9x8x8xbf16, #tpu.memory_space<vmem>>, vector<1x8x8xbf16>
    %90 = vector.shape_cast %89 : vector<1x8x8xbf16> to vector<8x8xbf16>
    %cst_60 = arith.constant dense<0.000000e+00> : vector<256x8xf32>
    %91 = tpu.matmul %88, %90, %cst_60 {dimension_numbers = #tpu.dot_dimension_numbers<[1], [0], [0], [1], [0, 0, 1, 1], [], []>} : vector<256x8xbf16>, vector<8x8xbf16>, vector<256x8xf32> -> vector<256x8xf32>
    %92 = arith.addf %86, %91 : vector<256x8xf32>
    %93 = vector.extract_strided_slice %69 {offsets = [1, 1, 0], sizes = [16, 16, 8], strides = [1, 1, 1]} : vector<18x18x8xbf16> to vector<16x16x8xbf16>
    %94 = vector.shape_cast %93 : vector<16x16x8xbf16> to vector<256x8xbf16>
    %c4_61 = arith.constant 4 : index
    %c0_62 = arith.constant 0 : index
    %c0_63 = arith.constant 0 : index
    %95 = vector.load %arg5[%c4_61, %c0_62, %c0_63] : memref<9x8x8xbf16, #tpu.memory_space<vmem>>, vector<1x8x8xbf16>
    %96 = vector.shape_cast %95 : vector<1x8x8xbf16> to vector<8x8xbf16>
    %cst_64 = arith.constant dense<0.000000e+00> : vector<256x8xf32>
    %97 = tpu.matmul %94, %96, %cst_64 {dimension_numbers = #tpu.dot_dimension_numbers<[1], [0], [0], [1], [0, 0, 1, 1], [], []>} : vector<256x8xbf16>, vector<8x8xbf16>, vector<256x8xf32> -> vector<256x8xf32>
    %98 = arith.addf %92, %97 : vector<256x8xf32>
    %99 = vector.extract_strided_slice %69 {offsets = [1, 2, 0], sizes = [16, 16, 8], strides = [1, 1, 1]} : vector<18x18x8xbf16> to vector<16x16x8xbf16>
    %100 = vector.shape_cast %99 : vector<16x16x8xbf16> to vector<256x8xbf16>
    %c5_65 = arith.constant 5 : index
    %c0_66 = arith.constant 0 : index
    %c0_67 = arith.constant 0 : index
    %101 = vector.load %arg5[%c5_65, %c0_66, %c0_67] : memref<9x8x8xbf16, #tpu.memory_space<vmem>>, vector<1x8x8xbf16>
    %102 = vector.shape_cast %101 : vector<1x8x8xbf16> to vector<8x8xbf16>
    %cst_68 = arith.constant dense<0.000000e+00> : vector<256x8xf32>
    %103 = tpu.matmul %100, %102, %cst_68 {dimension_numbers = #tpu.dot_dimension_numbers<[1], [0], [0], [1], [0, 0, 1, 1], [], []>} : vector<256x8xbf16>, vector<8x8xbf16>, vector<256x8xf32> -> vector<256x8xf32>
    %104 = arith.addf %98, %103 : vector<256x8xf32>
    %105 = vector.extract_strided_slice %69 {offsets = [2, 0, 0], sizes = [16, 16, 8], strides = [1, 1, 1]} : vector<18x18x8xbf16> to vector<16x16x8xbf16>
    %106 = vector.shape_cast %105 : vector<16x16x8xbf16> to vector<256x8xbf16>
    %c6_69 = arith.constant 6 : index
    %c0_70 = arith.constant 0 : index
    %c0_71 = arith.constant 0 : index
    %107 = vector.load %arg5[%c6_69, %c0_70, %c0_71] : memref<9x8x8xbf16, #tpu.memory_space<vmem>>, vector<1x8x8xbf16>
    %108 = vector.shape_cast %107 : vector<1x8x8xbf16> to vector<8x8xbf16>
    %cst_72 = arith.constant dense<0.000000e+00> : vector<256x8xf32>
    %109 = tpu.matmul %106, %108, %cst_72 {dimension_numbers = #tpu.dot_dimension_numbers<[1], [0], [0], [1], [0, 0, 1, 1], [], []>} : vector<256x8xbf16>, vector<8x8xbf16>, vector<256x8xf32> -> vector<256x8xf32>
    %110 = arith.addf %104, %109 : vector<256x8xf32>
    %111 = vector.extract_strided_slice %69 {offsets = [2, 1, 0], sizes = [16, 16, 8], strides = [1, 1, 1]} : vector<18x18x8xbf16> to vector<16x16x8xbf16>
    %112 = vector.shape_cast %111 : vector<16x16x8xbf16> to vector<256x8xbf16>
    %c7_73 = arith.constant 7 : index
    %c0_74 = arith.constant 0 : index
    %c0_75 = arith.constant 0 : index
    %113 = vector.load %arg5[%c7_73, %c0_74, %c0_75] : memref<9x8x8xbf16, #tpu.memory_space<vmem>>, vector<1x8x8xbf16>
    %114 = vector.shape_cast %113 : vector<1x8x8xbf16> to vector<8x8xbf16>
    %cst_76 = arith.constant dense<0.000000e+00> : vector<256x8xf32>
    %115 = tpu.matmul %112, %114, %cst_76 {dimension_numbers = #tpu.dot_dimension_numbers<[1], [0], [0], [1], [0, 0, 1, 1], [], []>} : vector<256x8xbf16>, vector<8x8xbf16>, vector<256x8xf32> -> vector<256x8xf32>
    %116 = arith.addf %110, %115 : vector<256x8xf32>
    %117 = vector.extract_strided_slice %69 {offsets = [2, 2, 0], sizes = [16, 16, 8], strides = [1, 1, 1]} : vector<18x18x8xbf16> to vector<16x16x8xbf16>
    %118 = vector.shape_cast %117 : vector<16x16x8xbf16> to vector<256x8xbf16>
    %c8_77 = arith.constant 8 : index
    %c0_78 = arith.constant 0 : index
    %c0_79 = arith.constant 0 : index
    %119 = vector.load %arg5[%c8_77, %c0_78, %c0_79] : memref<9x8x8xbf16, #tpu.memory_space<vmem>>, vector<1x8x8xbf16>
    %120 = vector.shape_cast %119 : vector<1x8x8xbf16> to vector<8x8xbf16>
    %cst_80 = arith.constant dense<0.000000e+00> : vector<256x8xf32>
    %121 = tpu.matmul %118, %120, %cst_80 {dimension_numbers = #tpu.dot_dimension_numbers<[1], [0], [0], [1], [0, 0, 1, 1], [], []>} : vector<256x8xbf16>, vector<8x8xbf16>, vector<256x8xf32> -> vector<256x8xf32>
    %122 = arith.addf %116, %121 : vector<256x8xf32>
    %c0_81 = arith.constant 0 : index
    %c0_82 = arith.constant 0 : index
    %123 = vector.load %arg6[%c0_81, %c0_82] : memref<1x8xf32, #tpu.memory_space<vmem>>, vector<1x8xf32>
    %124 = vector.broadcast %123 : vector<1x8xf32> to vector<256x8xf32>
    %125 = arith.mulf %122, %124 : vector<256x8xf32>
    %c0_83 = arith.constant 0 : index
    %c0_84 = arith.constant 0 : index
    %126 = vector.load %arg7[%c0_83, %c0_84] : memref<1x8xf32, #tpu.memory_space<vmem>>, vector<1x8xf32>
    %127 = vector.broadcast %126 : vector<1x8xf32> to vector<256x8xf32>
    %128 = arith.addf %125, %127 : vector<256x8xf32>
    %cst_85 = arith.constant 0.000000e+00 : f32
    %129 = vector.broadcast %cst_85 : f32 to vector<256x8xf32>
    %130 = arith.maximumf %128, %129 : vector<256x8xf32>
    %131 = vector.extract_strided_slice %1 {offsets = [1, 1, 0], sizes = [16, 16, 4], strides = [1, 1, 1]} : vector<18x18x4xf32> to vector<16x16x4xf32>
    %132 = vector.shape_cast %131 : vector<16x16x4xf32> to vector<256x4xf32>
    %133 = arith.truncf %132 : vector<256x4xf32> to vector<256x4xbf16>
    %c0_86 = arith.constant 0 : index
    %c0_87 = arith.constant 0 : index
    %134 = vector.load %arg8[%c0_86, %c0_87] : memref<4x8xbf16, #tpu.memory_space<vmem>>, vector<4x8xbf16>
    %cst_88 = arith.constant dense<0.000000e+00> : vector<256x8xf32>
    %135 = tpu.matmul %133, %134, %cst_88 {dimension_numbers = #tpu.dot_dimension_numbers<[1], [0], [0], [1], [0, 0, 1, 1], [], []>} : vector<256x4xbf16>, vector<4x8xbf16>, vector<256x8xf32> -> vector<256x8xf32>
    %c0_89 = arith.constant 0 : index
    %c0_90 = arith.constant 0 : index
    %136 = vector.load %arg9[%c0_89, %c0_90] : memref<1x8xf32, #tpu.memory_space<vmem>>, vector<1x8xf32>
    %137 = vector.broadcast %136 : vector<1x8xf32> to vector<256x8xf32>
    %138 = arith.addf %135, %137 : vector<256x8xf32>
    %139 = arith.addf %130, %138 : vector<256x8xf32>
    %140 = vector.shape_cast %139 : vector<256x8xf32> to vector<16x16x8xf32>
    %c0_91 = arith.constant 0 : index
    %c0_92 = arith.constant 0 : index
    %c0_93 = arith.constant 0 : index
    %c0_94 = arith.constant 0 : index
    %141 = vector.load %arg10[%c0_91, %c0_92, %c0_93, %c0_94] : memref<1x16x16x8xf32, #tpu.memory_space<vmem>>, vector<1x16x16x8xf32>
    %142 = vector.shape_cast %141 : vector<1x16x16x8xf32> to vector<16x16x8xf32>
    %143 = vector.shape_cast %140 : vector<16x16x8xf32> to vector<1x16x16x8xf32>
    tpu.vector_store %arg10[%c0_91, %c0_92, %c0_93, %c0_94], %143 {strides = array<i32>} : memref<1x16x16x8xf32, #tpu.memory_space<vmem>>, vector<1x16x16x8xf32>,
    return
  }
  func.func @transform_0(%arg0: i32) -> (i32, i32, i32, i32) {
    %c0_i32 = arith.constant 0 : i32
    %c0_i32_0 = arith.constant 0 : i32
    %c0_i32_1 = arith.constant 0 : i32
    %c0_i32_2 = arith.constant 0 : i32
    return %arg0, %c0_i32, %c0_i32_0, %c0_i32_1 : i32, i32, i32, i32
  }
  func.func @transform_1(%arg0: i32) -> (i32, i32, i32) {
    %c0_i32 = arith.constant 0 : i32
    %c0_i32_0 = arith.constant 0 : i32
    %c0_i32_1 = arith.constant 0 : i32
    %c0_i32_2 = arith.constant 0 : i32
    return %c0_i32, %c0_i32_0, %c0_i32_1 : i32, i32, i32
  }
  func.func @transform_2(%arg0: i32) -> (i32, i32) {
    %c0_i32 = arith.constant 0 : i32
    %c0_i32_0 = arith.constant 0 : i32
    %c0_i32_1 = arith.constant 0 : i32
    return %c0_i32, %c0_i32_0 : i32, i32
  }
  func.func @transform_3(%arg0: i32) -> (i32, i32) {
    %c0_i32 = arith.constant 0 : i32
    %c0_i32_0 = arith.constant 0 : i32
    %c0_i32_1 = arith.constant 0 : i32
    return %c0_i32, %c0_i32_0 : i32, i32
  }
  func.func @transform_4(%arg0: i32) -> (i32, i32, i32) {
    %c0_i32 = arith.constant 0 : i32
    %c0_i32_0 = arith.constant 0 : i32
    %c0_i32_1 = arith.constant 0 : i32
    %c0_i32_2 = arith.constant 0 : i32
    return %c0_i32, %c0_i32_0, %c0_i32_1 : i32, i32, i32
  }
  func.func @transform_5(%arg0: i32) -> (i32, i32) {
    %c0_i32 = arith.constant 0 : i32
    %c0_i32_0 = arith.constant 0 : i32
    %c0_i32_1 = arith.constant 0 : i32
    return %c0_i32, %c0_i32_0 : i32, i32
  }
  func.func @transform_6(%arg0: i32) -> (i32, i32) {
    %c0_i32 = arith.constant 0 : i32
    %c0_i32_0 = arith.constant 0 : i32
    %c0_i32_1 = arith.constant 0 : i32
    return %c0_i32, %c0_i32_0 : i32, i32
  }
  func.func @transform_7(%arg0: i32) -> (i32, i32) {
    %c0_i32 = arith.constant 0 : i32
    %c0_i32_0 = arith.constant 0 : i32
    %c0_i32_1 = arith.constant 0 : i32
    return %c0_i32, %c0_i32_0 : i32, i32
  }
  func.func @transform_8(%arg0: i32) -> (i32, i32) {
    %c0_i32 = arith.constant 0 : i32
    %c0_i32_0 = arith.constant 0 : i32
    %c0_i32_1 = arith.constant 0 : i32
    return %c0_i32, %c0_i32_0 : i32, i32
  }
  func.func @transform_9(%arg0: i32) -> (i32, i32, i32, i32) {
    %c0_i32 = arith.constant 0 : i32
    %c0_i32_0 = arith.constant 0 : i32
    %c0_i32_1 = arith.constant 0 : i32
    %c0_i32_2 = arith.constant 0 : i32
    return %arg0, %c0_i32, %c0_i32_0, %c0_i32_1 : i32, i32, i32, i32
  }
}

</mosaic_0001>

<llo_original>
// kernel: conv_block_res_forward.1
$region0: #{conv_block_res_forward.1}
  #allocation0 [shape = 'u32[]', space=smem, size = 0x4, offset = 0x4, fixed_abs, tag = 'smem constant byte address 0x4 - core index']
  #allocation1 [shape = 'u32[144,128]{1,0:T(1,128)}', space=vmem, size = 0x12000, scoped, tag = 'internal scratch']
  #allocation2 [shape = 'bf16[18,18,8]{2,1,0:T(8,128)(2,1)}', space=vmem, size = 0x1b000, scoped, tag = 'scratch operand']
  %s0 = inlined_call_operand.vmem [shape: f32[2,18,18,4], index: 0, kind: input, shape index: {}]
  %s1 = inlined_call_operand.vmem [shape: bf16[9,4,8], index: 1, kind: input, shape index: {}]
  %s2 = inlined_call_operand.vmem [shape: f32[1,8], index: 2, kind: input, shape index: {}]
  %s3 = inlined_call_operand.vmem [shape: f32[1,8], index: 3, kind: input, shape index: {}]
  %s4 = inlined_call_operand.vmem [shape: bf16[9,8,8], index: 4, kind: input, shape index: {}]
  %s5 = inlined_call_operand.vmem [shape: f32[1,8], index: 5, kind: input, shape index: {}]
  %s6 = inlined_call_operand.vmem [shape: f32[1,8], index: 6, kind: input, shape index: {}]
  %s7 = inlined_call_operand.vmem [shape: bf16[4,8], index: 7, kind: input, shape index: {}]
  %s8 = inlined_call_operand.vmem [shape: f32[1,8], index: 8, kind: input, shape index: {}]
  %s9 = inlined_call_operand.vmem [shape: f32[2,16,16,8], index: 9, kind: output, shape index: {}]
  %s10 = sld [smem:[#allocation0]]
  $region69: #{conv_block_res_forward.1} parent=0
    _
  %s12 = ssub.s32 1, %s10
  %s13 = scalar_select 0, %s12, %s10
  loop: start=0, step=1, limit=4
  $region2: #{conv_block_res_forward.1} parent=0 // loop_pre_header
    _
  $region3: #{conv_block_res_forward.1} parent=0 // loop_header
    %s15 = sphi 0, %s19
    %p16 = scmp.ge.s32.totalorder %s15, 4
    %s25 = sphi 0, %s27
    %s28 = sphi 0, %s25
    %s29 = sphi 0, %s28
    %s45 = sphi 0, %s29
    %s49 = sphi 0, %s49
    %s51 = sphi 0, %s49
    %s52 = sphi 0, %s51
    %s66 = sphi 0, %s52
    %s70 = sphi 0, %s70
    %s72 = sphi 0, %s70
    %s73 = sphi 0, %s72
    %s87 = sphi 0, %s73
    %s91 = sphi 0, %s91
    %s93 = sphi 0, %s91
    %s94 = sphi 0, %s93
    %s108 = sphi 0, %s94
    %s112 = sphi 0, %s112
    %s114 = sphi 0, %s112
    %s115 = sphi 0, %s114
    %s129 = sphi 0, %s115
    %s133 = sphi 0, %s133
    %s135 = sphi 0, %s133
    %s136 = sphi 0, %s135
    %s150 = sphi 0, %s136
    %s154 = sphi 0, %s154
    %s156 = sphi 0, %s154
    %s157 = sphi 0, %s156
    %s171 = sphi 0, %s157
    %s175 = sphi 0, %s175
    %s177 = sphi 0, %s175
    %s178 = sphi 0, %s177
    %s192 = sphi 0, %s178
    %s196 = sphi 0, %s196
    %s198 = sphi 0, %s196
    %s199 = sphi 0, %s198
    %s213 = sphi 0, %s199
    %s219 = sphi 0, %s221
    %s222 = sphi 0, %s219
    %s223 = sphi 0, %s222
    %s239 = sphi 0, %s223
  $region4: #{conv_block_res_forward.1} parent=0 // loop_header_branch
    %18 = sbr.rel (%p16) target = $region8
  $region5: #{conv_block_res_forward.1} parent=0 // loop_body
    %s20 = ssub.s32 %s15, 1
    %s21 = ssub.s32 %s15, 2
    %s22 = sadd.s32 %s15, 1
    %s23 = ssub.s32 %s15, %s22
    %p24 = scmp.eq.s32.totalorder %s23, 0
    %s26 = sadd.s32 %s25, 1
    %s27 = scalar_select %p24, %s25, %s26
    %p30 = pneg %p24
    %p31 = scmp.eq.s32.totalorder %s15, 1
    %p32 = por %p30, %p31
    %p33 = scmp.ne.s32.totalorder %s25, %s28
    %p34 = scmp.eq.s32.totalorder %s15, 0
    %p35 = por %p33, %p34
    %p36 = scmp.ne.s32.totalorder %s25, %s28
    %p37 = scmp.eq.s32.totalorder %s20, 1
    %p38 = por %p36, %p37
    %p39 = scmp.ne.s32.totalorder %s28, %s29
    %p40 = scmp.eq.s32.totalorder %s20, 0
    %p41 = por %p39, %p40
    %p42 = scmp.ne.s32.totalorder %s28, %s29
    %p43 = scmp.eq.s32.totalorder %s21, 1
    %p44 = por %p42, %p43
    %p46 = scmp.ne.s32.totalorder %s29, %s45
    %p47 = scmp.eq.s32.totalorder %s21, 0
    %p48 = por %p46, %p47
    %s50 = sadd.s32 %s49, 1
    %p53 = scmp.eq.s32.totalorder %s15, 1
    %p54 = scmp.ne.s32.totalorder %s49, %s51
    %p55 = scmp.eq.s32.totalorder %s15, 0
    %p56 = por %p54, %p55
    %p57 = scmp.ne.s32.totalorder %s49, %s51
    %p58 = scmp.eq.s32.totalorder %s20, 1
    %p59 = por %p57, %p58
    %p60 = scmp.ne.s32.totalorder %s51, %s52
    %p61 = scmp.eq.s32.totalorder %s20, 0
    %p62 = por %p60, %p61
    %p63 = scmp.ne.s32.totalorder %s51, %s52
    %p64 = scmp.eq.s32.totalorder %s21, 1
    %p65 = por %p63, %p64
    %p67 = scmp.ne.s32.totalorder %s52, %s66
    %p68 = scmp.eq.s32.totalorder %s21, 0
    %p69 = por %p67, %p68
    %s71 = sadd.s32 %s70, 1
    %p74 = scmp.eq.s32.totalorder %s15, 1
    %p75 = scmp.ne.s32.totalorder %s70, %s72
    %p76 = scmp.eq.s32.totalorder %s15, 0
    %p77 = por %p75, %p76
    %p78 = scmp.ne.s32.totalorder %s70, %s72
    %p79 = scmp.eq.s32.totalorder %s20, 1
    %p80 = por %p78, %p79
    %p81 = scmp.ne.s32.totalorder %s72, %s73
    %p82 = scmp.eq.s32.totalorder %s20, 0
    %p83 = por %p81, %p82
    %p84 = scmp.ne.s32.totalorder %s72, %s73
    %p85 = scmp.eq.s32.totalorder %s21, 1
    %p86 = por %p84, %p85
    %p88 = scmp.ne.s32.totalorder %s73, %s87
    %p89 = scmp.eq.s32.totalorder %s21, 0
    %p90 = por %p88, %p89
    %s92 = sadd.s32 %s91, 1
    %p95 = scmp.eq.s32.totalorder %s15, 1
    %p96 = scmp.ne.s32.totalorder %s91, %s93
    %p97 = scmp.eq.s32.totalorder %s15, 0
    %p98 = por %p96, %p97
    %p99 = scmp.ne.s32.totalorder %s91, %s93
    %p100 = scmp.eq.s32.totalorder %s20, 1
    %p101 = por %p99, %p100
    %p102 = scmp.ne.s32.totalorder %s93, %s94
    %p103 = scmp.eq.s32.totalorder %s20, 0
    %p104 = por %p102, %p103
    %p105 = scmp.ne.s32.totalorder %s93, %s94
    %p106 = scmp.eq.s32.totalorder %s21, 1
    %p107 = por %p105, %p106
    %p109 = scmp.ne.s32.totalorder %s94, %s108
    %p110 = scmp.eq.s32.totalorder %s21, 0
    %p111 = por %p109, %p110
    %s113 = sadd.s32 %s112, 1
    %p116 = scmp.eq.s32.totalorder %s15, 1
    %p117 = scmp.ne.s32.totalorder %s112, %s114
    %p118 = scmp.eq.s32.totalorder %s15, 0
    %p119 = por %p117, %p118
    %p120 = scmp.ne.s32.totalorder %s112, %s114
    %p121 = scmp.eq.s32.totalorder %s20, 1
    %p122 = por %p120, %p121
    %p123 = scmp.ne.s32.totalorder %s114, %s115
    %p124 = scmp.eq.s32.totalorder %s20, 0
    %p125 = por %p123, %p124
    %p126 = scmp.ne.s32.totalorder %s114, %s115
    %p127 = scmp.eq.s32.totalorder %s21, 1
    %p128 = por %p126, %p127
    %p130 = scmp.ne.s32.totalorder %s115, %s129
    %p131 = scmp.eq.s32.totalorder %s21, 0
    %p132 = por %p130, %p131
    %s134 = sadd.s32 %s133, 1
    %p137 = scmp.eq.s32.totalorder %s15, 1
    %p138 = scmp.ne.s32.totalorder %s133, %s135
    %p139 = scmp.eq.s32.totalorder %s15, 0
    %p140 = por %p138, %p139
    %p141 = scmp.ne.s32.totalorder %s133, %s135
    %p142 = scmp.eq.s32.totalorder %s20, 1
    %p143 = por %p141, %p142
    %p144 = scmp.ne.s32.totalorder %s135, %s136
    %p145 = scmp.eq.s32.totalorder %s20, 0
    %p146 = por %p144, %p145
    %p147 = scmp.ne.s32.totalorder %s135, %s136
    %p148 = scmp.eq.s32.totalorder %s21, 1
    %p149 = por %p147, %p148
    %p151 = scmp.ne.s32.totalorder %s136, %s150
    %p152 = scmp.eq.s32.totalorder %s21, 0
    %p153 = por %p151, %p152
    %s155 = sadd.s32 %s154, 1
    %p158 = scmp.eq.s32.totalorder %s15, 1
    %p159 = scmp.ne.s32.totalorder %s154, %s156
    %p160 = scmp.eq.s32.totalorder %s15, 0
    %p161 = por %p159, %p160
    %p162 = scmp.ne.s32.totalorder %s154, %s156
    %p163 = scmp.eq.s32.totalorder %s20, 1
    %p164 = por %p162, %p163
    %p165 = scmp.ne.s32.totalorder %s156, %s157
    %p166 = scmp.eq.s32.totalorder %s20, 0
    %p167 = por %p165, %p166
    %p168 = scmp.ne.s32.totalorder %s156, %s157
    %p169 = scmp.eq.s32.totalorder %s21, 1
    %p170 = por %p168, %p169
    %p172 = scmp.ne.s32.totalorder %s157, %s171
    %p173 = scmp.eq.s32.totalorder %s21, 0
    %p174 = por %p172, %p173
    %s176 = sadd.s32 %s175, 1
    %p179 = scmp.eq.s32.totalorder %s15, 1
    %p180 = scmp.ne.s32.totalorder %s175, %s177
    %p181 = scmp.eq.s32.totalorder %s15, 0
    %p182 = por %p180, %p181
    %p183 = scmp.ne.s32.totalorder %s175, %s177
    %p184 = scmp.eq.s32.totalorder %s20, 1
    %p185 = por %p183, %p184
    %p186 = scmp.ne.s32.totalorder %s177, %s178
    %p187 = scmp.eq.s32.totalorder %s20, 0
    %p188 = por %p186, %p187
    %p189 = scmp.ne.s32.totalorder %s177, %s178
    %p190 = scmp.eq.s32.totalorder %s21, 1
    %p191 = por %p189, %p190
    %p193 = scmp.ne.s32.totalorder %s178, %s192
    %p194 = scmp.eq.s32.totalorder %s21, 0
    %p195 = por %p193, %p194
    %s197 = sadd.s32 %s196, 1
    %p200 = scmp.eq.s32.totalorder %s15, 1
    %p201 = scmp.ne.s32.totalorder %s196, %s198
    %p202 = scmp.eq.s32.totalorder %s15, 0
    %p203 = por %p201, %p202
    %p204 = scmp.ne.s32.totalorder %s196, %s198
    %p205 = scmp.eq.s32.totalorder %s20, 1
    %p206 = por %p204, %p205
    %p207 = scmp.ne.s32.totalorder %s198, %s199
    %p208 = scmp.eq.s32.totalorder %s20, 0
    %p209 = por %p207, %p208
    %p210 = scmp.ne.s32.totalorder %s198, %s199
    %p211 = scmp.eq.s32.totalorder %s21, 1
    %p212 = por %p210, %p211
    %p214 = scmp.ne.s32.totalorder %s199, %s213
    %p215 = scmp.eq.s32.totalorder %s21, 0
    %p216 = por %p214, %p215
    %s217 = ssub.s32 %s15, %s22
    %p218 = scmp.eq.s32.totalorder %s217, 0
    %s220 = sadd.s32 %s219, 1
    %s221 = scalar_select %p218, %s219, %s220
    %p224 = pneg %p218
    %p225 = scmp.eq.s32.totalorder %s15, 1
    %p226 = por %p224, %p225
    %p227 = scmp.ne.s32.totalorder %s219, %s222
    %p228 = scmp.eq.s32.totalorder %s15, 0
    %p229 = por %p227, %p228
    %p230 = scmp.ne.s32.totalorder %s219, %s222
    %p231 = scmp.eq.s32.totalorder %s20, 1
    %p232 = por %p230, %p231
    %p233 = scmp.ne.s32.totalorder %s222, %s223
    %p234 = scmp.eq.s32.totalorder %s20, 0
    %p235 = por %p233, %p234
    %p236 = scmp.ne.s32.totalorder %s222, %s223
    %p237 = scmp.eq.s32.totalorder %s21, 1
    %p238 = por %p236, %p237
    %p240 = scmp.ne.s32.totalorder %s223, %s239
    %p241 = scmp.eq.s32.totalorder %s21, 0
    %p242 = por %p240, %p241
    %p243 = scmp.le.s32.totalorder 1, %s15
    %p244 = scmp.lt.s32.totalorder %s15, 3
    %p245 = pnand %p243, %p244
    %p246 = pneg %p245
    // Predicated region
    $region9: #{conv_block_res_forward.1} parent=5 // pred_check
      _
    $region10: #{conv_block_res_forward.1} parent=5 // pred_check_branch
      %248 = sbr.rel (%p245) target = $region12
    $region11: #{conv_block_res_forward.1} parent=5 // pred_region
      %s249 = ssub.s32 %s15, 1
      // Predicated region
      $region13: #{conv_block_res_forward.1} parent=11 // pred_check
        %p250 = pneg %p62
      $region14: #{conv_block_res_forward.1} parent=11 // pred_check_branch
        %252 = sbr.rel (%p250) target = $region16
      $region15: #{conv_block_res_forward.1} parent=11 // pred_region
        _
      $region16: #{conv_block_res_forward.1} parent=11 // pred_fallthru
        _
      // Predicated region
      $region17: #{conv_block_res_forward.1} parent=11 // pred_check
        %p253 = pneg %p83
      $region18: #{conv_block_res_forward.1} parent=11 // pred_check_branch
        %255 = sbr.rel (%p253) target = $region20
      $region19: #{conv_block_res_forward.1} parent=11 // pred_region
        _
      $region20: #{conv_block_res_forward.1} parent=11 // pred_fallthru
        _
      // Predicated region
      $region21: #{conv_block_res_forward.1} parent=11 // pred_check
        %p256 = pneg %p104
      $region22: #{conv_block_res_forward.1} parent=11 // pred_check_branch
        %258 = sbr.rel (%p256) target = $region24
      $region23: #{conv_block_res_forward.1} parent=11 // pred_region
        _
      $region24: #{conv_block_res_forward.1} parent=11 // pred_fallthru
        _
      // Predicated region
      $region25: #{conv_block_res_forward.1} parent=11 // pred_check
        %p259 = pneg %p125
      $region26: #{conv_block_res_forward.1} parent=11 // pred_check_branch
        %261 = sbr.rel (%p259) target = $region28
      $region27: #{conv_block_res_forward.1} parent=11 // pred_region
        _
      $region28: #{conv_block_res_forward.1} parent=11 // pred_fallthru
        _
      // Predicated region
      $region29: #{conv_block_res_forward.1} parent=11 // pred_check
        %p262 = pneg %p146
      $region30: #{conv_block_res_forward.1} parent=11 // pred_check_branch
        %264 = sbr.rel (%p262) target = $region32
      $region31: #{conv_block_res_forward.1} parent=11 // pred_region
        _
      $region32: #{conv_block_res_forward.1} parent=11 // pred_fallthru
        _
      // Predicated region
      $region33: #{conv_block_res_forward.1} parent=11 // pred_check
        %p265 = pneg %p167
      $region34: #{conv_block_res_forward.1} parent=11 // pred_check_branch
        %267 = sbr.rel (%p265) target = $region36
      $region35: #{conv_block_res_forward.1} parent=11 // pred_region
        _
      $region36: #{conv_block_res_forward.1} parent=11 // pred_fallthru
        _
      // Predicated region
      $region37: #{conv_block_res_forward.1} parent=11 // pred_check
        %p268 = pneg %p188
      $region38: #{conv_block_res_forward.1} parent=11 // pred_check_branch
        %270 = sbr.rel (%p268) target = $region40
      $region39: #{conv_block_res_forward.1} parent=11 // pred_region
        _
      $region40: #{conv_block_res_forward.1} parent=11 // pred_fallthru
        _
      // Predicated region
      $region41: #{conv_block_res_forward.1} parent=11 // pred_check
        %p271 = pneg %p209
      $region42: #{conv_block_res_forward.1} parent=11 // pred_check_branch
        %273 = sbr.rel (%p271) target = $region44
      $region43: #{conv_block_res_forward.1} parent=11 // pred_region
        _
      $region44: #{conv_block_res_forward.1} parent=11 // pred_fallthru
        _
    $region12: #{conv_block_res_forward.1} parent=5 // pred_fallthru
      _
    %p274 = scmp.lt.s32.totalorder %s15, 2
    // Predicated region
    $region45: #{conv_block_res_forward.1} parent=5 // pred_check
      %p275 = pneg %p274
    $region46: #{conv_block_res_forward.1} parent=5 // pred_check_branch
      %277 = sbr.rel (%p275) target = $region48
    $region47: #{conv_block_res_forward.1} parent=5 // pred_region
      // Predicated region
      $region49: #{conv_block_res_forward.1} parent=47 // pred_check
        %p278 = pneg %p35
      $region50: #{conv_block_res_forward.1} parent=47 // pred_check_branch
        %280 = sbr.rel (%p278) target = $region52
      $region51: #{conv_block_res_forward.1} parent=47 // pred_region
        %p281 = scmp.lt.s32.totalorder %s15, 1
        %s282 = scalar_select %p281, %s15, 1
        %s283 = smul.addr %s282, 54
        %s284 = smul.addr %s283, 8
        %s285 = scalar_lea.vmem %s0, %s284
      $region52: #{conv_block_res_forward.1} parent=47 // pred_fallthru
        _
    $region48: #{conv_block_res_forward.1} parent=5 // pred_fallthru
      _
    %p286 = scmp.le.s32.totalorder 1, %s15
    %p287 = scmp.lt.s32.totalorder %s15, 3
    %p288 = pnand %p286, %p287
    %p289 = pneg %p288
    // Predicated region
    $region53: #{conv_block_res_forward.1} parent=5 // pred_check
      _
    $region54: #{conv_block_res_forward.1} parent=5 // pred_check_branch
      %291 = sbr.rel (%p288) target = $region56
    $region55: #{conv_block_res_forward.1} parent=5 // pred_region
      %s292 = ssub.s32 %s15, 1
      %p293 = scmp.lt.s32.totalorder %s20, 1
      %s294 = scalar_select %p293, %s20, 1
      %s295 = smul.addr %s294, 54
      %s296 = smul.addr %s295, 8
      %s297 = scalar_lea.vmem %s0, %s296
      %p298 = pneg %p41
      %p299 = pneg %p38
      %p300 = pneg %p62
      %p301 = pneg %p59
      %p302 = pneg %p83
      %p303 = pneg %p80
      %p304 = pneg %p104
      %p305 = pneg %p101
      %p306 = pneg %p125
      %p307 = pneg %p122
      %p308 = pneg %p146
      %p309 = pneg %p143
      %p310 = pneg %p167
      %p311 = pneg %p164
      %p312 = pneg %p188
      %p313 = pneg %p185
      %p314 = pneg %p209
      %p315 = pneg %p206
      %p316 = pneg %p235
      %p317 = pneg %p232
      %p318 = scmp.lt.s32.totalorder %s20, 1
      %s319 = scalar_select %p318, %s20, 1
      %s320 = smul.addr %s319, 32
      %s321 = smul.addr %s320, 8
      %s322 = scalar_lea.vmem %s9, %s321
      %p323 = scmp.lt.s32.totalorder %s20, 1
      %s324 = scalar_select %p323, %s20, 1
      %s325 = smul.addr %s324, 54
      %s326 = smul.addr %s325, 8
      %s327 = scalar_lea.vmem %s0, %s326
      %p328 = scmp.lt.s32.totalorder %s20, 1
      %s329 = scalar_select %p328, %s20, 1
      %s330 = smul.addr %s329, 32
      %s331 = smul.addr %s330, 8
      %s332 = scalar_lea.vmem %s9, %s331
      %v334 = vld [vmem:[%s327] sm:$0xff]
      %v335 = vld [vmem:[%s327 + $0x8] sm:$0xff]
      %v336 = vld [vmem:[%s327 + $0x10] sm:$0x3]
      %v337 = vld [vmem:[%s327 + $0x18] sm:$0xff]
      %v338 = vld [vmem:[%s327 + $0x20] sm:$0xff]
      %v339 = vld [vmem:[%s327 + $0x28] sm:$0x3]
      %v340 = vld [vmem:[%s327 + $0x30] sm:$0xff]
      %v341 = vld [vmem:[%s327 + $0x38] sm:$0xff]
      %v342 = vld [vmem:[%s327 + $0x40] sm:$0x3]
      %v343 = vld [vmem:[%s327 + $0x48] sm:$0xff]
      %v344 = vld [vmem:[%s327 + $0x50] sm:$0xff]
      %v345 = vld [vmem:[%s327 + $0x58] sm:$0x3]
      %v346 = vld [vmem:[%s327 + $0x60] sm:$0xff]
      %v347 = vld [vmem:[%s327 + $0x68] sm:$0xff]
      %v348 = vld [vmem:[%s327 + $0x70] sm:$0x3]
      %v349 = vld [vmem:[%s327 + $0x78] sm:$0xff]
      %v350 = vld [vmem:[%s327 + $0x80] sm:$0xff]
      %v351 = vld [vmem:[%s327 + $0x88] sm:$0x3]
      %v352 = vld [vmem:[%s327 + $0x90] sm:$0xff]
      %v353 = vld [vmem:[%s327 + $0x98] sm:$0xff]
      %v354 = vld [vmem:[%s327 + $0xa0] sm:$0x3]
      %v355 = vld [vmem:[%s327 + $0xa8] sm:$0xff]
      %v356 = vld [vmem:[%s327 + $0xb0] sm:$0xff]
      %v357 = vld [vmem:[%s327 + $0xb8] sm:$0x3]
      %v358 = vld [vmem:[%s327 + $0xc0] sm:$0xff]
      %v359 = vld [vmem:[%s327 + $0xc8] sm:$0xff]
      %v360 = vld [vmem:[%s327 + $0xd0] sm:$0x3]
      %v361 = vld [vmem:[%s327 + $0xd8] sm:$0xff]
      %v362 = vld [vmem:[%s327 + $0xe0] sm:$0xff]
      %v363 = vld [vmem:[%s327 + $0xe8] sm:$0x3]
      %v364 = vld [vmem:[%s327 + $0xf0] sm:$0xff]
      %v365 = vld [vmem:[%s327 + $0xf8] sm:$0xff]
      %v366 = vld [vmem:[%s327 + $0x100] sm:$0x3]
      %v367 = vld [vmem:[%s327 + $0x108] sm:$0xff]
      %v368 = vld [vmem:[%s327 + $0x110] sm:$0xff]
      %v369 = vld [vmem:[%s327 + $0x118] sm:$0x3]
      %v370 = vld [vmem:[%s327 + $0x120] sm:$0xff]
      %v371 = vld [vmem:[%s327 + $0x128] sm:$0xff]
      %v372 = vld [vmem:[%s327 + $0x130] sm:$0x3]
      %v373 = vld [vmem:[%s327 + $0x138] sm:$0xff]
      %v374 = vld [vmem:[%s327 + $0x140] sm:$0xff]
      %v375 = vld [vmem:[%s327 + $0x148] sm:$0x3]
      %v376 = vld [vmem:[%s327 + $0x150] sm:$0xff]
      %v377 = vld [vmem:[%s327 + $0x158] sm:$0xff]
      %v378 = vld [vmem:[%s327 + $0x160] sm:$0x3]
      %v379 = vld [vmem:[%s327 + $0x168] sm:$0xff]
      %v380 = vld [vmem:[%s327 + $0x170] sm:$0xff]
      %v381 = vld [vmem:[%s327 + $0x178] sm:$0x3]
      %v382 = vld [vmem:[%s327 + $0x180] sm:$0xff]
      %v383 = vld [vmem:[%s327 + $0x188] sm:$0xff]
      %v384 = vld [vmem:[%s327 + $0x190] sm:$0x3]
      %v385 = vld [vmem:[%s327 + $0x198] sm:$0xff]
      %v386 = vld [vmem:[%s327 + $0x1a0] sm:$0xff]
      %v387 = vld [vmem:[%s327 + $0x1a8] sm:$0x3]
      %v388 = vpack.c.bf16 %v335, %v334
      %v389 = vpack.c.bf16 %v336, %v336
      %v390 = vpack.c.bf16 %v338, %v337
      %v391 = vpack.c.bf16 %v339, %v339
      %v392 = vpack.c.bf16 %v341, %v340
      %v393 = vpack.c.bf16 %v342, %v342
      %v394 = vpack.c.bf16 %v344, %v343
      %v395 = vpack.c.bf16 %v345, %v345
      %v396 = vpack.c.bf16 %v347, %v346
      %v397 = vpack.c.bf16 %v348, %v348
      %v398 = vpack.c.bf16 %v350, %v349
      %v399 = vpack.c.bf16 %v351, %v351
      %v400 = vpack.c.bf16 %v353, %v352
      %v401 = vpack.c.bf16 %v354, %v354
      %v402 = vpack.c.bf16 %v356, %v355
      %v403 = vpack.c.bf16 %v357, %v357
      %v404 = vpack.c.bf16 %v359, %v358
      %v405 = vpack.c.bf16 %v360, %v360
      %v406 = vpack.c.bf16 %v362, %v361
      %v407 = vpack.c.bf16 %v363, %v363
      %v408 = vpack.c.bf16 %v365, %v364
      %v409 = vpack.c.bf16 %v366, %v366
      %v410 = vpack.c.bf16 %v368, %v367
      %v411 = vpack.c.bf16 %v369, %v369
      %v412 = vpack.c.bf16 %v371, %v370
      %v413 = vpack.c.bf16 %v372, %v372
      %v414 = vpack.c.bf16 %v374, %v373
      %v415 = vpack.c.bf16 %v375, %v375
      %v416 = vpack.c.bf16 %v377, %v376
      %v417 = vpack.c.bf16 %v378, %v378
      %v418 = vpack.c.bf16 %v380, %v379
      %v419 = vpack.c.bf16 %v381, %v381
      %v420 = vpack.c.bf16 %v383, %v382
      %v421 = vpack.c.bf16 %v384, %v384
      %v422 = vpack.c.bf16 %v386, %v385
      %v423 = vpack.c.bf16 %v387, %v387
      %v424 = vld [vmem:[%s1] sm:$0x3]
      %vm425 = vsmask.f32 7424
      %v427 = vshrl.u32 %v388, 16
      %v429 = vshll.u32 %v388, 16
      %v431 = vrot.slane %v429, 1
      %v432 = vor.u32 %v427, %v431
      %v434 = vshll.u32 %v389, 16
      %v436 = vrot.slane %v434, 1
      %v437 = vsel %vm425, %v432, %v436
      %v439 = vshrl.u32 %v390, 16
      %v441 = vshll.u32 %v390, 16
      %v443 = vrot.slane %v441, 1
      %v444 = vor.u32 %v439, %v443
      %v446 = vshll.u32 %v391, 16
      %v448 = vrot.slane %v446, 1
      %v449 = vsel %vm425, %v444, %v448
      %v451 = vshrl.u32 %v392, 16
      %v453 = vshll.u32 %v392, 16
      %v455 = vrot.slane %v453, 1
      %v456 = vor.u32 %v451, %v455
      %v458 = vshll.u32 %v393, 16
      %v460 = vrot.slane %v458, 1
      %v461 = vsel %vm425, %v456, %v460
      %v463 = vshrl.u32 %v394, 16
      %v465 = vshll.u32 %v394, 16
      %v467 = vrot.slane %v465, 1
      %v468 = vor.u32 %v463, %v467
      %v470 = vshll.u32 %v395, 16
      %v472 = vrot.slane %v470, 1
      %v473 = vsel %vm425, %v468, %v472
      %v475 = vshrl.u32 %v396, 16
      %v477 = vshll.u32 %v396, 16
      %v479 = vrot.slane %v477, 1
      %v480 = vor.u32 %v475, %v479
      %v482 = vshll.u32 %v397, 16
      %v484 = vrot.slane %v482, 1
      %v485 = vsel %vm425, %v480, %v484
      %v487 = vshrl.u32 %v398, 16
      %v489 = vshll.u32 %v398, 16
      %v491 = vrot.slane %v489, 1
      %v492 = vor.u32 %v487, %v491
      %v494 = vshll.u32 %v399, 16
      %v496 = vrot.slane %v494, 1
      %v497 = vsel %vm425, %v492, %v496
      %v499 = vshrl.u32 %v400, 16
      %v501 = vshll.u32 %v400, 16
      %v503 = vrot.slane %v501, 1
      %v504 = vor.u32 %v499, %v503
      %v506 = vshll.u32 %v401, 16
      %v508 = vrot.slane %v506, 1
      %v509 = vsel %vm425, %v504, %v508
      %v511 = vshrl.u32 %v402, 16
      %v513 = vshll.u32 %v402, 16
      %v515 = vrot.slane %v513, 1
      %v516 = vor.u32 %v511, %v515
      %v518 = vshll.u32 %v403, 16
      %v520 = vrot.slane %v518, 1
      %v521 = vsel %vm425, %v516, %v520
      %v523 = vshrl.u32 %v404, 16
      %v525 = vshll.u32 %v404, 16
      %v527 = vrot.slane %v525, 1
      %v528 = vor.u32 %v523, %v527
      %v530 = vshll.u32 %v405, 16
      %v532 = vrot.slane %v530, 1
      %v533 = vsel %vm425, %v528, %v532
      %v535 = vshrl.u32 %v406, 16
      %v537 = vshll.u32 %v406, 16
      %v539 = vrot.slane %v537, 1
      %v540 = vor.u32 %v535, %v539
      %v542 = vshll.u32 %v407, 16
      %v544 = vrot.slane %v542, 1
      %v545 = vsel %vm425, %v540, %v544
      %v547 = vshrl.u32 %v408, 16
      %v549 = vshll.u32 %v408, 16
      %v551 = vrot.slane %v549, 1
      %v552 = vor.u32 %v547, %v551
      %v554 = vshll.u32 %v409, 16
      %v556 = vrot.slane %v554, 1
      %v557 = vsel %vm425, %v552, %v556
      %v559 = vshrl.u32 %v410, 16
      %v561 = vshll.u32 %v410, 16
      %v563 = vrot.slane %v561, 1
      %v564 = vor.u32 %v559, %v563
      %v566 = vshll.u32 %v411, 16
      %v568 = vrot.slane %v566, 1
      %v569 = vsel %vm425, %v564, %v568
      %v571 = vshrl.u32 %v412, 16
      %v573 = vshll.u32 %v412, 16
      %v575 = vrot.slane %v573, 1
      %v576 = vor.u32 %v571, %v575
      %v578 = vshll.u32 %v413, 16
      %v580 = vrot.slane %v578, 1
      %v581 = vsel %vm425, %v576, %v580
      %v583 = vshrl.u32 %v414, 16
      %v585 = vshll.u32 %v414, 16
      %v587 = vrot.slane %v585, 1
      %v588 = vor.u32 %v583, %v587
      %v590 = vshll.u32 %v415, 16
      %v592 = vrot.slane %v590, 1
      %v593 = vsel %vm425, %v588, %v592
      %v595 = vshrl.u32 %v416, 16
      %v597 = vshll.u32 %v416, 16
      %v599 = vrot.slane %v597, 1
      %v600 = vor.u32 %v595, %v599
      %v602 = vshll.u32 %v417, 16
      %v604 = vrot.slane %v602, 1
      %v605 = vsel %vm425, %v600, %v604
      %v607 = vshrl.u32 %v418, 16
      %v609 = vshll.u32 %v418, 16
      %v611 = vrot.slane %v609, 1
      %v612 = vor.u32 %v607, %v611
      %v614 = vshll.u32 %v419, 16
      %v616 = vrot.slane %v614, 1
      %v617 = vsel %vm425, %v612, %v616
      %s618 = scalar_lea.vmem %s1, 2
      %v619 = vld [vmem:[%s618] sm:$0x3]
      %vm620 = vcmask 31744
      %v622 = vsel %vm620, %v437, 0
      %v625 = vsel %vm620, %v449, 0
      %v628 = vsel %vm620, %v461, 0
      %v631 = vsel %vm620, %v473, 0
      %v634 = vsel %vm620, %v485, 0
      %v637 = vsel %vm620, %v497, 0
      %v640 = vsel %vm620, %v509, 0
      %v643 = vsel %vm620, %v521, 0
      %v646 = vsel %vm620, %v533, 0
      %v649 = vsel %vm620, %v545, 0
      %v652 = vsel %vm620, %v557, 0
      %v655 = vsel %vm620, %v569, 0
      %v658 = vsel %vm620, %v581, 0
      %v661 = vsel %vm620, %v593, 0
      %v664 = vsel %vm620, %v605, 0
      %v667 = vsel %vm620, %v617, 0
      %vm669 = vcmask 1041408
      %v671 = vsel %vm669, %v619, 0
      %673 = vmatprep.subr.bf16.mxu0 0
      %674 = vmatpush1.bf16.msra.mxu0 0
      %675 = vmatprep.subr.bf16.mxu0 0
      %676 = vmatpush1.bf16.msra.mxu0 0
      %677 = vmatprep.subr.bf16.mxu0 0
      %678 = vmatpush1.bf16.msra.mxu0 0
      %679 = vmatprep.subr.bf16.mxu0 0
      %680 = vmatpush1.bf16.msra.mxu0 0
      %681 = vmatprep.subr.bf16.mxu0 0
      %682 = vmatpush1.bf16.msra.mxu0 0
      %683 = vmatprep.subr.bf16.mxu0 0
      %684 = vmatpush1.bf16.msra.mxu0 0
      %685 = vmatprep.subr.bf16.mxu0 0
      %686 = vmatpush1.bf16.msra.mxu0 0
      %687 = vmatprep.subr.bf16.mxu0 0
      %688 = vmatpush1.bf16.msra.mxu0 %v671
      %689 = vmatprep.subr.bf16.mxu0 0
      %690 = vmatpush2.bf16.msra.mxu0 0
      %691 = vmatprep.subr.bf16.mxu0 0
      %692 = vmatpush2.bf16.msra.mxu0 0
      %693 = vmatprep.subr.bf16.mxu0 0
      %694 = vmatpush2.bf16.msra.mxu0 0
      %695 = vmatprep.subr.bf16.mxu0 0
      %696 = vmatpush2.bf16.msra.mxu0 0
      %697 = vmatprep.subr.bf16.mxu0 0
      %698 = vmatpush2.bf16.msra.mxu0 0
      %699 = vmatprep.subr.bf16.mxu0 0
      %700 = vmatpush2.bf16.msra.mxu0 0
      %701 = vmatprep.subr.bf16.mxu0 0
      %702 = vmatpush2.bf16.msra.mxu0 0
      %703 = vmatprep.subr.bf16.mxu0 0
      %704 = vmatpush2.bf16.msra.mxu0 0
      %705 = vmatprep.mubr.bf16.mxu0 0
      %706 = vmatmul.mubr.bf16.gmra.mxu0 %v622
      %v707 = vpop.f32.mrf.mxu0
      %v708 = vadd.f32 0.0, %v707
      %v709 = vpop.f32.mrf.mxu0
      %v710 = vpop.f32.mrf.mxu0
      %v711 = vadd.f32 0.0, %v710
      %v712 = vpop.f32.mrf.mxu0
      %713 = vmatprep.mubr.bf16.mxu0 0
      %714 = vmatmul.mubr.bf16.gmra.mxu0 %v625
      %v715 = vpop.f32.mrf.mxu0
      %v716 = vadd.f32 0.0, %v715
      %v717 = vpop.f32.mrf.mxu0
      %v718 = vpop.f32.mrf.mxu0
      %v719 = vadd.f32 0.0, %v718
      %v720 = vpop.f32.mrf.mxu0
      %721 = vmatprep.mubr.bf16.mxu0 0
      %722 = vmatmul.mubr.bf16.gmra.mxu0 %v628
      %v723 = vpop.f32.mrf.mxu0
      %v724 = vadd.f32 0.0, %v723
      %v725 = vpop.f32.mrf.mxu0
      %v726 = vpop.f32.mrf.mxu0
      %v727 = vadd.f32 0.0, %v726
      %v728 = vpop.f32.mrf.mxu0
      %729 = vmatprep.mubr.bf16.mxu0 0
      %730 = vmatmul.mubr.bf16.gmra.mxu0 %v631
      %v731 = vpop.f32.mrf.mxu0
      %v732 = vadd.f32 0.0, %v731
      %v733 = vpop.f32.mrf.mxu0
      %v734 = vpop.f32.mrf.mxu0
      %v735 = vadd.f32 0.0, %v734
      %v736 = vpop.f32.mrf.mxu0
      %737 = vmatprep.mubr.bf16.mxu0 0
      %738 = vmatmul.mubr.bf16.gmra.mxu0 %v634
      %v739 = vpop.f32.mrf.mxu0
      %v740 = vadd.f32 0.0, %v739
      %v741 = vpop.f32.mrf.mxu0
      %v742 = vpop.f32.mrf.mxu0
      %v743 = vadd.f32 0.0, %v742
      %v744 = vpop.f32.mrf.mxu0
      %745 = vmatprep.mubr.bf16.mxu0 0
      %746 = vmatmul.mubr.bf16.gmra.mxu0 %v637
      %v747 = vpop.f32.mrf.mxu0
      %v748 = vadd.f32 0.0, %v747
      %v749 = vpop.f32.mrf.mxu0
      %v750 = vpop.f32.mrf.mxu0
      %v751 = vadd.f32 0.0, %v750
      %v752 = vpop.f32.mrf.mxu0
      %753 = vmatprep.mubr.bf16.mxu0 0
      %754 = vmatmul.mubr.bf16.gmra.mxu0 %v640
      %v755 = vpop.f32.mrf.mxu0
      %v756 = vadd.f32 0.0, %v755
      %v757 = vpop.f32.mrf.mxu0
      %v758 = vpop.f32.mrf.mxu0
      %v759 = vadd.f32 0.0, %v758
      %v760 = vpop.f32.mrf.mxu0
      %761 = vmatprep.mubr.bf16.mxu0 0
      %762 = vmatmul.mubr.bf16.gmra.mxu0 %v643
      %v763 = vpop.f32.mrf.mxu0
      %v764 = vadd.f32 0.0, %v763
      %v765 = vpop.f32.mrf.mxu0
      %v766 = vpop.f32.mrf.mxu0
      %v767 = vadd.f32 0.0, %v766
      %v768 = vpop.f32.mrf.mxu0
      %769 = vmatprep.mubr.bf16.mxu0 0
      %770 = vmatmul.mubr.bf16.gmra.mxu0 %v646
      %v771 = vpop.f32.mrf.mxu0
      %v772 = vadd.f32 0.0, %v771
      %v773 = vpop.f32.mrf.mxu0
      %v774 = vpop.f32.mrf.mxu0
      %v775 = vadd.f32 0.0, %v774
      %v776 = vpop.f32.mrf.mxu0
      %777 = vmatprep.mubr.bf16.mxu0 0
      %778 = vmatmul.mubr.bf16.gmra.mxu0 %v649
      %v779 = vpop.f32.mrf.mxu0
      %v780 = vadd.f32 0.0, %v779
      %v781 = vpop.f32.mrf.mxu0
      %v782 = vpop.f32.mrf.mxu0
      %v783 = vadd.f32 0.0, %v782
      %v784 = vpop.f32.mrf.mxu0
      %785 = vmatprep.mubr.bf16.mxu0 0
      %786 = vmatmul.mubr.bf16.gmra.mxu0 %v652
      %v787 = vpop.f32.mrf.mxu0
      %v788 = vadd.f32 0.0, %v787
      %v789 = vpop.f32.mrf.mxu0
      %v790 = vpop.f32.mrf.mxu0
      %v791 = vadd.f32 0.0, %v790
      %v792 = vpop.f32.mrf.mxu0
      %793 = vmatprep.mubr.bf16.mxu0 0
      %794 = vmatmul.mubr.bf16.gmra.mxu0 %v655
      %v795 = vpop.f32.mrf.mxu0
      %v796 = vadd.f32 0.0, %v795
      %v797 = vpop.f32.mrf.mxu0
      %v798 = vpop.f32.mrf.mxu0
      %v799 = vadd.f32 0.0, %v798
      %v800 = vpop.f32.mrf.mxu0
      %801 = vmatprep.mubr.bf16.mxu0 0
      %802 = vmatmul.mubr.bf16.gmra.mxu0 %v658
      %v803 = vpop.f32.mrf.mxu0
      %v804 = vadd.f32 0.0, %v803
      %v805 = vpop.f32.mrf.mxu0
      %v806 = vpop.f32.mrf.mxu0
      %v807 = vadd.f32 0.0, %v806
      %v808 = vpop.f32.mrf.mxu0
      %809 = vmatprep.mubr.bf16.mxu0 0
      %810 = vmatmul.mubr.bf16.gmra.mxu0 %v661
      %v811 = vpop.f32.mrf.mxu0
      %v812 = vadd.f32 0.0, %v811
      %v813 = vpop.f32.mrf.mxu0
      %v814 = vpop.f32.mrf.mxu0
      %v815 = vadd.f32 0.0, %v814
      %v816 = vpop.f32.mrf.mxu0
      %817 = vmatprep.mubr.bf16.mxu0 0
      %818 = vmatmul.mubr.bf16.gmra.mxu0 %v664
      %v819 = vpop.f32.mrf.mxu0
      %v820 = vadd.f32 0.0, %v819
      %v821 = vpop.f32.mrf.mxu0
      %v822 = vpop.f32.mrf.mxu0
      %v823 = vadd.f32 0.0, %v822
      %v824 = vpop.f32.mrf.mxu0
      %825 = vmatprep.mubr.bf16.mxu0 0
      %826 = vmatmul.mubr.bf16.gmra.mxu0 %v667
      %v827 = vpop.f32.mrf.mxu0
      %v828 = vadd.f32 0.0, %v827
      %v829 = vpop.f32.mrf.mxu0
      %v830 = vpop.f32.mrf.mxu0
      %v831 = vadd.f32 0.0, %v830
      %v832 = vpop.f32.mrf.mxu0
      %833 = vdwg.mxu0
      %v834 = vsel %vm620, %v388, 0
      %v836 = vsel %vm620, %v390, 0
      %v838 = vsel %vm620, %v392, 0
      %v840 = vsel %vm620, %v394, 0
      %v842 = vsel %vm620, %v396, 0
      %v844 = vsel %vm620, %v398, 0
      %v846 = vsel %vm620, %v400, 0
      %v848 = vsel %vm620, %v402, 0
      %v850 = vsel %vm620, %v404, 0
      %v852 = vsel %vm620, %v406, 0
      %v854 = vsel %vm620, %v408, 0
      %v856 = vsel %vm620, %v410, 0
      %v858 = vsel %vm620, %v412, 0
      %v860 = vsel %vm620, %v414, 0
      %v862 = vsel %vm620, %v416, 0
      %v864 = vsel %vm620, %v418, 0
      %v867 = vsel %vm669, %v424, 0
      %869 = vmatprep.subr.bf16.mxu0 0
      %870 = vmatpush1.bf16.msra.mxu0 0
      %871 = vmatprep.subr.bf16.mxu0 0
      %872 = vmatpush1.bf16.msra.mxu0 0
      %873 = vmatprep.subr.bf16.mxu0 0
      %874 = vmatpush1.bf16.msra.mxu0 0
      %875 = vmatprep.subr.bf16.mxu0 0
      %876 = vmatpush1.bf16.msra.mxu0 0
      %877 = vmatprep.subr.bf16.mxu0 0
      %878 = vmatpush1.bf16.msra.mxu0 0
      %879 = vmatprep.subr.bf16.mxu0 0
      %880 = vmatpush1.bf16.msra.mxu0 0
      %881 = vmatprep.subr.bf16.mxu0 0
      %882 = vmatpush1.bf16.msra.mxu0 0
      %883 = vmatprep.subr.bf16.mxu0 0
      %884 = vmatpush1.bf16.msra.mxu0 %v867
      %885 = vmatprep.subr.bf16.mxu0 0
      %886 = vmatpush2.bf16.msra.mxu0 0
      %887 = vmatprep.subr.bf16.mxu0 0
      %888 = vmatpush2.bf16.msra.mxu0 0
      %889 = vmatprep.subr.bf16.mxu0 0
      %890 = vmatpush2.bf16.msra.mxu0 0
      %891 = vmatprep.subr.bf16.mxu0 0
      %892 = vmatpush2.bf16.msra.mxu0 0
      %893 = vmatprep.subr.bf16.mxu0 0
      %894 = vmatpush2.bf16.msra.mxu0 0
      %895 = vmatprep.subr.bf16.mxu0 0
      %896 = vmatpush2.bf16.msra.mxu0 0
      %897 = vmatprep.subr.bf16.mxu0 0
      %898 = vmatpush2.bf16.msra.mxu0 0
      %899 = vmatprep.subr.bf16.mxu0 0
      %900 = vmatpush2.bf16.msra.mxu0 0
      %901 = vmatprep.mubr.bf16.mxu0 0
      %902 = vmatmul.mubr.bf16.gmra.mxu0 %v834
      %v903 = vpop.f32.mrf.mxu0
      %v904 = vadd.f32 %v708, %v903
      %v905 = vpop.f32.mrf.mxu0
      %v906 = vpop.f32.mrf.mxu0
      %v907 = vadd.f32 %v711, %v906
      %v908 = vpop.f32.mrf.mxu0
      %909 = vmatprep.mubr.bf16.mxu0 0
      %910 = vmatmul.mubr.bf16.gmra.mxu0 %v836
      %v911 = vpop.f32.mrf.mxu0
      %v912 = vadd.f32 %v716, %v911
      %v913 = vpop.f32.mrf.mxu0
      %v914 = vpop.f32.mrf.mxu0
      %v915 = vadd.f32 %v719, %v914
      %v916 = vpop.f32.mrf.mxu0
      %917 = vmatprep.mubr.bf16.mxu0 0
      %918 = vmatmul.mubr.bf16.gmra.mxu0 %v838
      %v919 = vpop.f32.mrf.mxu0
      %v920 = vadd.f32 %v724, %v919
      %v921 = vpop.f32.mrf.mxu0
      %v922 = vpop.f32.mrf.mxu0
      %v923 = vadd.f32 %v727, %v922
      %v924 = vpop.f32.mrf.mxu0
      %925 = vmatprep.mubr.bf16.mxu0 0
      %926 = vmatmul.mubr.bf16.gmra.mxu0 %v840
      %v927 = vpop.f32.mrf.mxu0
      %v928 = vadd.f32 %v732, %v927
      %v929 = vpop.f32.mrf.mxu0
      %v930 = vpop.f32.mrf.mxu0
      %v931 = vadd.f32 %v735, %v930
      %v932 = vpop.f32.mrf.mxu0
      %933 = vmatprep.mubr.bf16.mxu0 0
      %934 = vmatmul.mubr.bf16.gmra.mxu0 %v842
      %v935 = vpop.f32.mrf.mxu0
      %v936 = vadd.f32 %v740, %v935
      %v937 = vpop.f32.mrf.mxu0
      %v938 = vpop.f32.mrf.mxu0
      %v939 = vadd.f32 %v743, %v938
      %v940 = vpop.f32.mrf.mxu0
      %941 = vmatprep.mubr.bf16.mxu0 0
      %942 = vmatmul.mubr.bf16.gmra.mxu0 %v844
      %v943 = vpop.f32.mrf.mxu0
      %v944 = vadd.f32 %v748, %v943
      %v945 = vpop.f32.mrf.mxu0
      %v946 = vpop.f32.mrf.mxu0
      %v947 = vadd.f32 %v751, %v946
      %v948 = vpop.f32.mrf.mxu0
      %949 = vmatprep.mubr.bf16.mxu0 0
      %950 = vmatmul.mubr.bf16.gmra.mxu0 %v846
      %v951 = vpop.f32.mrf.mxu0
      %v952 = vadd.f32 %v756, %v951
      %v953 = vpop.f32.mrf.mxu0
      %v954 = vpop.f32.mrf.mxu0
      %v955 = vadd.f32 %v759, %v954
      %v956 = vpop.f32.mrf.mxu0
      %957 = vmatprep.mubr.bf16.mxu0 0
      %958 = vmatmul.mubr.bf16.gmra.mxu0 %v848
      %v959 = vpop.f32.mrf.mxu0
      %v960 = vadd.f32 %v764, %v959
      %v961 = vpop.f32.mrf.mxu0
      %v962 = vpop.f32.mrf.mxu0
      %v963 = vadd.f32 %v767, %v962
      %v964 = vpop.f32.mrf.mxu0
      %965 = vmatprep.mubr.bf16.mxu0 0
      %966 = vmatmul.mubr.bf16.gmra.mxu0 %v850
      %v967 = vpop.f32.mrf.mxu0
      %v968 = vadd.f32 %v772, %v967
      %v969 = vpop.f32.mrf.mxu0
      %v970 = vpop.f32.mrf.mxu0
      %v971 = vadd.f32 %v775, %v970
      %v972 = vpop.f32.mrf.mxu0
      %973 = vmatprep.mubr.bf16.mxu0 0
      %974 = vmatmul.mubr.bf16.gmra.mxu0 %v852
      %v975 = vpop.f32.mrf.mxu0
      %v976 = vadd.f32 %v780, %v975
      %v977 = vpop.f32.mrf.mxu0
      %v978 = vpop.f32.mrf.mxu0
      %v979 = vadd.f32 %v783, %v978
      %v980 = vpop.f32.mrf.mxu0
      %981 = vmatprep.mubr.bf16.mxu0 0
      %982 = vmatmul.mubr.bf16.gmra.mxu0 %v854
      %v983 = vpop.f32.mrf.mxu0
      %v984 = vadd.f32 %v788, %v983
      %v985 = vpop.f32.mrf.mxu0
      %v986 = vpop.f32.mrf.mxu0
      %v987 = vadd.f32 %v791, %v986
      %v988 = vpop.f32.mrf.mxu0
      %989 = vmatprep.mubr.bf16.mxu0 0
      %990 = vmatmul.mubr.bf16.gmra.mxu0 %v856
      %v991 = vpop.f32.mrf.mxu0
      %v992 = vadd.f32 %v796, %v991
      %v993 = vpop.f32.mrf.mxu0
      %v994 = vpop.f32.mrf.mxu0
      %v995 = vadd.f32 %v799, %v994
      %v996 = vpop.f32.mrf.mxu0
      %997 = vmatprep.mubr.bf16.mxu0 0
      %998 = vmatmul.mubr.bf16.gmra.mxu0 %v858
      %v999 = vpop.f32.mrf.mxu0
      %v1000 = vadd.f32 %v804, %v999
      %v1001 = vpop.f32.mrf.mxu0
      %v1002 = vpop.f32.mrf.mxu0
      %v1003 = vadd.f32 %v807, %v1002
      %v1004 = vpop.f32.mrf.mxu0
      %1005 = vmatprep.mubr.bf16.mxu0 0
      %1006 = vmatmul.mubr.bf16.gmra.mxu0 %v860
      %v1007 = vpop.f32.mrf.mxu0
      %v1008 = vadd.f32 %v812, %v1007
      %v1009 = vpop.f32.mrf.mxu0
      %v1010 = vpop.f32.mrf.mxu0
      %v1011 = vadd.f32 %v815, %v1010
      %v1012 = vpop.f32.mrf.mxu0
      %1013 = vmatprep.mubr.bf16.mxu0 0
      %1014 = vmatmul.mubr.bf16.gmra.mxu0 %v862
      %v1015 = vpop.f32.mrf.mxu0
      %v1016 = vadd.f32 %v820, %v1015
      %v1017 = vpop.f32.mrf.mxu0
      %v1018 = vpop.f32.mrf.mxu0
      %v1019 = vadd.f32 %v823, %v1018
      %v1020 = vpop.f32.mrf.mxu0
      %1021 = vmatprep.mubr.bf16.mxu0 0
      %1022 = vmatmul.mubr.bf16.gmra.mxu0 %v864
      %v1023 = vpop.f32.mrf.mxu0
      %v1024 = vadd.f32 %v828, %v1023
      %v1025 = vpop.f32.mrf.mxu0
      %v1026 = vpop.f32.mrf.mxu0
      %v1027 = vadd.f32 %v831, %v1026
      %v1028 = vpop.f32.mrf.mxu0
      %1029 = vdwg.mxu0
      %vm1062 = vcmask 1046528
      %v1063 = vrot.slane %v388, 1
      %v1064 = vrot.slane %v389, 1
      %v1065 = vsel %vm1062, %v1063, %v1064
      %v1066 = vrot.slane %v390, 1
      %v1067 = vrot.slane %v391, 1
      %v1068 = vsel %vm1062, %v1066, %v1067
      %v1069 = vrot.slane %v392, 1
      %v1070 = vrot.slane %v393, 1
      %v1071 = vsel %vm1062, %v1069, %v1070
      %v1072 = vrot.slane %v394, 1
      %v1073 = vrot.slane %v395, 1
      %v1074 = vsel %vm1062, %v1072, %v1073
      %v1075 = vrot.slane %v396, 1
      %v1076 = vrot.slane %v397, 1
      %v1077 = vsel %vm1062, %v1075, %v1076
      %v1078 = vrot.slane %v398, 1
      %v1079 = vrot.slane %v399, 1
      %v1080 = vsel %vm1062, %v1078, %v1079
      %v1081 = vrot.slane %v400, 1
      %v1082 = vrot.slane %v401, 1
      %v1083 = vsel %vm1062, %v1081, %v1082
      %v1084 = vrot.slane %v402, 1
      %v1085 = vrot.slane %v403, 1
      %v1086 = vsel %vm1062, %v1084, %v1085
      %v1087 = vrot.slane %v404, 1
      %v1088 = vrot.slane %v405, 1
      %v1089 = vsel %vm1062, %v1087, %v1088
      %v1090 = vrot.slane %v406, 1
      %v1091 = vrot.slane %v407, 1
      %v1092 = vsel %vm1062, %v1090, %v1091
      %v1093 = vrot.slane %v408, 1
      %v1094 = vrot.slane %v409, 1
      %v1095 = vsel %vm1062, %v1093, %v1094
      %v1096 = vrot.slane %v410, 1
      %v1097 = vrot.slane %v411, 1
      %v1098 = vsel %vm1062, %v1096, %v1097
      %v1099 = vrot.slane %v412, 1
      %v1100 = vrot.slane %v413, 1
      %v1101 = vsel %vm1062, %v1099, %v1100
      %v1102 = vrot.slane %v414, 1
      %v1103 = vrot.slane %v415, 1
      %v1104 = vsel %vm1062, %v1102, %v1103
      %v1105 = vrot.slane %v416, 1
      %v1106 = vrot.slane %v417, 1
      %v1107 = vsel %vm1062, %v1105, %v1106
      %v1108 = vrot.slane %v418, 1
      %v1109 = vrot.slane %v419, 1
      %v1110 = vsel %vm1062, %v1108, %v1109
      %s1111 = scalar_lea.vmem %s1, 4
      %v1112 = vld [vmem:[%s1111] sm:$0x3]
      %v1114 = vsel %vm620, %v1065, 0
      %v1117 = vsel %vm620, %v1068, 0
      %v1120 = vsel %vm620, %v1071, 0
      %v1123 = vsel %vm620, %v1074, 0
      %v1126 = vsel %vm620, %v1077, 0
      %v1129 = vsel %vm620, %v1080, 0
      %v1132 = vsel %vm620, %v1083, 0
      %v1135 = vsel %vm620, %v1086, 0
      %v1138 = vsel %vm620, %v1089, 0
      %v1141 = vsel %vm620, %v1092, 0
      %v1144 = vsel %vm620, %v1095, 0
      %v1147 = vsel %vm620, %v1098, 0
      %v1150 = vsel %vm620, %v1101, 0
      %v1153 = vsel %vm620, %v1104, 0
      %v1156 = vsel %vm620, %v1107, 0
      %v1159 = vsel %vm620, %v1110, 0
      %v1162 = vsel %vm669, %v1112, 0
      %1164 = vmatprep.subr.bf16.mxu0 0
      %1165 = vmatpush1.bf16.msra.mxu0 0
      %1166 = vmatprep.subr.bf16.mxu0 0
      %1167 = vmatpush1.bf16.msra.mxu0 0
      %1168 = vmatprep.subr.bf16.mxu0 0
      %1169 = vmatpush1.bf16.msra.mxu0 0
      %1170 = vmatprep.subr.bf16.mxu0 0
      %1171 = vmatpush1.bf16.msra.mxu0 0
      %1172 = vmatprep.subr.bf16.mxu0 0
      %1173 = vmatpush1.bf16.msra.mxu0 0
      %1174 = vmatprep.subr.bf16.mxu0 0
      %1175 = vmatpush1.bf16.msra.mxu0 0
      %1176 = vmatprep.subr.bf16.mxu0 0
      %1177 = vmatpush1.bf16.msra.mxu0 0
      %1178 = vmatprep.subr.bf16.mxu0 0
      %1179 = vmatpush1.bf16.msra.mxu0 %v1162
      %1180 = vmatprep.subr.bf16.mxu0 0
      %1181 = vmatpush2.bf16.msra.mxu0 0
      %1182 = vmatprep.subr.bf16.mxu0 0
      %1183 = vmatpush2.bf16.msra.mxu0 0
      %1184 = vmatprep.subr.bf16.mxu0 0
      %1185 = vmatpush2.bf16.msra.mxu0 0
      %1186 = vmatprep.subr.bf16.mxu0 0
      %1187 = vmatpush2.bf16.msra.mxu0 0
      %1188 = vmatprep.subr.bf16.mxu0 0
      %1189 = vmatpush2.bf16.msra.mxu0 0
      %1190 = vmatprep.subr.bf16.mxu0 0
      %1191 = vmatpush2.bf16.msra.mxu0 0
      %1192 = vmatprep.subr.bf16.mxu0 0
      %1193 = vmatpush2.bf16.msra.mxu0 0
      %1194 = vmatprep.subr.bf16.mxu0 0
      %1195 = vmatpush2.bf16.msra.mxu0 0
      %1196 = vmatprep.mubr.bf16.mxu0 0
      %1197 = vmatmul.mubr.bf16.gmra.mxu0 %v1114
      %v1198 = vpop.f32.mrf.mxu0
      %v1199 = vadd.f32 0.0, %v1198
      %v1200 = vpop.f32.mrf.mxu0
      %v1201 = vpop.f32.mrf.mxu0
      %v1202 = vadd.f32 0.0, %v1201
      %v1203 = vpop.f32.mrf.mxu0
      %1204 = vmatprep.mubr.bf16.mxu0 0
      %1205 = vmatmul.mubr.bf16.gmra.mxu0 %v1117
      %v1206 = vpop.f32.mrf.mxu0
      %v1207 = vadd.f32 0.0, %v1206
      %v1208 = vpop.f32.mrf.mxu0
      %v1209 = vpop.f32.mrf.mxu0
      %v1210 = vadd.f32 0.0, %v1209
      %v1211 = vpop.f32.mrf.mxu0
      %1212 = vmatprep.mubr.bf16.mxu0 0
      %1213 = vmatmul.mubr.bf16.gmra.mxu0 %v1120
      %v1214 = vpop.f32.mrf.mxu0
      %v1215 = vadd.f32 0.0, %v1214
      %v1216 = vpop.f32.mrf.mxu0
      %v1217 = vpop.f32.mrf.mxu0
      %v1218 = vadd.f32 0.0, %v1217
      %v1219 = vpop.f32.mrf.mxu0
      %1220 = vmatprep.mubr.bf16.mxu0 0
      %1221 = vmatmul.mubr.bf16.gmra.mxu0 %v1123
      %v1222 = vpop.f32.mrf.mxu0
      %v1223 = vadd.f32 0.0, %v1222
      %v1224 = vpop.f32.mrf.mxu0
      %v1225 = vpop.f32.mrf.mxu0
      %v1226 = vadd.f32 0.0, %v1225
      %v1227 = vpop.f32.mrf.mxu0
      %1228 = vmatprep.mubr.bf16.mxu0 0
      %1229 = vmatmul.mubr.bf16.gmra.mxu0 %v1126
      %v1230 = vpop.f32.mrf.mxu0
      %v1231 = vadd.f32 0.0, %v1230
      %v1232 = vpop.f32.mrf.mxu0
      %v1233 = vpop.f32.mrf.mxu0
      %v1234 = vadd.f32 0.0, %v1233
      %v1235 = vpop.f32.mrf.mxu0
      %1236 = vmatprep.mubr.bf16.mxu0 0
      %1237 = vmatmul.mubr.bf16.gmra.mxu0 %v1129
      %v1238 = vpop.f32.mrf.mxu0
      %v1239 = vadd.f32 0.0, %v1238
      %v1240 = vpop.f32.mrf.mxu0
      %v1241 = vpop.f32.mrf.mxu0
      %v1242 = vadd.f32 0.0, %v1241
      %v1243 = vpop.f32.mrf.mxu0
      %1244 = vmatprep.mubr.bf16.mxu0 0
      %1245 = vmatmul.mubr.bf16.gmra.mxu0 %v1132
      %v1246 = vpop.f32.mrf.mxu0
      %v1247 = vadd.f32 0.0, %v1246
      %v1248 = vpop.f32.mrf.mxu0
      %v1249 = vpop.f32.mrf.mxu0
      %v1250 = vadd.f32 0.0, %v1249
      %v1251 = vpop.f32.mrf.mxu0
      %1252 = vmatprep.mubr.bf16.mxu0 0
      %1253 = vmatmul.mubr.bf16.gmra.mxu0 %v1135
      %v1254 = vpop.f32.mrf.mxu0
      %v1255 = vadd.f32 0.0, %v1254
      %v1256 = vpop.f32.mrf.mxu0
      %v1257 = vpop.f32.mrf.mxu0
      %v1258 = vadd.f32 0.0, %v1257
      %v1259 = vpop.f32.mrf.mxu0
      %1260 = vmatprep.mubr.bf16.mxu0 0
      %1261 = vmatmul.mubr.bf16.gmra.mxu0 %v1138
      %v1262 = vpop.f32.mrf.mxu0
      %v1263 = vadd.f32 0.0, %v1262
      %v1264 = vpop.f32.mrf.mxu0
      %v1265 = vpop.f32.mrf.mxu0
      %v1266 = vadd.f32 0.0, %v1265
      %v1267 = vpop.f32.mrf.mxu0
      %1268 = vmatprep.mubr.bf16.mxu0 0
      %1269 = vmatmul.mubr.bf16.gmra.mxu0 %v1141
      %v1270 = vpop.f32.mrf.mxu0
      %v1271 = vadd.f32 0.0, %v1270
      %v1272 = vpop.f32.mrf.mxu0
      %v1273 = vpop.f32.mrf.mxu0
      %v1274 = vadd.f32 0.0, %v1273
      %v1275 = vpop.f32.mrf.mxu0
      %1276 = vmatprep.mubr.bf16.mxu0 0
      %1277 = vmatmul.mubr.bf16.gmra.mxu0 %v1144
      %v1278 = vpop.f32.mrf.mxu0
      %v1279 = vadd.f32 0.0, %v1278
      %v1280 = vpop.f32.mrf.mxu0
      %v1281 = vpop.f32.mrf.mxu0
      %v1282 = vadd.f32 0.0, %v1281
      %v1283 = vpop.f32.mrf.mxu0
      %1284 = vmatprep.mubr.bf16.mxu0 0
      %1285 = vmatmul.mubr.bf16.gmra.mxu0 %v1147
      %v1286 = vpop.f32.mrf.mxu0
      %v1287 = vadd.f32 0.0, %v1286
      %v1288 = vpop.f32.mrf.mxu0
      %v1289 = vpop.f32.mrf.mxu0
      %v1290 = vadd.f32 0.0, %v1289
      %v1291 = vpop.f32.mrf.mxu0
      %1292 = vmatprep.mubr.bf16.mxu0 0
      %1293 = vmatmul.mubr.bf16.gmra.mxu0 %v1150
      %v1294 = vpop.f32.mrf.mxu0
      %v1295 = vadd.f32 0.0, %v1294
      %v1296 = vpop.f32.mrf.mxu0
      %v1297 = vpop.f32.mrf.mxu0
      %v1298 = vadd.f32 0.0, %v1297
      %v1299 = vpop.f32.mrf.mxu0
      %1300 = vmatprep.mubr.bf16.mxu0 0
      %1301 = vmatmul.mubr.bf16.gmra.mxu0 %v1153
      %v1302 = vpop.f32.mrf.mxu0
      %v1303 = vadd.f32 0.0, %v1302
      %v1304 = vpop.f32.mrf.mxu0
      %v1305 = vpop.f32.mrf.mxu0
      %v1306 = vadd.f32 0.0, %v1305
      %v1307 = vpop.f32.mrf.mxu0
      %1308 = vmatprep.mubr.bf16.mxu0 0
      %1309 = vmatmul.mubr.bf16.gmra.mxu0 %v1156
      %v1310 = vpop.f32.mrf.mxu0
      %v1311 = vadd.f32 0.0, %v1310
      %v1312 = vpop.f32.mrf.mxu0
      %v1313 = vpop.f32.mrf.mxu0
      %v1314 = vadd.f32 0.0, %v1313
      %v1315 = vpop.f32.mrf.mxu0
      %1316 = vmatprep.mubr.bf16.mxu0 0
      %1317 = vmatmul.mubr.bf16.gmra.mxu0 %v1159
      %v1318 = vpop.f32.mrf.mxu0
      %v1319 = vadd.f32 0.0, %v1318
      %v1320 = vpop.f32.mrf.mxu0
      %v1321 = vpop.f32.mrf.mxu0
      %v1322 = vadd.f32 0.0, %v1321
      %v1323 = vpop.f32.mrf.mxu0
      %1324 = vdwg.mxu0
      %v1325 = vadd.f32 %v904, %v1199
      %v1326 = vadd.f32 %v907, %v1202
      %v1327 = vadd.f32 %v912, %v1207
      %v1328 = vadd.f32 %v915, %v1210
      %v1329 = vadd.f32 %v920, %v1215
      %v1330 = vadd.f32 %v923, %v1218
      %v1331 = vadd.f32 %v928, %v1223
      %v1332 = vadd.f32 %v931, %v1226
      %v1333 = vadd.f32 %v936, %v1231
      %v1334 = vadd.f32 %v939, %v1234
      %v1335 = vadd.f32 %v944, %v1239
      %v1336 = vadd.f32 %v947, %v1242
      %v1337 = vadd.f32 %v952, %v1247
      %v1338 = vadd.f32 %v955, %v1250
      %v1339 = vadd.f32 %v960, %v1255
      %v1340 = vadd.f32 %v963, %v1258
      %v1341 = vadd.f32 %v968, %v1263
      %v1342 = vadd.f32 %v971, %v1266
      %v1343 = vadd.f32 %v976, %v1271
      %v1344 = vadd.f32 %v979, %v1274
      %v1345 = vadd.f32 %v984, %v1279
      %v1346 = vadd.f32 %v987, %v1282
      %v1347 = vadd.f32 %v992, %v1287
      %v1348 = vadd.f32 %v995, %v1290
      %v1349 = vadd.f32 %v1000, %v1295
      %v1350 = vadd.f32 %v1003, %v1298
      %v1351 = vadd.f32 %v1008, %v1303
      %v1352 = vadd.f32 %v1011, %v1306
      %v1353 = vadd.f32 %v1016, %v1311
      %v1354 = vadd.f32 %v1019, %v1314
      %v1355 = vadd.f32 %v1024, %v1319
      %v1356 = vadd.f32 %v1027, %v1322
      %s1357 = scalar_lea.vmem %s1, 6
      %v1358 = vld [vmem:[%s1357] sm:$0x3]
      %v1360 = vsel %vm620, %v420, 0
      %v1363 = vsel %vm669, %v1358, 0
      %1365 = vmatprep.subr.bf16.mxu0 0
      %1366 = vmatpush1.bf16.msra.mxu0 0
      %1367 = vmatprep.subr.bf16.mxu0 0
      %1368 = vmatpush1.bf16.msra.mxu0 0
      %1369 = vmatprep.subr.bf16.mxu0 0
      %1370 = vmatpush1.bf16.msra.mxu0 0
      %1371 = vmatprep.subr.bf16.mxu0 0
      %1372 = vmatpush1.bf16.msra.mxu0 0
      %1373 = vmatprep.subr.bf16.mxu0 0
      %1374 = vmatpush1.bf16.msra.mxu0 0
      %1375 = vmatprep.subr.bf16.mxu0 0
      %1376 = vmatpush1.bf16.msra.mxu0 0
      %1377 = vmatprep.subr.bf16.mxu0 0
      %1378 = vmatpush1.bf16.msra.mxu0 0
      %1379 = vmatprep.subr.bf16.mxu0 0
      %1380 = vmatpush1.bf16.msra.mxu0 %v1363
      %1381 = vmatprep.subr.bf16.mxu0 0
      %1382 = vmatpush2.bf16.msra.mxu0 0
      %1383 = vmatprep.subr.bf16.mxu0 0
      %1384 = vmatpush2.bf16.msra.mxu0 0
      %1385 = vmatprep.subr.bf16.mxu0 0
      %1386 = vmatpush2.bf16.msra.mxu0 0
      %1387 = vmatprep.subr.bf16.mxu0 0
      %1388 = vmatpush2.bf16.msra.mxu0 0
      %1389 = vmatprep.subr.bf16.mxu0 0
      %1390 = vmatpush2.bf16.msra.mxu0 0
      %1391 = vmatprep.subr.bf16.mxu0 0
      %1392 = vmatpush2.bf16.msra.mxu0 0
      %1393 = vmatprep.subr.bf16.mxu0 0
      %1394 = vmatpush2.bf16.msra.mxu0 0
      %1395 = vmatprep.subr.bf16.mxu0 0
      %1396 = vmatpush2.bf16.msra.mxu0 0
      %1397 = vmatprep.mubr.bf16.mxu0 0
      %1398 = vmatmul.mubr.bf16.gmra.mxu0 %v836
      %v1399 = vpop.f32.mrf.mxu0
      %v1400 = vadd.f32 0.0, %v1399
      %v1401 = vpop.f32.mrf.mxu0
      %v1402 = vpop.f32.mrf.mxu0
      %v1403 = vadd.f32 0.0, %v1402
      %v1404 = vpop.f32.mrf.mxu0
      %1405 = vmatprep.mubr.bf16.mxu0 0
      %1406 = vmatmul.mubr.bf16.gmra.mxu0 %v838
      %v1407 = vpop.f32.mrf.mxu0
      %v1408 = vadd.f32 0.0, %v1407
      %v1409 = vpop.f32.mrf.mxu0
      %v1410 = vpop.f32.mrf.mxu0
      %v1411 = vadd.f32 0.0, %v1410
      %v1412 = vpop.f32.mrf.mxu0
      %1413 = vmatprep.mubr.bf16.mxu0 0
      %1414 = vmatmul.mubr.bf16.gmra.mxu0 %v840
      %v1415 = vpop.f32.mrf.mxu0
      %v1416 = vadd.f32 0.0, %v1415
      %v1417 = vpop.f32.mrf.mxu0
      %v1418 = vpop.f32.mrf.mxu0
      %v1419 = vadd.f32 0.0, %v1418
      %v1420 = vpop.f32.mrf.mxu0
      %1421 = vmatprep.mubr.bf16.mxu0 0
      %1422 = vmatmul.mubr.bf16.gmra.mxu0 %v842
      %v1423 = vpop.f32.mrf.mxu0
      %v1424 = vadd.f32 0.0, %v1423
      %v1425 = vpop.f32.mrf.mxu0
      %v1426 = vpop.f32.mrf.mxu0
      %v1427 = vadd.f32 0.0, %v1426
      %v1428 = vpop.f32.mrf.mxu0
      %1429 = vmatprep.mubr.bf16.mxu0 0
      %1430 = vmatmul.mubr.bf16.gmra.mxu0 %v844
      %v1431 = vpop.f32.mrf.mxu0
      %v1432 = vadd.f32 0.0, %v1431
      %v1433 = vpop.f32.mrf.mxu0
      %v1434 = vpop.f32.mrf.mxu0
      %v1435 = vadd.f32 0.0, %v1434
      %v1436 = vpop.f32.mrf.mxu0
      %1437 = vmatprep.mubr.bf16.mxu0 0
      %1438 = vmatmul.mubr.bf16.gmra.mxu0 %v846
      %v1439 = vpop.f32.mrf.mxu0
      %v1440 = vadd.f32 0.0, %v1439
      %v1441 = vpop.f32.mrf.mxu0
      %v1442 = vpop.f32.mrf.mxu0
      %v1443 = vadd.f32 0.0, %v1442
      %v1444 = vpop.f32.mrf.mxu0
      %1445 = vmatprep.mubr.bf16.mxu0 0
      %1446 = vmatmul.mubr.bf16.gmra.mxu0 %v848
      %v1447 = vpop.f32.mrf.mxu0
      %v1448 = vadd.f32 0.0, %v1447
      %v1449 = vpop.f32.mrf.mxu0
      %v1450 = vpop.f32.mrf.mxu0
      %v1451 = vadd.f32 0.0, %v1450
      %v1452 = vpop.f32.mrf.mxu0
      %1453 = vmatprep.mubr.bf16.mxu0 0
      %1454 = vmatmul.mubr.bf16.gmra.mxu0 %v850
      %v1455 = vpop.f32.mrf.mxu0
      %v1456 = vadd.f32 0.0, %v1455
      %v1457 = vpop.f32.mrf.mxu0
      %v1458 = vpop.f32.mrf.mxu0
      %v1459 = vadd.f32 0.0, %v1458
      %v1460 = vpop.f32.mrf.mxu0
      %1461 = vmatprep.mubr.bf16.mxu0 0
      %1462 = vmatmul.mubr.bf16.gmra.mxu0 %v852
      %v1463 = vpop.f32.mrf.mxu0
      %v1464 = vadd.f32 0.0, %v1463
      %v1465 = vpop.f32.mrf.mxu0
      %v1466 = vpop.f32.mrf.mxu0
      %v1467 = vadd.f32 0.0, %v1466
      %v1468 = vpop.f32.mrf.mxu0
      %1469 = vmatprep.mubr.bf16.mxu0 0
      %1470 = vmatmul.mubr.bf16.gmra.mxu0 %v854
      %v1471 = vpop.f32.mrf.mxu0
      %v1472 = vadd.f32 0.0, %v1471
      %v1473 = vpop.f32.mrf.mxu0
      %v1474 = vpop.f32.mrf.mxu0
      %v1475 = vadd.f32 0.0, %v1474
      %v1476 = vpop.f32.mrf.mxu0
      %1477 = vmatprep.mubr.bf16.mxu0 0
      %1478 = vmatmul.mubr.bf16.gmra.mxu0 %v856
      %v1479 = vpop.f32.mrf.mxu0
      %v1480 = vadd.f32 0.0, %v1479
      %v1481 = vpop.f32.mrf.mxu0
      %v1482 = vpop.f32.mrf.mxu0
      %v1483 = vadd.f32 0.0, %v1482
      %v1484 = vpop.f32.mrf.mxu0
      %1485 = vmatprep.mubr.bf16.mxu0 0
      %1486 = vmatmul.mubr.bf16.gmra.mxu0 %v858
      %v1487 = vpop.f32.mrf.mxu0
      %v1488 = vadd.f32 0.0, %v1487
      %v1489 = vpop.f32.mrf.mxu0
      %v1490 = vpop.f32.mrf.mxu0
      %v1491 = vadd.f32 0.0, %v1490
      %v1492 = vpop.f32.mrf.mxu0
      %1493 = vmatprep.mubr.bf16.mxu0 0
      %1494 = vmatmul.mubr.bf16.gmra.mxu0 %v860
      %v1495 = vpop.f32.mrf.mxu0
      %v1496 = vadd.f32 0.0, %v1495
      %v1497 = vpop.f32.mrf.mxu0
      %v1498 = vpop.f32.mrf.mxu0
      %v1499 = vadd.f32 0.0, %v1498
      %v1500 = vpop.f32.mrf.mxu0
      %1501 = vmatprep.mubr.bf16.mxu0 0
      %1502 = vmatmul.mubr.bf16.gmra.mxu0 %v862
      %v1503 = vpop.f32.mrf.mxu0
      %v1504 = vadd.f32 0.0, %v1503
      %v1505 = vpop.f32.mrf.mxu0
      %v1506 = vpop.f32.mrf.mxu0
      %v1507 = vadd.f32 0.0, %v1506
      %v1508 = vpop.f32.mrf.mxu0
      %1509 = vmatprep.mubr.bf16.mxu0 0
      %1510 = vmatmul.mubr.bf16.gmra.mxu0 %v864
      %v1511 = vpop.f32.mrf.mxu0
      %v1512 = vadd.f32 0.0, %v1511
      %v1513 = vpop.f32.mrf.mxu0
      %v1514 = vpop.f32.mrf.mxu0
      %v1515 = vadd.f32 0.0, %v1514
      %v1516 = vpop.f32.mrf.mxu0
      %1517 = vmatprep.mubr.bf16.mxu0 0
      %1518 = vmatmul.mubr.bf16.gmra.mxu0 %v1360
      %v1519 = vpop.f32.mrf.mxu0
      %v1520 = vadd.f32 0.0, %v1519
      %v1521 = vpop.f32.mrf.mxu0
      %v1522 = vpop.f32.mrf.mxu0
      %v1523 = vadd.f32 0.0, %v1522
      %v1524 = vpop.f32.mrf.mxu0
      %1525 = vdwg.mxu0
      %v1526 = vadd.f32 %v1325, %v1400
      %v1527 = vadd.f32 %v1326, %v1403
      %v1528 = vadd.f32 %v1327, %v1408
      %v1529 = vadd.f32 %v1328, %v1411
      %v1530 = vadd.f32 %v1329, %v1416
      %v1531 = vadd.f32 %v1330, %v1419
      %v1532 = vadd.f32 %v1331, %v1424
      %v1533 = vadd.f32 %v1332, %v1427
      %v1534 = vadd.f32 %v1333, %v1432
      %v1535 = vadd.f32 %v1334, %v1435
      %v1536 = vadd.f32 %v1335, %v1440
      %v1537 = vadd.f32 %v1336, %v1443
      %v1538 = vadd.f32 %v1337, %v1448
      %v1539 = vadd.f32 %v1338, %v1451
      %v1540 = vadd.f32 %v1339, %v1456
      %v1541 = vadd.f32 %v1340, %v1459
      %v1542 = vadd.f32 %v1341, %v1464
      %v1543 = vadd.f32 %v1342, %v1467
      %v1544 = vadd.f32 %v1343, %v1472
      %v1545 = vadd.f32 %v1344, %v1475
      %v1546 = vadd.f32 %v1345, %v1480
      %v1547 = vadd.f32 %v1346, %v1483
      %v1548 = vadd.f32 %v1347, %v1488
      %v1549 = vadd.f32 %v1348, %v1491
      %v1550 = vadd.f32 %v1349, %v1496
      %v1551 = vadd.f32 %v1350, %v1499
      %v1552 = vadd.f32 %v1351, %v1504
      %v1553 = vadd.f32 %v1352, %v1507
      %v1554 = vadd.f32 %v1353, %v1512
      %v1555 = vadd.f32 %v1354, %v1515
      %v1556 = vadd.f32 %v1355, %v1520
      %v1557 = vadd.f32 %v1356, %v1523
      %v1558 = vshrl.u32 %v420, 16
      %v1560 = vshll.u32 %v420, 16
      %v1562 = vrot.slane %v1560, 1
      %v1563 = vor.u32 %v1558, %v1562
      %v1565 = vshll.u32 %v421, 16
      %v1567 = vrot.slane %v1565, 1
      %v1568 = vsel %vm425, %v1563, %v1567
      %s1569 = scalar_lea.vmem %s1, 8
      %v1570 = vld [vmem:[%s1569] sm:$0x3]
      %v1572 = vsel %vm620, %v1568, 0
      %v1575 = vsel %vm669, %v1570, 0
      %1577 = vmatprep.subr.bf16.mxu0 0
      %1578 = vmatpush1.bf16.msra.mxu0 0
      %1579 = vmatprep.subr.bf16.mxu0 0
      %1580 = vmatpush1.bf16.msra.mxu0 0
      %1581 = vmatprep.subr.bf16.mxu0 0
      %1582 = vmatpush1.bf16.msra.mxu0 0
      %1583 = vmatprep.subr.bf16.mxu0 0
      %1584 = vmatpush1.bf16.msra.mxu0 0
      %1585 = vmatprep.subr.bf16.mxu0 0
      %1586 = vmatpush1.bf16.msra.mxu0 0
      %1587 = vmatprep.subr.bf16.mxu0 0
      %1588 = vmatpush1.bf16.msra.mxu0 0
      %1589 = vmatprep.subr.bf16.mxu0 0
      %1590 = vmatpush1.bf16.msra.mxu0 0
      %1591 = vmatprep.subr.bf16.mxu0 0
      %1592 = vmatpush1.bf16.msra.mxu0 %v1575
      %1593 = vmatprep.subr.bf16.mxu0 0
      %1594 = vmatpush2.bf16.msra.mxu0 0
      %1595 = vmatprep.subr.bf16.mxu0 0
      %1596 = vmatpush2.bf16.msra.mxu0 0
      %1597 = vmatprep.subr.bf16.mxu0 0
      %1598 = vmatpush2.bf16.msra.mxu0 0
      %1599 = vmatprep.subr.bf16.mxu0 0
      %1600 = vmatpush2.bf16.msra.mxu0 0
      %1601 = vmatprep.subr.bf16.mxu0 0
      %1602 = vmatpush2.bf16.msra.mxu0 0
      %1603 = vmatprep.subr.bf16.mxu0 0
      %1604 = vmatpush2.bf16.msra.mxu0 0
      %1605 = vmatprep.subr.bf16.mxu0 0
      %1606 = vmatpush2.bf16.msra.mxu0 0
      %1607 = vmatprep.subr.bf16.mxu0 0
      %1608 = vmatpush2.bf16.msra.mxu0 0
      %1609 = vmatprep.mubr.bf16.mxu0 0
      %1610 = vmatmul.mubr.bf16.gmra.mxu0 %v625
      %v1611 = vpop.f32.mrf.mxu0
      %v1612 = vadd.f32 0.0, %v1611
      %v1613 = vpop.f32.mrf.mxu0
      %v1614 = vpop.f32.mrf.mxu0
      %v1615 = vadd.f32 0.0, %v1614
      %v1616 = vpop.f32.mrf.mxu0
      %1617 = vmatprep.mubr.bf16.mxu0 0
      %1618 = vmatmul.mubr.bf16.gmra.mxu0 %v628
      %v1619 = vpop.f32.mrf.mxu0
      %v1620 = vadd.f32 0.0, %v1619
      %v1621 = vpop.f32.mrf.mxu0
      %v1622 = vpop.f32.mrf.mxu0
      %v1623 = vadd.f32 0.0, %v1622
      %v1624 = vpop.f32.mrf.mxu0
      %1625 = vmatprep.mubr.bf16.mxu0 0
      %1626 = vmatmul.mubr.bf16.gmra.mxu0 %v631
      %v1627 = vpop.f32.mrf.mxu0
      %v1628 = vadd.f32 0.0, %v1627
      %v1629 = vpop.f32.mrf.mxu0
      %v1630 = vpop.f32.mrf.mxu0
      %v1631 = vadd.f32 0.0, %v1630
      %v1632 = vpop.f32.mrf.mxu0
      %1633 = vmatprep.mubr.bf16.mxu0 0
      %1634 = vmatmul.mubr.bf16.gmra.mxu0 %v634
      %v1635 = vpop.f32.mrf.mxu0
      %v1636 = vadd.f32 0.0, %v1635
      %v1637 = vpop.f32.mrf.mxu0
      %v1638 = vpop.f32.mrf.mxu0
      %v1639 = vadd.f32 0.0, %v1638
      %v1640 = vpop.f32.mrf.mxu0
      %1641 = vmatprep.mubr.bf16.mxu0 0
      %1642 = vmatmul.mubr.bf16.gmra.mxu0 %v637
      %v1643 = vpop.f32.mrf.mxu0
      %v1644 = vadd.f32 0.0, %v1643
      %v1645 = vpop.f32.mrf.mxu0
      %v1646 = vpop.f32.mrf.mxu0
      %v1647 = vadd.f32 0.0, %v1646
      %v1648 = vpop.f32.mrf.mxu0
      %1649 = vmatprep.mubr.bf16.mxu0 0
      %1650 = vmatmul.mubr.bf16.gmra.mxu0 %v640
      %v1651 = vpop.f32.mrf.mxu0
      %v1652 = vadd.f32 0.0, %v1651
      %v1653 = vpop.f32.mrf.mxu0
      %v1654 = vpop.f32.mrf.mxu0
      %v1655 = vadd.f32 0.0, %v1654
      %v1656 = vpop.f32.mrf.mxu0
      %1657 = vmatprep.mubr.bf16.mxu0 0
      %1658 = vmatmul.mubr.bf16.gmra.mxu0 %v643
      %v1659 = vpop.f32.mrf.mxu0
      %v1660 = vadd.f32 0.0, %v1659
      %v1661 = vpop.f32.mrf.mxu0
      %v1662 = vpop.f32.mrf.mxu0
      %v1663 = vadd.f32 0.0, %v1662
      %v1664 = vpop.f32.mrf.mxu0
      %1665 = vmatprep.mubr.bf16.mxu0 0
      %1666 = vmatmul.mubr.bf16.gmra.mxu0 %v646
      %v1667 = vpop.f32.mrf.mxu0
      %v1668 = vadd.f32 0.0, %v1667
      %v1669 = vpop.f32.mrf.mxu0
      %v1670 = vpop.f32.mrf.mxu0
      %v1671 = vadd.f32 0.0, %v1670
      %v1672 = vpop.f32.mrf.mxu0
      %1673 = vmatprep.mubr.bf16.mxu0 0
      %1674 = vmatmul.mubr.bf16.gmra.mxu0 %v649
      %v1675 = vpop.f32.mrf.mxu0
      %v1676 = vadd.f32 0.0, %v1675
      %v1677 = vpop.f32.mrf.mxu0
      %v1678 = vpop.f32.mrf.mxu0
      %v1679 = vadd.f32 0.0, %v1678
      %v1680 = vpop.f32.mrf.mxu0
      %1681 = vmatprep.mubr.bf16.mxu0 0
      %1682 = vmatmul.mubr.bf16.gmra.mxu0 %v652
      %v1683 = vpop.f32.mrf.mxu0
      %v1684 = vadd.f32 0.0, %v1683
      %v1685 = vpop.f32.mrf.mxu0
      %v1686 = vpop.f32.mrf.mxu0
      %v1687 = vadd.f32 0.0, %v1686
      %v1688 = vpop.f32.mrf.mxu0
      %1689 = vmatprep.mubr.bf16.mxu0 0
      %1690 = vmatmul.mubr.bf16.gmra.mxu0 %v655
      %v1691 = vpop.f32.mrf.mxu0
      %v1692 = vadd.f32 0.0, %v1691
      %v1693 = vpop.f32.mrf.mxu0
      %v1694 = vpop.f32.mrf.mxu0
      %v1695 = vadd.f32 0.0, %v1694
      %v1696 = vpop.f32.mrf.mxu0
      %1697 = vmatprep.mubr.bf16.mxu0 0
      %1698 = vmatmul.mubr.bf16.gmra.mxu0 %v658
      %v1699 = vpop.f32.mrf.mxu0
      %v1700 = vadd.f32 0.0, %v1699
      %v1701 = vpop.f32.mrf.mxu0
      %v1702 = vpop.f32.mrf.mxu0
      %v1703 = vadd.f32 0.0, %v1702
      %v1704 = vpop.f32.mrf.mxu0
      %1705 = vmatprep.mubr.bf16.mxu0 0
      %1706 = vmatmul.mubr.bf16.gmra.mxu0 %v661
      %v1707 = vpop.f32.mrf.mxu0
      %v1708 = vadd.f32 0.0, %v1707
      %v1709 = vpop.f32.mrf.mxu0
      %v1710 = vpop.f32.mrf.mxu0
      %v1711 = vadd.f32 0.0, %v1710
      %v1712 = vpop.f32.mrf.mxu0
      %1713 = vmatprep.mubr.bf16.mxu0 0
      %1714 = vmatmul.mubr.bf16.gmra.mxu0 %v664
      %v1715 = vpop.f32.mrf.mxu0
      %v1716 = vadd.f32 0.0, %v1715
      %v1717 = vpop.f32.mrf.mxu0
      %v1718 = vpop.f32.mrf.mxu0
      %v1719 = vadd.f32 0.0, %v1718
      %v1720 = vpop.f32.mrf.mxu0
      %1721 = vmatprep.mubr.bf16.mxu0 0
      %1722 = vmatmul.mubr.bf16.gmra.mxu0 %v667
      %v1723 = vpop.f32.mrf.mxu0
      %v1724 = vadd.f32 0.0, %v1723
      %v1725 = vpop.f32.mrf.mxu0
      %v1726 = vpop.f32.mrf.mxu0
      %v1727 = vadd.f32 0.0, %v1726
      %v1728 = vpop.f32.mrf.mxu0
      %1729 = vmatprep.mubr.bf16.mxu0 0
      %1730 = vmatmul.mubr.bf16.gmra.mxu0 %v1572
      %v1731 = vpop.f32.mrf.mxu0
      %v1732 = vadd.f32 0.0, %v1731
      %v1733 = vpop.f32.mrf.mxu0
      %v1734 = vpop.f32.mrf.mxu0
      %v1735 = vadd.f32 0.0, %v1734
      %v1736 = vpop.f32.mrf.mxu0
      %1737 = vdwg.mxu0
      %v1738 = vadd.f32 %v1526, %v1612
      %v1739 = vadd.f32 %v1527, %v1615
      %v1740 = vadd.f32 %v1528, %v1620
      %v1741 = vadd.f32 %v1529, %v1623
      %v1742 = vadd.f32 %v1530, %v1628
      %v1743 = vadd.f32 %v1531, %v1631
      %v1744 = vadd.f32 %v1532, %v1636
      %v1745 = vadd.f32 %v1533, %v1639
      %v1746 = vadd.f32 %v1534, %v1644
      %v1747 = vadd.f32 %v1535, %v1647
      %v1748 = vadd.f32 %v1536, %v1652
      %v1749 = vadd.f32 %v1537, %v1655
      %v1750 = vadd.f32 %v1538, %v1660
      %v1751 = vadd.f32 %v1539, %v1663
      %v1752 = vadd.f32 %v1540, %v1668
      %v1753 = vadd.f32 %v1541, %v1671
      %v1754 = vadd.f32 %v1542, %v1676
      %v1755 = vadd.f32 %v1543, %v1679
      %v1756 = vadd.f32 %v1544, %v1684
      %v1757 = vadd.f32 %v1545, %v1687
      %v1758 = vadd.f32 %v1546, %v1692
      %v1759 = vadd.f32 %v1547, %v1695
      %v1760 = vadd.f32 %v1548, %v1700
      %v1761 = vadd.f32 %v1549, %v1703
      %v1762 = vadd.f32 %v1550, %v1708
      %v1763 = vadd.f32 %v1551, %v1711
      %v1764 = vadd.f32 %v1552, %v1716
      %v1765 = vadd.f32 %v1553, %v1719
      %v1766 = vadd.f32 %v1554, %v1724
      %v1767 = vadd.f32 %v1555, %v1727
      %v1768 = vadd.f32 %v1556, %v1732
      %v1769 = vadd.f32 %v1557, %v1735
      %v1772 = vrot.slane %v420, 1
      %v1773 = vrot.slane %v421, 1
      %v1774 = vsel %vm1062, %v1772, %v1773
      %s1775 = scalar_lea.vmem %s1, 10
      %v1776 = vld [vmem:[%s1775] sm:$0x3]
      %v1778 = vsel %vm620, %v1774, 0
      %v1781 = vsel %vm669, %v1776, 0
      %1783 = vmatprep.subr.bf16.mxu0 0
      %1784 = vmatpush1.bf16.msra.mxu0 0
      %1785 = vmatprep.subr.bf16.mxu0 0
      %1786 = vmatpush1.bf16.msra.mxu0 0
      %1787 = vmatprep.subr.bf16.mxu0 0
      %1788 = vmatpush1.bf16.msra.mxu0 0
      %1789 = vmatprep.subr.bf16.mxu0 0
      %1790 = vmatpush1.bf16.msra.mxu0 0
      %1791 = vmatprep.subr.bf16.mxu0 0
      %1792 = vmatpush1.bf16.msra.mxu0 0
      %1793 = vmatprep.subr.bf16.mxu0 0
      %1794 = vmatpush1.bf16.msra.mxu0 0
      %1795 = vmatprep.subr.bf16.mxu0 0
      %1796 = vmatpush1.bf16.msra.mxu0 0
      %1797 = vmatprep.subr.bf16.mxu0 0
      %1798 = vmatpush1.bf16.msra.mxu0 %v1781
      %1799 = vmatprep.subr.bf16.mxu0 0
      %1800 = vmatpush2.bf16.msra.mxu0 0
      %1801 = vmatprep.subr.bf16.mxu0 0
      %1802 = vmatpush2.bf16.msra.mxu0 0
      %1803 = vmatprep.subr.bf16.mxu0 0
      %1804 = vmatpush2.bf16.msra.mxu0 0
      %1805 = vmatprep.subr.bf16.mxu0 0
      %1806 = vmatpush2.bf16.msra.mxu0 0
      %1807 = vmatprep.subr.bf16.mxu0 0
      %1808 = vmatpush2.bf16.msra.mxu0 0
      %1809 = vmatprep.subr.bf16.mxu0 0
      %1810 = vmatpush2.bf16.msra.mxu0 0
      %1811 = vmatprep.subr.bf16.mxu0 0
      %1812 = vmatpush2.bf16.msra.mxu0 0
      %1813 = vmatprep.subr.bf16.mxu0 0
      %1814 = vmatpush2.bf16.msra.mxu0 0
      %1815 = vmatprep.mubr.bf16.mxu0 0
      %1816 = vmatmul.mubr.bf16.gmra.mxu0 %v1117
      %v1817 = vpop.f32.mrf.mxu0
      %v1818 = vadd.f32 0.0, %v1817
      %v1819 = vpop.f32.mrf.mxu0
      %v1820 = vpop.f32.mrf.mxu0
      %v1821 = vadd.f32 0.0, %v1820
      %v1822 = vpop.f32.mrf.mxu0
      %1823 = vmatprep.mubr.bf16.mxu0 0
      %1824 = vmatmul.mubr.bf16.gmra.mxu0 %v1120
      %v1825 = vpop.f32.mrf.mxu0
      %v1826 = vadd.f32 0.0, %v1825
      %v1827 = vpop.f32.mrf.mxu0
      %v1828 = vpop.f32.mrf.mxu0
      %v1829 = vadd.f32 0.0, %v1828
      %v1830 = vpop.f32.mrf.mxu0
      %1831 = vmatprep.mubr.bf16.mxu0 0
      %1832 = vmatmul.mubr.bf16.gmra.mxu0 %v1123
      %v1833 = vpop.f32.mrf.mxu0
      %v1834 = vadd.f32 0.0, %v1833
      %v1835 = vpop.f32.mrf.mxu0
      %v1836 = vpop.f32.mrf.mxu0
      %v1837 = vadd.f32 0.0, %v1836
      %v1838 = vpop.f32.mrf.mxu0
      %1839 = vmatprep.mubr.bf16.mxu0 0
      %1840 = vmatmul.mubr.bf16.gmra.mxu0 %v1126
      %v1841 = vpop.f32.mrf.mxu0
      %v1842 = vadd.f32 0.0, %v1841
      %v1843 = vpop.f32.mrf.mxu0
      %v1844 = vpop.f32.mrf.mxu0
      %v1845 = vadd.f32 0.0, %v1844
      %v1846 = vpop.f32.mrf.mxu0
      %1847 = vmatprep.mubr.bf16.mxu0 0
      %1848 = vmatmul.mubr.bf16.gmra.mxu0 %v1129
      %v1849 = vpop.f32.mrf.mxu0
      %v1850 = vadd.f32 0.0, %v1849
      %v1851 = vpop.f32.mrf.mxu0
      %v1852 = vpop.f32.mrf.mxu0
      %v1853 = vadd.f32 0.0, %v1852
      %v1854 = vpop.f32.mrf.mxu0
      %1855 = vmatprep.mubr.bf16.mxu0 0
      %1856 = vmatmul.mubr.bf16.gmra.mxu0 %v1132
      %v1857 = vpop.f32.mrf.mxu0
      %v1858 = vadd.f32 0.0, %v1857
      %v1859 = vpop.f32.mrf.mxu0
      %v1860 = vpop.f32.mrf.mxu0
      %v1861 = vadd.f32 0.0, %v1860
      %v1862 = vpop.f32.mrf.mxu0
      %1863 = vmatprep.mubr.bf16.mxu0 0
      %1864 = vmatmul.mubr.bf16.gmra.mxu0 %v1135
      %v1865 = vpop.f32.mrf.mxu0
      %v1866 = vadd.f32 0.0, %v1865
      %v1867 = vpop.f32.mrf.mxu0
      %v1868 = vpop.f32.mrf.mxu0
      %v1869 = vadd.f32 0.0, %v1868
      %v1870 = vpop.f32.mrf.mxu0
      %1871 = vmatprep.mubr.bf16.mxu0 0
      %1872 = vmatmul.mubr.bf16.gmra.mxu0 %v1138
      %v1873 = vpop.f32.mrf.mxu0
      %v1874 = vadd.f32 0.0, %v1873
      %v1875 = vpop.f32.mrf.mxu0
      %v1876 = vpop.f32.mrf.mxu0
      %v1877 = vadd.f32 0.0, %v1876
      %v1878 = vpop.f32.mrf.mxu0
      %1879 = vmatprep.mubr.bf16.mxu0 0
      %1880 = vmatmul.mubr.bf16.gmra.mxu0 %v1141
      %v1881 = vpop.f32.mrf.mxu0
      %v1882 = vadd.f32 0.0, %v1881
      %v1883 = vpop.f32.mrf.mxu0
      %v1884 = vpop.f32.mrf.mxu0
      %v1885 = vadd.f32 0.0, %v1884
      %v1886 = vpop.f32.mrf.mxu0
      %1887 = vmatprep.mubr.bf16.mxu0 0
      %1888 = vmatmul.mubr.bf16.gmra.mxu0 %v1144
      %v1889 = vpop.f32.mrf.mxu0
      %v1890 = vadd.f32 0.0, %v1889
      %v1891 = vpop.f32.mrf.mxu0
      %v1892 = vpop.f32.mrf.mxu0
      %v1893 = vadd.f32 0.0, %v1892
      %v1894 = vpop.f32.mrf.mxu0
      %1895 = vmatprep.mubr.bf16.mxu0 0
      %1896 = vmatmul.mubr.bf16.gmra.mxu0 %v1147
      %v1897 = vpop.f32.mrf.mxu0
      %v1898 = vadd.f32 0.0, %v1897
      %v1899 = vpop.f32.mrf.mxu0
      %v1900 = vpop.f32.mrf.mxu0
      %v1901 = vadd.f32 0.0, %v1900
      %v1902 = vpop.f32.mrf.mxu0
      %1903 = vmatprep.mubr.bf16.mxu0 0
      %1904 = vmatmul.mubr.bf16.gmra.mxu0 %v1150
      %v1905 = vpop.f32.mrf.mxu0
      %v1906 = vadd.f32 0.0, %v1905
      %v1907 = vpop.f32.mrf.mxu0
      %v1908 = vpop.f32.mrf.mxu0
      %v1909 = vadd.f32 0.0, %v1908
      %v1910 = vpop.f32.mrf.mxu0
      %1911 = vmatprep.mubr.bf16.mxu0 0
      %1912 = vmatmul.mubr.bf16.gmra.mxu0 %v1153
      %v1913 = vpop.f32.mrf.mxu0
      %v1914 = vadd.f32 0.0, %v1913
      %v1915 = vpop.f32.mrf.mxu0
      %v1916 = vpop.f32.mrf.mxu0
      %v1917 = vadd.f32 0.0, %v1916
      %v1918 = vpop.f32.mrf.mxu0
      %1919 = vmatprep.mubr.bf16.mxu0 0
      %1920 = vmatmul.mubr.bf16.gmra.mxu0 %v1156
      %v1921 = vpop.f32.mrf.mxu0
      %v1922 = vadd.f32 0.0, %v1921
      %v1923 = vpop.f32.mrf.mxu0
      %v1924 = vpop.f32.mrf.mxu0
      %v1925 = vadd.f32 0.0, %v1924
      %v1926 = vpop.f32.mrf.mxu0
      %1927 = vmatprep.mubr.bf16.mxu0 0
      %1928 = vmatmul.mubr.bf16.gmra.mxu0 %v1159
      %v1929 = vpop.f32.mrf.mxu0
      %v1930 = vadd.f32 0.0, %v1929
      %v1931 = vpop.f32.mrf.mxu0
      %v1932 = vpop.f32.mrf.mxu0
      %v1933 = vadd.f32 0.0, %v1932
      %v1934 = vpop.f32.mrf.mxu0
      %1935 = vmatprep.mubr.bf16.mxu0 0
      %1936 = vmatmul.mubr.bf16.gmra.mxu0 %v1778
      %v1937 = vpop.f32.mrf.mxu0
      %v1938 = vadd.f32 0.0, %v1937
      %v1939 = vpop.f32.mrf.mxu0
      %v1940 = vpop.f32.mrf.mxu0
      %v1941 = vadd.f32 0.0, %v1940
      %v1942 = vpop.f32.mrf.mxu0
      %1943 = vdwg.mxu0
      %v1944 = vadd.f32 %v1738, %v1818
      %v1945 = vadd.f32 %v1739, %v1821
      %v1946 = vadd.f32 %v1740, %v1826
      %v1947 = vadd.f32 %v1741, %v1829
      %v1948 = vadd.f32 %v1742, %v1834
      %v1949 = vadd.f32 %v1743, %v1837
      %v1950 = vadd.f32 %v1744, %v1842
      %v1951 = vadd.f32 %v1745, %v1845
      %v1952 = vadd.f32 %v1746, %v1850
      %v1953 = vadd.f32 %v1747, %v1853
      %v1954 = vadd.f32 %v1748, %v1858
      %v1955 = vadd.f32 %v1749, %v1861
      %v1956 = vadd.f32 %v1750, %v1866
      %v1957 = vadd.f32 %v1751, %v1869
      %v1958 = vadd.f32 %v1752, %v1874
      %v1959 = vadd.f32 %v1753, %v1877
      %v1960 = vadd.f32 %v1754, %v1882
      %v1961 = vadd.f32 %v1755, %v1885
      %v1962 = vadd.f32 %v1756, %v1890
      %v1963 = vadd.f32 %v1757, %v1893
      %v1964 = vadd.f32 %v1758, %v1898
      %v1965 = vadd.f32 %v1759, %v1901
      %v1966 = vadd.f32 %v1760, %v1906
      %v1967 = vadd.f32 %v1761, %v1909
      %v1968 = vadd.f32 %v1762, %v1914
      %v1969 = vadd.f32 %v1763, %v1917
      %v1970 = vadd.f32 %v1764, %v1922
      %v1971 = vadd.f32 %v1765, %v1925
      %v1972 = vadd.f32 %v1766, %v1930
      %v1973 = vadd.f32 %v1767, %v1933
      %v1974 = vadd.f32 %v1768, %v1938
      %v1975 = vadd.f32 %v1769, %v1941
      %s1976 = scalar_lea.vmem %s1, 12
      %v1977 = vld [vmem:[%s1976] sm:$0x3]
      %v1979 = vsel %vm620, %v422, 0
      %v1982 = vsel %vm669, %v1977, 0
      %1984 = vmatprep.subr.bf16.mxu0 0
      %1985 = vmatpush1.bf16.msra.mxu0 0
      %1986 = vmatprep.subr.bf16.mxu0 0
      %1987 = vmatpush1.bf16.msra.mxu0 0
      %1988 = vmatprep.subr.bf16.mxu0 0
      %1989 = vmatpush1.bf16.msra.mxu0 0
      %1990 = vmatprep.subr.bf16.mxu0 0
      %1991 = vmatpush1.bf16.msra.mxu0 0
      %1992 = vmatprep.subr.bf16.mxu0 0
      %1993 = vmatpush1.bf16.msra.mxu0 0
      %1994 = vmatprep.subr.bf16.mxu0 0
      %1995 = vmatpush1.bf16.msra.mxu0 0
      %1996 = vmatprep.subr.bf16.mxu0 0
      %1997 = vmatpush1.bf16.msra.mxu0 0
      %1998 = vmatprep.subr.bf16.mxu0 0
      %1999 = vmatpush1.bf16.msra.mxu0 %v1982
      %2000 = vmatprep.subr.bf16.mxu0 0
      %2001 = vmatpush2.bf16.msra.mxu0 0
      %2002 = vmatprep.subr.bf16.mxu0 0
      %2003 = vmatpush2.bf16.msra.mxu0 0
      %2004 = vmatprep.subr.bf16.mxu0 0
      %2005 = vmatpush2.bf16.msra.mxu0 0
      %2006 = vmatprep.subr.bf16.mxu0 0
      %2007 = vmatpush2.bf16.msra.mxu0 0
      %2008 = vmatprep.subr.bf16.mxu0 0
      %2009 = vmatpush2.bf16.msra.mxu0 0
      %2010 = vmatprep.subr.bf16.mxu0 0
      %2011 = vmatpush2.bf16.msra.mxu0 0
      %2012 = vmatprep.subr.bf16.mxu0 0
      %2013 = vmatpush2.bf16.msra.mxu0 0
      %2014 = vmatprep.subr.bf16.mxu0 0
      %2015 = vmatpush2.bf16.msra.mxu0 0
      %2016 = vmatprep.mubr.bf16.mxu0 0
      %2017 = vmatmul.mubr.bf16.gmra.mxu0 %v838
      %v2018 = vpop.f32.mrf.mxu0
      %v2019 = vadd.f32 0.0, %v2018
      %v2020 = vpop.f32.mrf.mxu0
      %v2021 = vpop.f32.mrf.mxu0
      %v2022 = vadd.f32 0.0, %v2021
      %v2023 = vpop.f32.mrf.mxu0
      %2024 = vmatprep.mubr.bf16.mxu0 0
      %2025 = vmatmul.mubr.bf16.gmra.mxu0 %v840
      %v2026 = vpop.f32.mrf.mxu0
      %v2027 = vadd.f32 0.0, %v2026
      %v2028 = vpop.f32.mrf.mxu0
      %v2029 = vpop.f32.mrf.mxu0
      %v2030 = vadd.f32 0.0, %v2029
      %v2031 = vpop.f32.mrf.mxu0
      %2032 = vmatprep.mubr.bf16.mxu0 0
      %2033 = vmatmul.mubr.bf16.gmra.mxu0 %v842
      %v2034 = vpop.f32.mrf.mxu0
      %v2035 = vadd.f32 0.0, %v2034
      %v2036 = vpop.f32.mrf.mxu0
      %v2037 = vpop.f32.mrf.mxu0
      %v2038 = vadd.f32 0.0, %v2037
      %v2039 = vpop.f32.mrf.mxu0
      %2040 = vmatprep.mubr.bf16.mxu0 0
      %2041 = vmatmul.mubr.bf16.gmra.mxu0 %v844
      %v2042 = vpop.f32.mrf.mxu0
      %v2043 = vadd.f32 0.0, %v2042
      %v2044 = vpop.f32.mrf.mxu0
      %v2045 = vpop.f32.mrf.mxu0
      %v2046 = vadd.f32 0.0, %v2045
      %v2047 = vpop.f32.mrf.mxu0
      %2048 = vmatprep.mubr.bf16.mxu0 0
      %2049 = vmatmul.mubr.bf16.gmra.mxu0 %v846
      %v2050 = vpop.f32.mrf.mxu0
      %v2051 = vadd.f32 0.0, %v2050
      %v2052 = vpop.f32.mrf.mxu0
      %v2053 = vpop.f32.mrf.mxu0
      %v2054 = vadd.f32 0.0, %v2053
      %v2055 = vpop.f32.mrf.mxu0
      %2056 = vmatprep.mubr.bf16.mxu0 0
      %2057 = vmatmul.mubr.bf16.gmra.mxu0 %v848
      %v2058 = vpop.f32.mrf.mxu0
      %v2059 = vadd.f32 0.0, %v2058
      %v2060 = vpop.f32.mrf.mxu0
      %v2061 = vpop.f32.mrf.mxu0
      %v2062 = vadd.f32 0.0, %v2061
      %v2063 = vpop.f32.mrf.mxu0
      %2064 = vmatprep.mubr.bf16.mxu0 0
      %2065 = vmatmul.mubr.bf16.gmra.mxu0 %v850
      %v2066 = vpop.f32.mrf.mxu0
      %v2067 = vadd.f32 0.0, %v2066
      %v2068 = vpop.f32.mrf.mxu0
      %v2069 = vpop.f32.mrf.mxu0
      %v2070 = vadd.f32 0.0, %v2069
      %v2071 = vpop.f32.mrf.mxu0
      %2072 = vmatprep.mubr.bf16.mxu0 0
      %2073 = vmatmul.mubr.bf16.gmra.mxu0 %v852
      %v2074 = vpop.f32.mrf.mxu0
      %v2075 = vadd.f32 0.0, %v2074
      %v2076 = vpop.f32.mrf.mxu0
      %v2077 = vpop.f32.mrf.mxu0
      %v2078 = vadd.f32 0.0, %v2077
      %v2079 = vpop.f32.mrf.mxu0
      %2080 = vmatprep.mubr.bf16.mxu0 0
      %2081 = vmatmul.mubr.bf16.gmra.mxu0 %v854
      %v2082 = vpop.f32.mrf.mxu0
      %v2083 = vadd.f32 0.0, %v2082
      %v2084 = vpop.f32.mrf.mxu0
      %v2085 = vpop.f32.mrf.mxu0
      %v2086 = vadd.f32 0.0, %v2085
      %v2087 = vpop.f32.mrf.mxu0
      %2088 = vmatprep.mubr.bf16.mxu0 0
      %2089 = vmatmul.mubr.bf16.gmra.mxu0 %v856
      %v2090 = vpop.f32.mrf.mxu0
      %v2091 = vadd.f32 0.0, %v2090
      %v2092 = vpop.f32.mrf.mxu0
      %v2093 = vpop.f32.mrf.mxu0
      %v2094 = vadd.f32 0.0, %v2093
      %v2095 = vpop.f32.mrf.mxu0
      %2096 = vmatprep.mubr.bf16.mxu0 0
      %2097 = vmatmul.mubr.bf16.gmra.mxu0 %v858
      %v2098 = vpop.f32.mrf.mxu0
      %v2099 = vadd.f32 0.0, %v2098
      %v2100 = vpop.f32.mrf.mxu0
      %v2101 = vpop.f32.mrf.mxu0
      %v2102 = vadd.f32 0.0, %v2101
      %v2103 = vpop.f32.mrf.mxu0
      %2104 = vmatprep.mubr.bf16.mxu0 0
      %2105 = vmatmul.mubr.bf16.gmra.mxu0 %v860
      %v2106 = vpop.f32.mrf.mxu0
      %v2107 = vadd.f32 0.0, %v2106
      %v2108 = vpop.f32.mrf.mxu0
      %v2109 = vpop.f32.mrf.mxu0
      %v2110 = vadd.f32 0.0, %v2109
      %v2111 = vpop.f32.mrf.mxu0
      %2112 = vmatprep.mubr.bf16.mxu0 0
      %2113 = vmatmul.mubr.bf16.gmra.mxu0 %v862
      %v2114 = vpop.f32.mrf.mxu0
      %v2115 = vadd.f32 0.0, %v2114
      %v2116 = vpop.f32.mrf.mxu0
      %v2117 = vpop.f32.mrf.mxu0
      %v2118 = vadd.f32 0.0, %v2117
      %v2119 = vpop.f32.mrf.mxu0
      %2120 = vmatprep.mubr.bf16.mxu0 0
      %2121 = vmatmul.mubr.bf16.gmra.mxu0 %v864
      %v2122 = vpop.f32.mrf.mxu0
      %v2123 = vadd.f32 0.0, %v2122
      %v2124 = vpop.f32.mrf.mxu0
      %v2125 = vpop.f32.mrf.mxu0
      %v2126 = vadd.f32 0.0, %v2125
      %v2127 = vpop.f32.mrf.mxu0
      %2128 = vmatprep.mubr.bf16.mxu0 0
      %2129 = vmatmul.mubr.bf16.gmra.mxu0 %v1360
      %v2130 = vpop.f32.mrf.mxu0
      %v2131 = vadd.f32 0.0, %v2130
      %v2132 = vpop.f32.mrf.mxu0
      %v2133 = vpop.f32.mrf.mxu0
      %v2134 = vadd.f32 0.0, %v2133
      %v2135 = vpop.f32.mrf.mxu0
      %2136 = vmatprep.mubr.bf16.mxu0 0
      %2137 = vmatmul.mubr.bf16.gmra.mxu0 %v1979
      %v2138 = vpop.f32.mrf.mxu0
      %v2139 = vadd.f32 0.0, %v2138
      %v2140 = vpop.f32.mrf.mxu0
      %v2141 = vpop.f32.mrf.mxu0
      %v2142 = vadd.f32 0.0, %v2141
      %v2143 = vpop.f32.mrf.mxu0
      %2144 = vdwg.mxu0
      %v2145 = vadd.f32 %v1944, %v2019
      %v2146 = vadd.f32 %v1945, %v2022
      %v2147 = vadd.f32 %v1946, %v2027
      %v2148 = vadd.f32 %v1947, %v2030
      %v2149 = vadd.f32 %v1948, %v2035
      %v2150 = vadd.f32 %v1949, %v2038
      %v2151 = vadd.f32 %v1950, %v2043
      %v2152 = vadd.f32 %v1951, %v2046
      %v2153 = vadd.f32 %v1952, %v2051
      %v2154 = vadd.f32 %v1953, %v2054
      %v2155 = vadd.f32 %v1954, %v2059
      %v2156 = vadd.f32 %v1955, %v2062
      %v2157 = vadd.f32 %v1956, %v2067
      %v2158 = vadd.f32 %v1957, %v2070
      %v2159 = vadd.f32 %v1958, %v2075
      %v2160 = vadd.f32 %v1959, %v2078
      %v2161 = vadd.f32 %v1960, %v2083
      %v2162 = vadd.f32 %v1961, %v2086
      %v2163 = vadd.f32 %v1962, %v2091
      %v2164 = vadd.f32 %v1963, %v2094
      %v2165 = vadd.f32 %v1964, %v2099
      %v2166 = vadd.f32 %v1965, %v2102
      %v2167 = vadd.f32 %v1966, %v2107
      %v2168 = vadd.f32 %v1967, %v2110
      %v2169 = vadd.f32 %v1968, %v2115
      %v2170 = vadd.f32 %v1969, %v2118
      %v2171 = vadd.f32 %v1970, %v2123
      %v2172 = vadd.f32 %v1971, %v2126
      %v2173 = vadd.f32 %v1972, %v2131
      %v2174 = vadd.f32 %v1973, %v2134
      %v2175 = vadd.f32 %v1974, %v2139
      %v2176 = vadd.f32 %v1975, %v2142
      %v2177 = vshrl.u32 %v422, 16
      %v2179 = vshll.u32 %v422, 16
      %v2181 = vrot.slane %v2179, 1
      %v2182 = vor.u32 %v2177, %v2181
      %v2184 = vshll.u32 %v423, 16
      %v2186 = vrot.slane %v2184, 1
      %v2187 = vsel %vm425, %v2182, %v2186
      %s2188 = scalar_lea.vmem %s1, 14
      %v2189 = vld [vmem:[%s2188] sm:$0x3]
      %v2191 = vsel %vm620, %v2187, 0
      %v2194 = vsel %vm669, %v2189, 0
      %2196 = vmatprep.subr.bf16.mxu0 0
      %2197 = vmatpush1.bf16.msra.mxu0 0
      %2198 = vmatprep.subr.bf16.mxu0 0
      %2199 = vmatpush1.bf16.msra.mxu0 0
      %2200 = vmatprep.subr.bf16.mxu0 0
      %2201 = vmatpush1.bf16.msra.mxu0 0
      %2202 = vmatprep.subr.bf16.mxu0 0
      %2203 = vmatpush1.bf16.msra.mxu0 0
      %2204 = vmatprep.subr.bf16.mxu0 0
      %2205 = vmatpush1.bf16.msra.mxu0 0
      %2206 = vmatprep.subr.bf16.mxu0 0
      %2207 = vmatpush1.bf16.msra.mxu0 0
      %2208 = vmatprep.subr.bf16.mxu0 0
      %2209 = vmatpush1.bf16.msra.mxu0 0
      %2210 = vmatprep.subr.bf16.mxu0 0
      %2211 = vmatpush1.bf16.msra.mxu0 %v2194
      %2212 = vmatprep.subr.bf16.mxu0 0
      %2213 = vmatpush2.bf16.msra.mxu0 0
      %2214 = vmatprep.subr.bf16.mxu0 0
      %2215 = vmatpush2.bf16.msra.mxu0 0
      %2216 = vmatprep.subr.bf16.mxu0 0
      %2217 = vmatpush2.bf16.msra.mxu0 0
      %2218 = vmatprep.subr.bf16.mxu0 0
      %2219 = vmatpush2.bf16.msra.mxu0 0
      %2220 = vmatprep.subr.bf16.mxu0 0
      %2221 = vmatpush2.bf16.msra.mxu0 0
      %2222 = vmatprep.subr.bf16.mxu0 0
      %2223 = vmatpush2.bf16.msra.mxu0 0
      %2224 = vmatprep.subr.bf16.mxu0 0
      %2225 = vmatpush2.bf16.msra.mxu0 0
      %2226 = vmatprep.subr.bf16.mxu0 0
      %2227 = vmatpush2.bf16.msra.mxu0 0
      %2228 = vmatprep.mubr.bf16.mxu0 0
      %2229 = vmatmul.mubr.bf16.gmra.mxu0 %v628
      %v2230 = vpop.f32.mrf.mxu0
      %v2231 = vadd.f32 0.0, %v2230
      %v2232 = vpop.f32.mrf.mxu0
      %v2233 = vpop.f32.mrf.mxu0
      %v2234 = vadd.f32 0.0, %v2233
      %v2235 = vpop.f32.mrf.mxu0
      %2236 = vmatprep.mubr.bf16.mxu0 0
      %2237 = vmatmul.mubr.bf16.gmra.mxu0 %v631
      %v2238 = vpop.f32.mrf.mxu0
      %v2239 = vadd.f32 0.0, %v2238
      %v2240 = vpop.f32.mrf.mxu0
      %v2241 = vpop.f32.mrf.mxu0
      %v2242 = vadd.f32 0.0, %v2241
      %v2243 = vpop.f32.mrf.mxu0
      %2244 = vmatprep.mubr.bf16.mxu0 0
      %2245 = vmatmul.mubr.bf16.gmra.mxu0 %v634
      %v2246 = vpop.f32.mrf.mxu0
      %v2247 = vadd.f32 0.0, %v2246
      %v2248 = vpop.f32.mrf.mxu0
      %v2249 = vpop.f32.mrf.mxu0
      %v2250 = vadd.f32 0.0, %v2249
      %v2251 = vpop.f32.mrf.mxu0
      %2252 = vmatprep.mubr.bf16.mxu0 0
      %2253 = vmatmul.mubr.bf16.gmra.mxu0 %v637
      %v2254 = vpop.f32.mrf.mxu0
      %v2255 = vadd.f32 0.0, %v2254
      %v2256 = vpop.f32.mrf.mxu0
      %v2257 = vpop.f32.mrf.mxu0
      %v2258 = vadd.f32 0.0, %v2257
      %v2259 = vpop.f32.mrf.mxu0
      %2260 = vmatprep.mubr.bf16.mxu0 0
      %2261 = vmatmul.mubr.bf16.gmra.mxu0 %v640
      %v2262 = vpop.f32.mrf.mxu0
      %v2263 = vadd.f32 0.0, %v2262
      %v2264 = vpop.f32.mrf.mxu0
      %v2265 = vpop.f32.mrf.mxu0
      %v2266 = vadd.f32 0.0, %v2265
      %v2267 = vpop.f32.mrf.mxu0
      %2268 = vmatprep.mubr.bf16.mxu0 0
      %2269 = vmatmul.mubr.bf16.gmra.mxu0 %v643
      %v2270 = vpop.f32.mrf.mxu0
      %v2271 = vadd.f32 0.0, %v2270
      %v2272 = vpop.f32.mrf.mxu0
      %v2273 = vpop.f32.mrf.mxu0
      %v2274 = vadd.f32 0.0, %v2273
      %v2275 = vpop.f32.mrf.mxu0
      %2276 = vmatprep.mubr.bf16.mxu0 0
      %2277 = vmatmul.mubr.bf16.gmra.mxu0 %v646
      %v2278 = vpop.f32.mrf.mxu0
      %v2279 = vadd.f32 0.0, %v2278
      %v2280 = vpop.f32.mrf.mxu0
      %v2281 = vpop.f32.mrf.mxu0
      %v2282 = vadd.f32 0.0, %v2281
      %v2283 = vpop.f32.mrf.mxu0
      %2284 = vmatprep.mubr.bf16.mxu0 0
      %2285 = vmatmul.mubr.bf16.gmra.mxu0 %v649
      %v2286 = vpop.f32.mrf.mxu0
      %v2287 = vadd.f32 0.0, %v2286
      %v2288 = vpop.f32.mrf.mxu0
      %v2289 = vpop.f32.mrf.mxu0
      %v2290 = vadd.f32 0.0, %v2289
      %v2291 = vpop.f32.mrf.mxu0
      %2292 = vmatprep.mubr.bf16.mxu0 0
      %2293 = vmatmul.mubr.bf16.gmra.mxu0 %v652
      %v2294 = vpop.f32.mrf.mxu0
      %v2295 = vadd.f32 0.0, %v2294
      %v2296 = vpop.f32.mrf.mxu0
      %v2297 = vpop.f32.mrf.mxu0
      %v2298 = vadd.f32 0.0, %v2297
      %v2299 = vpop.f32.mrf.mxu0
      %2300 = vmatprep.mubr.bf16.mxu0 0
      %2301 = vmatmul.mubr.bf16.gmra.mxu0 %v655
      %v2302 = vpop.f32.mrf.mxu0
      %v2303 = vadd.f32 0.0, %v2302
      %v2304 = vpop.f32.mrf.mxu0
      %v2305 = vpop.f32.mrf.mxu0
      %v2306 = vadd.f32 0.0, %v2305
      %v2307 = vpop.f32.mrf.mxu0
      %2308 = vmatprep.mubr.bf16.mxu0 0
      %2309 = vmatmul.mubr.bf16.gmra.mxu0 %v658
      %v2310 = vpop.f32.mrf.mxu0
      %v2311 = vadd.f32 0.0, %v2310
      %v2312 = vpop.f32.mrf.mxu0
      %v2313 = vpop.f32.mrf.mxu0
      %v2314 = vadd.f32 0.0, %v2313
      %v2315 = vpop.f32.mrf.mxu0
      %2316 = vmatprep.mubr.bf16.mxu0 0
      %2317 = vmatmul.mubr.bf16.gmra.mxu0 %v661
      %v2318 = vpop.f32.mrf.mxu0
      %v2319 = vadd.f32 0.0, %v2318
      %v2320 = vpop.f32.mrf.mxu0
      %v2321 = vpop.f32.mrf.mxu0
      %v2322 = vadd.f32 0.0, %v2321
      %v2323 = vpop.f32.mrf.mxu0
      %2324 = vmatprep.mubr.bf16.mxu0 0
      %2325 = vmatmul.mubr.bf16.gmra.mxu0 %v664
      %v2326 = vpop.f32.mrf.mxu0
      %v2327 = vadd.f32 0.0, %v2326
      %v2328 = vpop.f32.mrf.mxu0
      %v2329 = vpop.f32.mrf.mxu0
      %v2330 = vadd.f32 0.0, %v2329
      %v2331 = vpop.f32.mrf.mxu0
      %2332 = vmatprep.mubr.bf16.mxu0 0
      %2333 = vmatmul.mubr.bf16.gmra.mxu0 %v667
      %v2334 = vpop.f32.mrf.mxu0
      %v2335 = vadd.f32 0.0, %v2334
      %v2336 = vpop.f32.mrf.mxu0
      %v2337 = vpop.f32.mrf.mxu0
      %v2338 = vadd.f32 0.0, %v2337
      %v2339 = vpop.f32.mrf.mxu0
      %2340 = vmatprep.mubr.bf16.mxu0 0
      %2341 = vmatmul.mubr.bf16.gmra.mxu0 %v1572
      %v2342 = vpop.f32.mrf.mxu0
      %v2343 = vadd.f32 0.0, %v2342
      %v2344 = vpop.f32.mrf.mxu0
      %v2345 = vpop.f32.mrf.mxu0
      %v2346 = vadd.f32 0.0, %v2345
      %v2347 = vpop.f32.mrf.mxu0
      %2348 = vmatprep.mubr.bf16.mxu0 0
      %2349 = vmatmul.mubr.bf16.gmra.mxu0 %v2191
      %v2350 = vpop.f32.mrf.mxu0
      %v2351 = vadd.f32 0.0, %v2350
      %v2352 = vpop.f32.mrf.mxu0
      %v2353 = vpop.f32.mrf.mxu0
      %v2354 = vadd.f32 0.0, %v2353
      %v2355 = vpop.f32.mrf.mxu0
      %2356 = vdwg.mxu0
      %v2357 = vadd.f32 %v2145, %v2231
      %v2358 = vadd.f32 %v2146, %v2234
      %v2359 = vadd.f32 %v2147, %v2239
      %v2360 = vadd.f32 %v2148, %v2242
      %v2361 = vadd.f32 %v2149, %v2247
      %v2362 = vadd.f32 %v2150, %v2250
      %v2363 = vadd.f32 %v2151, %v2255
      %v2364 = vadd.f32 %v2152, %v2258
      %v2365 = vadd.f32 %v2153, %v2263
      %v2366 = vadd.f32 %v2154, %v2266
      %v2367 = vadd.f32 %v2155, %v2271
      %v2368 = vadd.f32 %v2156, %v2274
      %v2369 = vadd.f32 %v2157, %v2279
      %v2370 = vadd.f32 %v2158, %v2282
      %v2371 = vadd.f32 %v2159, %v2287
      %v2372 = vadd.f32 %v2160, %v2290
      %v2373 = vadd.f32 %v2161, %v2295
      %v2374 = vadd.f32 %v2162, %v2298
      %v2375 = vadd.f32 %v2163, %v2303
      %v2376 = vadd.f32 %v2164, %v2306
      %v2377 = vadd.f32 %v2165, %v2311
      %v2378 = vadd.f32 %v2166, %v2314
      %v2379 = vadd.f32 %v2167, %v2319
      %v2380 = vadd.f32 %v2168, %v2322
      %v2381 = vadd.f32 %v2169, %v2327
      %v2382 = vadd.f32 %v2170, %v2330
      %v2383 = vadd.f32 %v2171, %v2335
      %v2384 = vadd.f32 %v2172, %v2338
      %v2385 = vadd.f32 %v2173, %v2343
      %v2386 = vadd.f32 %v2174, %v2346
      %v2387 = vadd.f32 %v2175, %v2351
      %v2388 = vadd.f32 %v2176, %v2354
      %v2391 = vrot.slane %v422, 1
      %v2392 = vrot.slane %v423, 1
      %v2393 = vsel %vm1062, %v2391, %v2392
      %s2394 = scalar_lea.vmem %s1, 16
      %v2395 = vld [vmem:[%s2394] sm:$0x3]
      %v2397 = vsel %vm620, %v2393, 0
      %v2400 = vsel %vm669, %v2395, 0
      %2402 = vmatprep.subr.bf16.mxu0 0
      %2403 = vmatpush1.bf16.msra.mxu0 0
      %2404 = vmatprep.subr.bf16.mxu0 0
      %2405 = vmatpush1.bf16.msra.mxu0 0
      %2406 = vmatprep.subr.bf16.mxu0 0
      %2407 = vmatpush1.bf16.msra.mxu0 0
      %2408 = vmatprep.subr.bf16.mxu0 0
      %2409 = vmatpush1.bf16.msra.mxu0 0
      %2410 = vmatprep.subr.bf16.mxu0 0
      %2411 = vmatpush1.bf16.msra.mxu0 0
      %2412 = vmatprep.subr.bf16.mxu0 0
      %2413 = vmatpush1.bf16.msra.mxu0 0
      %2414 = vmatprep.subr.bf16.mxu0 0
      %2415 = vmatpush1.bf16.msra.mxu0 0
      %2416 = vmatprep.subr.bf16.mxu0 0
      %2417 = vmatpush1.bf16.msra.mxu0 %v2400
      %2418 = vmatprep.subr.bf16.mxu0 0
      %2419 = vmatpush2.bf16.msra.mxu0 0
      %2420 = vmatprep.subr.bf16.mxu0 0
      %2421 = vmatpush2.bf16.msra.mxu0 0
      %2422 = vmatprep.subr.bf16.mxu0 0
      %2423 = vmatpush2.bf16.msra.mxu0 0
      %2424 = vmatprep.subr.bf16.mxu0 0
      %2425 = vmatpush2.bf16.msra.mxu0 0
      %2426 = vmatprep.subr.bf16.mxu0 0
      %2427 = vmatpush2.bf16.msra.mxu0 0
      %2428 = vmatprep.subr.bf16.mxu0 0
      %2429 = vmatpush2.bf16.msra.mxu0 0
      %2430 = vmatprep.subr.bf16.mxu0 0
      %2431 = vmatpush2.bf16.msra.mxu0 0
      %2432 = vmatprep.subr.bf16.mxu0 0
      %2433 = vmatpush2.bf16.msra.mxu0 0
      %2434 = vmatprep.mubr.bf16.mxu0 0
      %2435 = vmatmul.mubr.bf16.gmra.mxu0 %v1120
      %v2436 = vpop.f32.mrf.mxu0
      %v2437 = vadd.f32 0.0, %v2436
      %v2438 = vpop.f32.mrf.mxu0
      %v2439 = vpop.f32.mrf.mxu0
      %v2440 = vadd.f32 0.0, %v2439
      %v2441 = vpop.f32.mrf.mxu0
      %2442 = vmatprep.mubr.bf16.mxu0 0
      %2443 = vmatmul.mubr.bf16.gmra.mxu0 %v1123
      %v2444 = vpop.f32.mrf.mxu0
      %v2445 = vadd.f32 0.0, %v2444
      %v2446 = vpop.f32.mrf.mxu0
      %v2447 = vpop.f32.mrf.mxu0
      %v2448 = vadd.f32 0.0, %v2447
      %v2449 = vpop.f32.mrf.mxu0
      %2450 = vmatprep.mubr.bf16.mxu0 0
      %2451 = vmatmul.mubr.bf16.gmra.mxu0 %v1126
      %v2452 = vpop.f32.mrf.mxu0
      %v2453 = vadd.f32 0.0, %v2452
      %v2454 = vpop.f32.mrf.mxu0
      %v2455 = vpop.f32.mrf.mxu0
      %v2456 = vadd.f32 0.0, %v2455
      %v2457 = vpop.f32.mrf.mxu0
      %2458 = vmatprep.mubr.bf16.mxu0 0
      %2459 = vmatmul.mubr.bf16.gmra.mxu0 %v1129
      %v2460 = vpop.f32.mrf.mxu0
      %v2461 = vadd.f32 0.0, %v2460
      %v2462 = vpop.f32.mrf.mxu0
      %v2463 = vpop.f32.mrf.mxu0
      %v2464 = vadd.f32 0.0, %v2463
      %v2465 = vpop.f32.mrf.mxu0
      %2466 = vmatprep.mubr.bf16.mxu0 0
      %2467 = vmatmul.mubr.bf16.gmra.mxu0 %v1132
      %v2468 = vpop.f32.mrf.mxu0
      %v2469 = vadd.f32 0.0, %v2468
      %v2470 = vpop.f32.mrf.mxu0
      %v2471 = vpop.f32.mrf.mxu0
      %v2472 = vadd.f32 0.0, %v2471
      %v2473 = vpop.f32.mrf.mxu0
      %2474 = vmatprep.mubr.bf16.mxu0 0
      %2475 = vmatmul.mubr.bf16.gmra.mxu0 %v1135
      %v2476 = vpop.f32.mrf.mxu0
      %v2477 = vadd.f32 0.0, %v2476
      %v2478 = vpop.f32.mrf.mxu0
      %v2479 = vpop.f32.mrf.mxu0
      %v2480 = vadd.f32 0.0, %v2479
      %v2481 = vpop.f32.mrf.mxu0
      %2482 = vmatprep.mubr.bf16.mxu0 0
      %2483 = vmatmul.mubr.bf16.gmra.mxu0 %v1138
      %v2484 = vpop.f32.mrf.mxu0
      %v2485 = vadd.f32 0.0, %v2484
      %v2486 = vpop.f32.mrf.mxu0
      %v2487 = vpop.f32.mrf.mxu0
      %v2488 = vadd.f32 0.0, %v2487
      %v2489 = vpop.f32.mrf.mxu0
      %2490 = vmatprep.mubr.bf16.mxu0 0
      %2491 = vmatmul.mubr.bf16.gmra.mxu0 %v1141
      %v2492 = vpop.f32.mrf.mxu0
      %v2493 = vadd.f32 0.0, %v2492
      %v2494 = vpop.f32.mrf.mxu0
      %v2495 = vpop.f32.mrf.mxu0
      %v2496 = vadd.f32 0.0, %v2495
      %v2497 = vpop.f32.mrf.mxu0
      %2498 = vmatprep.mubr.bf16.mxu0 0
      %2499 = vmatmul.mubr.bf16.gmra.mxu0 %v1144
      %v2500 = vpop.f32.mrf.mxu0
      %v2501 = vadd.f32 0.0, %v2500
      %v2502 = vpop.f32.mrf.mxu0
      %v2503 = vpop.f32.mrf.mxu0
      %v2504 = vadd.f32 0.0, %v2503
      %v2505 = vpop.f32.mrf.mxu0
      %2506 = vmatprep.mubr.bf16.mxu0 0
      %2507 = vmatmul.mubr.bf16.gmra.mxu0 %v1147
      %v2508 = vpop.f32.mrf.mxu0
      %v2509 = vadd.f32 0.0, %v2508
      %v2510 = vpop.f32.mrf.mxu0
      %v2511 = vpop.f32.mrf.mxu0
      %v2512 = vadd.f32 0.0, %v2511
      %v2513 = vpop.f32.mrf.mxu0
      %2514 = vmatprep.mubr.bf16.mxu0 0
      %2515 = vmatmul.mubr.bf16.gmra.mxu0 %v1150
      %v2516 = vpop.f32.mrf.mxu0
      %v2517 = vadd.f32 0.0, %v2516
      %v2518 = vpop.f32.mrf.mxu0
      %v2519 = vpop.f32.mrf.mxu0
      %v2520 = vadd.f32 0.0, %v2519
      %v2521 = vpop.f32.mrf.mxu0
      %2522 = vmatprep.mubr.bf16.mxu0 0
      %2523 = vmatmul.mubr.bf16.gmra.mxu0 %v1153
      %v2524 = vpop.f32.mrf.mxu0
      %v2525 = vadd.f32 0.0, %v2524
      %v2526 = vpop.f32.mrf.mxu0
      %v2527 = vpop.f32.mrf.mxu0
      %v2528 = vadd.f32 0.0, %v2527
      %v2529 = vpop.f32.mrf.mxu0
      %2530 = vmatprep.mubr.bf16.mxu0 0
      %2531 = vmatmul.mubr.bf16.gmra.mxu0 %v1156
      %v2532 = vpop.f32.mrf.mxu0
      %v2533 = vadd.f32 0.0, %v2532
      %v2534 = vpop.f32.mrf.mxu0
      %v2535 = vpop.f32.mrf.mxu0
      %v2536 = vadd.f32 0.0, %v2535
      %v2537 = vpop.f32.mrf.mxu0
      %2538 = vmatprep.mubr.bf16.mxu0 0
      %2539 = vmatmul.mubr.bf16.gmra.mxu0 %v1159
      %v2540 = vpop.f32.mrf.mxu0
      %v2541 = vadd.f32 0.0, %v2540
      %v2542 = vpop.f32.mrf.mxu0
      %v2543 = vpop.f32.mrf.mxu0
      %v2544 = vadd.f32 0.0, %v2543
      %v2545 = vpop.f32.mrf.mxu0
      %2546 = vmatprep.mubr.bf16.mxu0 0
      %2547 = vmatmul.mubr.bf16.gmra.mxu0 %v1778
      %v2548 = vpop.f32.mrf.mxu0
      %v2549 = vadd.f32 0.0, %v2548
      %v2550 = vpop.f32.mrf.mxu0
      %v2551 = vpop.f32.mrf.mxu0
      %v2552 = vadd.f32 0.0, %v2551
      %v2553 = vpop.f32.mrf.mxu0
      %2554 = vmatprep.mubr.bf16.mxu0 0
      %2555 = vmatmul.mubr.bf16.gmra.mxu0 %v2397
      %v2556 = vpop.f32.mrf.mxu0
      %v2557 = vadd.f32 0.0, %v2556
      %v2558 = vpop.f32.mrf.mxu0
      %v2559 = vpop.f32.mrf.mxu0
      %v2560 = vadd.f32 0.0, %v2559
      %v2561 = vpop.f32.mrf.mxu0
      %2562 = vdwg.mxu0
      %v2563 = vadd.f32 %v2357, %v2437
      %v2564 = vadd.f32 %v2358, %v2440
      %v2565 = vadd.f32 %v2359, %v2445
      %v2566 = vadd.f32 %v2360, %v2448
      %v2567 = vadd.f32 %v2361, %v2453
      %v2568 = vadd.f32 %v2362, %v2456
      %v2569 = vadd.f32 %v2363, %v2461
      %v2570 = vadd.f32 %v2364, %v2464
      %v2571 = vadd.f32 %v2365, %v2469
      %v2572 = vadd.f32 %v2366, %v2472
      %v2573 = vadd.f32 %v2367, %v2477
      %v2574 = vadd.f32 %v2368, %v2480
      %v2575 = vadd.f32 %v2369, %v2485
      %v2576 = vadd.f32 %v2370, %v2488
      %v2577 = vadd.f32 %v2371, %v2493
      %v2578 = vadd.f32 %v2372, %v2496
      %v2579 = vadd.f32 %v2373, %v2501
      %v2580 = vadd.f32 %v2374, %v2504
      %v2581 = vadd.f32 %v2375, %v2509
      %v2582 = vadd.f32 %v2376, %v2512
      %v2583 = vadd.f32 %v2377, %v2517
      %v2584 = vadd.f32 %v2378, %v2520
      %v2585 = vadd.f32 %v2379, %v2525
      %v2586 = vadd.f32 %v2380, %v2528
      %v2587 = vadd.f32 %v2381, %v2533
      %v2588 = vadd.f32 %v2382, %v2536
      %v2589 = vadd.f32 %v2383, %v2541
      %v2590 = vadd.f32 %v2384, %v2544
      %v2591 = vadd.f32 %v2385, %v2549
      %v2592 = vadd.f32 %v2386, %v2552
      %v2593 = vadd.f32 %v2387, %v2557
      %v2594 = vadd.f32 %v2388, %v2560
      %v2595 = vld [vmem:[%s2] sm:$0x1]
      %v2597 = vlaneseq
      %v2598 = vshrl.u32 %v2597, 7
      %v2599 = vsub.s32 0, %v2598
      %v2600 = vrot.slane %v2595, %v2599
      %v2602 = vmul.f32 %v2563, %v2600
      %v2603 = vmul.f32 %v2564, %v2600
      %v2604 = vmul.f32 %v2565, %v2600
      %v2605 = vmul.f32 %v2566, %v2600
      %v2606 = vmul.f32 %v2567, %v2600
      %v2607 = vmul.f32 %v2568, %v2600
      %v2608 = vmul.f32 %v2569, %v2600
      %v2609 = vmul.f32 %v2570, %v2600
      %v2610 = vmul.f32 %v2571, %v2600
      %v2611 = vmul.f32 %v2572, %v2600
      %v2612 = vmul.f32 %v2573, %v2600
      %v2613 = vmul.f32 %v2574, %v2600
      %v2614 = vmul.f32 %v2575, %v2600
      %v2615 = vmul.f32 %v2576, %v2600
      %v2616 = vmul.f32 %v2577, %v2600
      %v2617 = vmul.f32 %v2578, %v2600
      %v2618 = vmul.f32 %v2579, %v2600
      %v2619 = vmul.f32 %v2580, %v2600
      %v2620 = vmul.f32 %v2581, %v2600
      %v2621 = vmul.f32 %v2582, %v2600
      %v2622 = vmul.f32 %v2583, %v2600
      %v2623 = vmul.f32 %v2584, %v2600
      %v2624 = vmul.f32 %v2585, %v2600
      %v2625 = vmul.f32 %v2586, %v2600
      %v2626 = vmul.f32 %v2587, %v2600
      %v2627 = vmul.f32 %v2588, %v2600
      %v2628 = vmul.f32 %v2589, %v2600
      %v2629 = vmul.f32 %v2590, %v2600
      %v2630 = vmul.f32 %v2591, %v2600
      %v2631 = vmul.f32 %v2592, %v2600
      %v2632 = vmul.f32 %v2593, %v2600
      %v2633 = vmul.f32 %v2594, %v2600
      %v2634 = vld [vmem:[%s3] sm:$0x1]
      %v2636 = vlaneseq
      %v2637 = vshrl.u32 %v2636, 7
      %v2638 = vsub.s32 0, %v2637
      %v2639 = vrot.slane %v2634, %v2638
      %v2641 = vadd.f32 %v2602, %v2639
      %v2642 = vadd.f32 %v2603, %v2639
      %v2643 = vadd.f32 %v2604, %v2639
      %v2644 = vadd.f32 %v2605, %v2639
      %v2645 = vadd.f32 %v2606, %v2639
      %v2646 = vadd.f32 %v2607, %v2639
      %v2647 = vadd.f32 %v2608, %v2639
      %v2648 = vadd.f32 %v2609, %v2639
      %v2649 = vadd.f32 %v2610, %v2639
      %v2650 = vadd.f32 %v2611, %v2639
      %v2651 = vadd.f32 %v2612, %v2639
      %v2652 = vadd.f32 %v2613, %v2639
      %v2653 = vadd.f32 %v2614, %v2639
      %v2654 = vadd.f32 %v2615, %v2639
      %v2655 = vadd.f32 %v2616, %v2639
      %v2656 = vadd.f32 %v2617, %v2639
      %v2657 = vadd.f32 %v2618, %v2639
      %v2658 = vadd.f32 %v2619, %v2639
      %v2659 = vadd.f32 %v2620, %v2639
      %v2660 = vadd.f32 %v2621, %v2639
      %v2661 = vadd.f32 %v2622, %v2639
      %v2662 = vadd.f32 %v2623, %v2639
      %v2663 = vadd.f32 %v2624, %v2639
      %v2664 = vadd.f32 %v2625, %v2639
      %v2665 = vadd.f32 %v2626, %v2639
      %v2666 = vadd.f32 %v2627, %v2639
      %v2667 = vadd.f32 %v2628, %v2639
      %v2668 = vadd.f32 %v2629, %v2639
      %v2669 = vadd.f32 %v2630, %v2639
      %v2670 = vadd.f32 %v2631, %v2639
      %v2671 = vadd.f32 %v2632, %v2639
      %v2672 = vadd.f32 %v2633, %v2639
      %v2673 = vmax.f32 %v2641, 0.0
      %v2674 = vmax.f32 %v2642, 0.0
      %v2675 = vmax.f32 %v2643, 0.0
      %v2676 = vmax.f32 %v2644, 0.0
      %v2677 = vmax.f32 %v2645, 0.0
      %v2678 = vmax.f32 %v2646, 0.0
      %v2679 = vmax.f32 %v2647, 0.0
      %v2680 = vmax.f32 %v2648, 0.0
      %v2681 = vmax.f32 %v2649, 0.0
      %v2682 = vmax.f32 %v2650, 0.0
      %v2683 = vmax.f32 %v2651, 0.0
      %v2684 = vmax.f32 %v2652, 0.0
      %v2685 = vmax.f32 %v2653, 0.0
      %v2686 = vmax.f32 %v2654, 0.0
      %v2687 = vmax.f32 %v2655, 0.0
      %v2688 = vmax.f32 %v2656, 0.0
      %v2689 = vmax.f32 %v2657, 0.0
      %v2690 = vmax.f32 %v2658, 0.0
      %v2691 = vmax.f32 %v2659, 0.0
      %v2692 = vmax.f32 %v2660, 0.0
      %v2693 = vmax.f32 %v2661, 0.0
      %v2694 = vmax.f32 %v2662, 0.0
      %v2695 = vmax.f32 %v2663, 0.0
      %v2696 = vmax.f32 %v2664, 0.0
      %v2697 = vmax.f32 %v2665, 0.0
      %v2698 = vmax.f32 %v2666, 0.0
      %v2699 = vmax.f32 %v2667, 0.0
      %v2700 = vmax.f32 %v2668, 0.0
      %v2701 = vmax.f32 %v2669, 0.0
      %v2702 = vmax.f32 %v2670, 0.0
      %v2703 = vmax.f32 %v2671, 0.0
      %v2704 = vmax.f32 %v2672, 0.0
      %vm2705 = vcmask 60416
      %2706 = vst.msk [vmem:[#allocation2] sm:$0xf] %vm2705, 0
      %2707 = vst.msk [vmem:[#allocation2 + $0x4] sm:$0xf] %vm2705, 0
      %vm2708 = vcmask 57344
      %2709 = vst.msk [vmem:[#allocation2 + $0x8] sm:$0x1] %vm2708, 0
      %2710 = vst.msk [vmem:[#allocation2 + $0xc] sm:$0xf] %vm2705, 0
      %2711 = vst.msk [vmem:[#allocation2 + $0x10] sm:$0xf] %vm2705, 0
      %2712 = vst.msk [vmem:[#allocation2 + $0x14] sm:$0x1] %vm2708, 0
      %2713 = vst.msk [vmem:[#allocation2 + $0x18] sm:$0xf] %vm2705, 0
      %2714 = vst.msk [vmem:[#allocation2 + $0x1c] sm:$0xf] %vm2705, 0
      %2715 = vst.msk [vmem:[#allocation2 + $0x20] sm:$0x1] %vm2708, 0
      %2716 = vst.msk [vmem:[#allocation2 + $0x24] sm:$0xf] %vm2705, 0
      %2717 = vst.msk [vmem:[#allocation2 + $0x28] sm:$0xf] %vm2705, 0
      %2718 = vst.msk [vmem:[#allocation2 + $0x2c] sm:$0x1] %vm2708, 0
      %2719 = vst.msk [vmem:[#allocation2 + $0x30] sm:$0xf] %vm2705, 0
      %2720 = vst.msk [vmem:[#allocation2 + $0x34] sm:$0xf] %vm2705, 0
      %2721 = vst.msk [vmem:[#allocation2 + $0x38] sm:$0x1] %vm2708, 0
      %2722 = vst.msk [vmem:[#allocation2 + $0x3c] sm:$0xf] %vm2705, 0
      %2723 = vst.msk [vmem:[#allocation2 + $0x40] sm:$0xf] %vm2705, 0
      %2724 = vst.msk [vmem:[#allocation2 + $0x44] sm:$0x1] %vm2708, 0
      %2725 = vst.msk [vmem:[#allocation2 + $0x48] sm:$0xf] %vm2705, 0
      %2726 = vst.msk [vmem:[#allocation2 + $0x4c] sm:$0xf] %vm2705, 0
      %2727 = vst.msk [vmem:[#allocation2 + $0x50] sm:$0x1] %vm2708, 0
      %2728 = vst.msk [vmem:[#allocation2 + $0x54] sm:$0xf] %vm2705, 0
      %2729 = vst.msk [vmem:[#allocation2 + $0x58] sm:$0xf] %vm2705, 0
      %2730 = vst.msk [vmem:[#allocation2 + $0x5c] sm:$0x1] %vm2708, 0
      %2731 = vst.msk [vmem:[#allocation2 + $0x60] sm:$0xf] %vm2705, 0
      %2732 = vst.msk [vmem:[#allocation2 + $0x64] sm:$0xf] %vm2705, 0
      %2733 = vst.msk [vmem:[#allocation2 + $0x68] sm:$0x1] %vm2708, 0
      %2734 = vst.msk [vmem:[#allocation2 + $0x6c] sm:$0xf] %vm2705, 0
      %2735 = vst.msk [vmem:[#allocation2 + $0x70] sm:$0xf] %vm2705, 0
      %2736 = vst.msk [vmem:[#allocation2 + $0x74] sm:$0x1] %vm2708, 0
      %2737 = vst.msk [vmem:[#allocation2 + $0x78] sm:$0xf] %vm2705, 0
      %2738 = vst.msk [vmem:[#allocation2 + $0x7c] sm:$0xf] %vm2705, 0
      %2739 = vst.msk [vmem:[#allocation2 + $0x80] sm:$0x1] %vm2708, 0
      %2740 = vst.msk [vmem:[#allocation2 + $0x84] sm:$0xf] %vm2705, 0
      %2741 = vst.msk [vmem:[#allocation2 + $0x88] sm:$0xf] %vm2705, 0
      %2742 = vst.msk [vmem:[#allocation2 + $0x8c] sm:$0x1] %vm2708, 0
      %2743 = vst.msk [vmem:[#allocation2 + $0x90] sm:$0xf] %vm2705, 0
      %2744 = vst.msk [vmem:[#allocation2 + $0x94] sm:$0xf] %vm2705, 0
      %2745 = vst.msk [vmem:[#allocation2 + $0x98] sm:$0x1] %vm2708, 0
      %2746 = vst.msk [vmem:[#allocation2 + $0x9c] sm:$0xf] %vm2705, 0
      %2747 = vst.msk [vmem:[#allocation2 + $0xa0] sm:$0xf] %vm2705, 0
      %2748 = vst.msk [vmem:[#allocation2 + $0xa4] sm:$0x1] %vm2708, 0
      %2749 = vst.msk [vmem:[#allocation2 + $0xa8] sm:$0xf] %vm2705, 0
      %2750 = vst.msk [vmem:[#allocation2 + $0xac] sm:$0xf] %vm2705, 0
      %2751 = vst.msk [vmem:[#allocation2 + $0xb0] sm:$0x1] %vm2708, 0
      %2752 = vst.msk [vmem:[#allocation2 + $0xb4] sm:$0xf] %vm2705, 0
      %2753 = vst.msk [vmem:[#allocation2 + $0xb8] sm:$0xf] %vm2705, 0
      %2754 = vst.msk [vmem:[#allocation2 + $0xbc] sm:$0x1] %vm2708, 0
      %2755 = vst.msk [vmem:[#allocation2 + $0xc0] sm:$0xf] %vm2705, 0
      %2756 = vst.msk [vmem:[#allocation2 + $0xc4] sm:$0xf] %vm2705, 0
      %2757 = vst.msk [vmem:[#allocation2 + $0xc8] sm:$0x1] %vm2708, 0
      %2758 = vst.msk [vmem:[#allocation2 + $0xcc] sm:$0xf] %vm2705, 0
      %2759 = vst.msk [vmem:[#allocation2 + $0xd0] sm:$0xf] %vm2705, 0
      %2760 = vst.msk [vmem:[#allocation2 + $0xd4] sm:$0x1] %vm2708, 0
      %v2761 = vpack.c.bf16 %v2674, %v2673
      %v2762 = vpack.c.bf16 %v2676, %v2675
      %v2763 = vpack.c.bf16 %v2678, %v2677
      %v2764 = vpack.c.bf16 %v2680, %v2679
      %v2765 = vpack.c.bf16 %v2682, %v2681
      %v2766 = vpack.c.bf16 %v2684, %v2683
      %v2767 = vpack.c.bf16 %v2686, %v2685
      %v2768 = vpack.c.bf16 %v2688, %v2687
      %v2769 = vpack.c.bf16 %v2690, %v2689
      %v2770 = vpack.c.bf16 %v2692, %v2691
      %v2771 = vpack.c.bf16 %v2694, %v2693
      %v2772 = vpack.c.bf16 %v2696, %v2695
      %v2773 = vpack.c.bf16 %v2698, %v2697
      %v2774 = vpack.c.bf16 %v2700, %v2699
      %v2775 = vpack.c.bf16 %v2702, %v2701
      %v2776 = vpack.c.bf16 %v2704, %v2703
      %v2793 = vunpack.c.l.b16 %v2761
      %v2794 = vunpack.c.h.b16 %v2761
      %v2795 = vunpack.c.l.b16 %v2762
      %v2796 = vunpack.c.h.b16 %v2762
      %v2797 = vunpack.c.l.b16 %v2763
      %v2798 = vunpack.c.h.b16 %v2763
      %v2799 = vunpack.c.l.b16 %v2764
      %v2800 = vunpack.c.h.b16 %v2764
      %v2801 = vunpack.c.l.b16 %v2765
      %v2802 = vunpack.c.h.b16 %v2765
      %v2803 = vunpack.c.l.b16 %v2766
      %v2804 = vunpack.c.h.b16 %v2766
      %v2805 = vunpack.c.l.b16 %v2767
      %v2806 = vunpack.c.h.b16 %v2767
      %v2807 = vunpack.c.l.b16 %v2768
      %v2808 = vunpack.c.h.b16 %v2768
      %v2809 = vunpack.c.l.b16 %v2769
      %v2810 = vunpack.c.h.b16 %v2769
      %v2811 = vunpack.c.l.b16 %v2770
      %v2812 = vunpack.c.h.b16 %v2770
      %v2813 = vunpack.c.l.b16 %v2771
      %v2814 = vunpack.c.h.b16 %v2771
      %v2815 = vunpack.c.l.b16 %v2772
      %v2816 = vunpack.c.h.b16 %v2772
      %v2817 = vunpack.c.l.b16 %v2773
      %v2818 = vunpack.c.h.b16 %v2773
      %v2819 = vunpack.c.l.b16 %v2774
      %v2820 = vunpack.c.h.b16 %v2774
      %v2821 = vunpack.c.l.b16 %v2775
      %v2822 = vunpack.c.h.b16 %v2775
      %v2823 = vunpack.c.l.b16 %v2776
      %v2824 = vunpack.c.h.b16 %v2776
      %v2825 = vpack.c.b16 %v2793, %v2793
      %v2826 = vpack.c.b16 %v2794, %v2794
      %v2827 = vpack.c.b16 %v2795, %v2795
      %v2828 = vpack.c.b16 %v2796, %v2796
      %v2829 = vpack.c.b16 %v2797, %v2797
      %v2830 = vpack.c.b16 %v2798, %v2798
      %v2831 = vpack.c.b16 %v2799, %v2799
      %v2832 = vpack.c.b16 %v2800, %v2800
      %v2833 = vpack.c.b16 %v2801, %v2801
      %v2834 = vpack.c.b16 %v2802, %v2802
      %v2835 = vpack.c.b16 %v2803, %v2803
      %v2836 = vpack.c.b16 %v2804, %v2804
      %v2837 = vpack.c.b16 %v2805, %v2805
      %v2838 = vpack.c.b16 %v2806, %v2806
      %v2839 = vpack.c.b16 %v2807, %v2807
      %v2840 = vpack.c.b16 %v2808, %v2808
      %v2841 = vpack.c.b16 %v2809, %v2809
      %v2842 = vpack.c.b16 %v2810, %v2810
      %v2843 = vpack.c.b16 %v2811, %v2811
      %v2844 = vpack.c.b16 %v2812, %v2812
      %v2845 = vpack.c.b16 %v2813, %v2813
      %v2846 = vpack.c.b16 %v2814, %v2814
      %v2847 = vpack.c.b16 %v2815, %v2815
      %v2848 = vpack.c.b16 %v2816, %v2816
      %v2849 = vpack.c.b16 %v2817, %v2817
      %v2850 = vpack.c.b16 %v2818, %v2818
      %v2851 = vpack.c.b16 %v2819, %v2819
      %v2852 = vpack.c.b16 %v2820, %v2820
      %v2853 = vpack.c.b16 %v2821, %v2821
      %v2854 = vpack.c.b16 %v2822, %v2822
      %v2855 = vpack.c.b16 %v2823, %v2823
      %v2856 = vpack.c.b16 %v2824, %v2824
      %vm2857 = vsmask.f32 256
      %vm2858 = vsmask.f32 4368
      %vm2859 = vmor %vm2857, %vm2858
      %v2861 = vshrl.u32 %v2825, 16
      %v2863 = vrot.slane %v2861, 7
      %v2864 = vshll.u32 %v2825, 16
      %v2866 = vor.u32 %v2863, %v2864
      %v2867 = vrot.slane %v2863, 4
      %v2869 = vshrl.u32 %v2826, 16
      %v2871 = vrot.slane %v2869, 7
      %v2872 = vshll.u32 %v2826, 16
      %v2874 = vor.u32 %v2871, %v2872
      %v2875 = vsel %vm2859, %v2867, %v2874
      %v2876 = vrot.slane %v2871, 4
      %v2878 = vshrl.u32 %v2827, 16
      %v2880 = vrot.slane %v2878, 7
      %v2881 = vshll.u32 %v2827, 16
      %v2883 = vor.u32 %v2880, %v2881
      %v2884 = vrot.slane %v2880, 4
      %v2886 = vshrl.u32 %v2828, 16
      %v2888 = vrot.slane %v2886, 7
      %v2889 = vshll.u32 %v2828, 16
      %v2891 = vor.u32 %v2888, %v2889
      %v2892 = vsel %vm2859, %v2884, %v2891
      %v2893 = vrot.slane %v2888, 4
      %v2895 = vshrl.u32 %v2829, 16
      %v2897 = vrot.slane %v2895, 7
      %v2898 = vshll.u32 %v2829, 16
      %v2900 = vor.u32 %v2897, %v2898
      %v2901 = vrot.slane %v2897, 4
      %v2903 = vshrl.u32 %v2830, 16
      %v2905 = vrot.slane %v2903, 7
      %v2906 = vshll.u32 %v2830, 16
      %v2908 = vor.u32 %v2905, %v2906
      %v2909 = vsel %vm2859, %v2901, %v2908
      %v2910 = vrot.slane %v2905, 4
      %v2912 = vshrl.u32 %v2831, 16
      %v2914 = vrot.slane %v2912, 7
      %v2915 = vshll.u32 %v2831, 16
      %v2917 = vor.u32 %v2914, %v2915
      %v2918 = vrot.slane %v2914, 4
      %v2920 = vshrl.u32 %v2832, 16
      %v2922 = vrot.slane %v2920, 7
      %v2923 = vshll.u32 %v2832, 16
      %v2925 = vor.u32 %v2922, %v2923
      %v2926 = vsel %vm2859, %v2918, %v2925
      %v2927 = vrot.slane %v2922, 4
      %v2929 = vshrl.u32 %v2833, 16
      %v2931 = vrot.slane %v2929, 7
      %v2932 = vshll.u32 %v2833, 16
      %v2934 = vor.u32 %v2931, %v2932
      %v2935 = vrot.slane %v2931, 4
      %v2937 = vshrl.u32 %v2834, 16
      %v2939 = vrot.slane %v2937, 7
      %v2940 = vshll.u32 %v2834, 16
      %v2942 = vor.u32 %v2939, %v2940
      %v2943 = vsel %vm2859, %v2935, %v2942
      %v2944 = vrot.slane %v2939, 4
      %v2946 = vshrl.u32 %v2835, 16
      %v2948 = vrot.slane %v2946, 7
      %v2949 = vshll.u32 %v2835, 16
      %v2951 = vor.u32 %v2948, %v2949
      %v2952 = vrot.slane %v2948, 4
      %v2954 = vshrl.u32 %v2836, 16
      %v2956 = vrot.slane %v2954, 7
      %v2957 = vshll.u32 %v2836, 16
      %v2959 = vor.u32 %v2956, %v2957
      %v2960 = vsel %vm2859, %v2952, %v2959
      %v2961 = vrot.slane %v2956, 4
      %v2963 = vshrl.u32 %v2837, 16
      %v2965 = vrot.slane %v2963, 7
      %v2966 = vshll.u32 %v2837, 16
      %v2968 = vor.u32 %v2965, %v2966
      %v2969 = vrot.slane %v2965, 4
      %v2971 = vshrl.u32 %v2838, 16
      %v2973 = vrot.slane %v2971, 7
      %v2974 = vshll.u32 %v2838, 16
      %v2976 = vor.u32 %v2973, %v2974
      %v2977 = vsel %vm2859, %v2969, %v2976
      %v2978 = vrot.slane %v2973, 4
      %v2980 = vshrl.u32 %v2839, 16
      %v2982 = vrot.slane %v2980, 7
      %v2983 = vshll.u32 %v2839, 16
      %v2985 = vor.u32 %v2982, %v2983
      %v2986 = vrot.slane %v2982, 4
      %v2988 = vshrl.u32 %v2840, 16
      %v2990 = vrot.slane %v2988, 7
      %v2991 = vshll.u32 %v2840, 16
      %v2993 = vor.u32 %v2990, %v2991
      %v2994 = vsel %vm2859, %v2986, %v2993
      %v2995 = vrot.slane %v2990, 4
      %v2997 = vshrl.u32 %v2841, 16
      %v2999 = vrot.slane %v2997, 7
      %v3000 = vshll.u32 %v2841, 16
      %v3002 = vor.u32 %v2999, %v3000
      %v3003 = vrot.slane %v2999, 4
      %v3005 = vshrl.u32 %v2842, 16
      %v3007 = vrot.slane %v3005, 7
      %v3008 = vshll.u32 %v2842, 16
      %v3010 = vor.u32 %v3007, %v3008
      %v3011 = vsel %vm2859, %v3003, %v3010
      %v3012 = vrot.slane %v3007, 4
      %v3014 = vshrl.u32 %v2843, 16
      %v3016 = vrot.slane %v3014, 7
      %v3017 = vshll.u32 %v2843, 16
      %v3019 = vor.u32 %v3016, %v3017
      %v3020 = vrot.slane %v3016, 4
      %v3022 = vshrl.u32 %v2844, 16
      %v3024 = vrot.slane %v3022, 7
      %v3025 = vshll.u32 %v2844, 16
      %v3027 = vor.u32 %v3024, %v3025
      %v3028 = vsel %vm2859, %v3020, %v3027
      %v3029 = vrot.slane %v3024, 4
      %v3031 = vshrl.u32 %v2845, 16
      %v3033 = vrot.slane %v3031, 7
      %v3034 = vshll.u32 %v2845, 16
      %v3036 = vor.u32 %v3033, %v3034
      %v3037 = vrot.slane %v3033, 4
      %v3039 = vshrl.u32 %v2846, 16
      %v3041 = vrot.slane %v3039, 7
      %v3042 = vshll.u32 %v2846, 16
      %v3044 = vor.u32 %v3041, %v3042
      %v3045 = vsel %vm2859, %v3037, %v3044
      %v3046 = vrot.slane %v3041, 4
      %v3048 = vshrl.u32 %v2847, 16
      %v3050 = vrot.slane %v3048, 7
      %v3051 = vshll.u32 %v2847, 16
      %v3053 = vor.u32 %v3050, %v3051
      %v3054 = vrot.slane %v3050, 4
      %v3056 = vshrl.u32 %v2848, 16
      %v3058 = vrot.slane %v3056, 7
      %v3059 = vshll.u32 %v2848, 16
      %v3061 = vor.u32 %v3058, %v3059
      %v3062 = vsel %vm2859, %v3054, %v3061
      %v3063 = vrot.slane %v3058, 4
      %v3065 = vshrl.u32 %v2849, 16
      %v3067 = vrot.slane %v3065, 7
      %v3068 = vshll.u32 %v2849, 16
      %v3070 = vor.u32 %v3067, %v3068
      %v3071 = vrot.slane %v3067, 4
      %v3073 = vshrl.u32 %v2850, 16
      %v3075 = vrot.slane %v3073, 7
      %v3076 = vshll.u32 %v2850, 16
      %v3078 = vor.u32 %v3075, %v3076
      %v3079 = vsel %vm2859, %v3071, %v3078
      %v3080 = vrot.slane %v3075, 4
      %v3082 = vshrl.u32 %v2851, 16
      %v3084 = vrot.slane %v3082, 7
      %v3085 = vshll.u32 %v2851, 16
      %v3087 = vor.u32 %v3084, %v3085
      %v3088 = vrot.slane %v3084, 4
      %v3090 = vshrl.u32 %v2852, 16
      %v3092 = vrot.slane %v3090, 7
      %v3093 = vshll.u32 %v2852, 16
      %v3095 = vor.u32 %v3092, %v3093
      %v3096 = vsel %vm2859, %v3088, %v3095
      %v3097 = vrot.slane %v3092, 4
      %v3099 = vshrl.u32 %v2853, 16
      %v3101 = vrot.slane %v3099, 7
      %v3102 = vshll.u32 %v2853, 16
      %v3104 = vor.u32 %v3101, %v3102
      %v3105 = vrot.slane %v3101, 4
      %v3107 = vshrl.u32 %v2854, 16
      %v3109 = vrot.slane %v3107, 7
      %v3110 = vshll.u32 %v2854, 16
      %v3112 = vor.u32 %v3109, %v3110
      %v3113 = vsel %vm2859, %v3105, %v3112
      %v3114 = vrot.slane %v3109, 4
      %v3116 = vshrl.u32 %v2855, 16
      %v3118 = vrot.slane %v3116, 7
      %v3119 = vshll.u32 %v2855, 16
      %v3121 = vor.u32 %v3118, %v3119
      %v3122 = vrot.slane %v3118, 4
      %v3124 = vshrl.u32 %v2856, 16
      %v3126 = vrot.slane %v3124, 7
      %v3127 = vshll.u32 %v2856, 16
      %v3129 = vor.u32 %v3126, %v3127
      %v3130 = vsel %vm2859, %v3122, %v3129
      %v3131 = vrot.slane %v3126, 4
      %s3180 = scalar_lea.vmem [#allocation2], 12
      %vm3181 = vcmask 60416
      %vm3182 = vsmask.f32 7938
      %vm3183 = vmand %vm3181, %vm3182
      %v3184 = vld [vmem:[%s3180] sm:$0xf]
      %v3185 = vsel %vm3183, %v2866, %v3184
      %3186 = vst [vmem:[%s3180] sm:$0xf] %v3185
      %3187 = vst.msk [vmem:[%s3180 + $0x4] sm:$0xf] %vm2705, %v2875
      %vm3188 = vcmask 57344
      %vm3189 = vmand %vm3188, %vm2857
      %v3190 = vld [vmem:[%s3180 + $0x8] sm:$0x1]
      %v3191 = vsel %vm3189, %v2876, %v3190
      %3192 = vst [vmem:[%s3180 + $0x8] sm:$0x1] %v3191
      %v3193 = vld [vmem:[%s3180 + $0xc] sm:$0xf]
      %v3194 = vsel %vm3183, %v2883, %v3193
      %3195 = vst [vmem:[%s3180 + $0xc] sm:$0xf] %v3194
      %3196 = vst.msk [vmem:[%s3180 + $0x10] sm:$0xf] %vm2705, %v2892
      %v3197 = vld [vmem:[%s3180 + $0x14] sm:$0x1]
      %v3198 = vsel %vm3189, %v2893, %v3197
      %3199 = vst [vmem:[%s3180 + $0x14] sm:$0x1] %v3198
      %v3200 = vld [vmem:[%s3180 + $0x18] sm:$0xf]
      %v3201 = vsel %vm3183, %v2900, %v3200
      %3202 = vst [vmem:[%s3180 + $0x18] sm:$0xf] %v3201
      %3203 = vst.msk [vmem:[%s3180 + $0x1c] sm:$0xf] %vm2705, %v2909
      %v3204 = vld [vmem:[%s3180 + $0x20] sm:$0x1]
      %v3205 = vsel %vm3189, %v2910, %v3204
      %3206 = vst [vmem:[%s3180 + $0x20] sm:$0x1] %v3205
      %v3207 = vld [vmem:[%s3180 + $0x24] sm:$0xf]
      %v3208 = vsel %vm3183, %v2917, %v3207
      %3209 = vst [vmem:[%s3180 + $0x24] sm:$0xf] %v3208
      %3210 = vst.msk [vmem:[%s3180 + $0x28] sm:$0xf] %vm2705, %v2926
      %v3211 = vld [vmem:[%s3180 + $0x2c] sm:$0x1]
      %v3212 = vsel %vm3189, %v2927, %v3211
      %3213 = vst [vmem:[%s3180 + $0x2c] sm:$0x1] %v3212
      %v3214 = vld [vmem:[%s3180 + $0x30] sm:$0xf]
      %v3215 = vsel %vm3183, %v2934, %v3214
      %3216 = vst [vmem:[%s3180 + $0x30] sm:$0xf] %v3215
      %3217 = vst.msk [vmem:[%s3180 + $0x34] sm:$0xf] %vm2705, %v2943
      %v3218 = vld [vmem:[%s3180 + $0x38] sm:$0x1]
      %v3219 = vsel %vm3189, %v2944, %v3218
      %3220 = vst [vmem:[%s3180 + $0x38] sm:$0x1] %v3219
      %v3221 = vld [vmem:[%s3180 + $0x3c] sm:$0xf]
      %v3222 = vsel %vm3183, %v2951, %v3221
      %3223 = vst [vmem:[%s3180 + $0x3c] sm:$0xf] %v3222
      %3224 = vst.msk [vmem:[%s3180 + $0x40] sm:$0xf] %vm2705, %v2960
      %v3225 = vld [vmem:[%s3180 + $0x44] sm:$0x1]
      %v3226 = vsel %vm3189, %v2961, %v3225
      %3227 = vst [vmem:[%s3180 + $0x44] sm:$0x1] %v3226
      %v3228 = vld [vmem:[%s3180 + $0x48] sm:$0xf]
      %v3229 = vsel %vm3183, %v2968, %v3228
      %3230 = vst [vmem:[%s3180 + $0x48] sm:$0xf] %v3229
      %3231 = vst.msk [vmem:[%s3180 + $0x4c] sm:$0xf] %vm2705, %v2977
      %v3232 = vld [vmem:[%s3180 + $0x50] sm:$0x1]
      %v3233 = vsel %vm3189, %v2978, %v3232
      %3234 = vst [vmem:[%s3180 + $0x50] sm:$0x1] %v3233
      %v3235 = vld [vmem:[%s3180 + $0x54] sm:$0xf]
      %v3236 = vsel %vm3183, %v2985, %v3235
      %3237 = vst [vmem:[%s3180 + $0x54] sm:$0xf] %v3236
      %3238 = vst.msk [vmem:[%s3180 + $0x58] sm:$0xf] %vm2705, %v2994
      %v3239 = vld [vmem:[%s3180 + $0x5c] sm:$0x1]
      %v3240 = vsel %vm3189, %v2995, %v3239
      %3241 = vst [vmem:[%s3180 + $0x5c] sm:$0x1] %v3240
      %v3242 = vld [vmem:[%s3180 + $0x60] sm:$0xf]
      %v3243 = vsel %vm3183, %v3002, %v3242
      %3244 = vst [vmem:[%s3180 + $0x60] sm:$0xf] %v3243
      %3245 = vst.msk [vmem:[%s3180 + $0x64] sm:$0xf] %vm2705, %v3011
      %v3246 = vld [vmem:[%s3180 + $0x68] sm:$0x1]
      %v3247 = vsel %vm3189, %v3012, %v3246
      %3248 = vst [vmem:[%s3180 + $0x68] sm:$0x1] %v3247
      %v3249 = vld [vmem:[%s3180 + $0x6c] sm:$0xf]
      %v3250 = vsel %vm3183, %v3019, %v3249
      %3251 = vst [vmem:[%s3180 + $0x6c] sm:$0xf] %v3250
      %3252 = vst.msk [vmem:[%s3180 + $0x70] sm:$0xf] %vm2705, %v3028
      %v3253 = vld [vmem:[%s3180 + $0x74] sm:$0x1]
      %v3254 = vsel %vm3189, %v3029, %v3253
      %3255 = vst [vmem:[%s3180 + $0x74] sm:$0x1] %v3254
      %v3256 = vld [vmem:[%s3180 + $0x78] sm:$0xf]
      %v3257 = vsel %vm3183, %v3036, %v3256
      %3258 = vst [vmem:[%s3180 + $0x78] sm:$0xf] %v3257
      %3259 = vst.msk [vmem:[%s3180 + $0x7c] sm:$0xf] %vm2705, %v3045
      %v3260 = vld [vmem:[%s3180 + $0x80] sm:$0x1]
      %v3261 = vsel %vm3189, %v3046, %v3260
      %3262 = vst [vmem:[%s3180 + $0x80] sm:$0x1] %v3261
      %v3263 = vld [vmem:[%s3180 + $0x84] sm:$0xf]
      %v3264 = vsel %vm3183, %v3053, %v3263
      %3265 = vst [vmem:[%s3180 + $0x84] sm:$0xf] %v3264
      %3266 = vst.msk [vmem:[%s3180 + $0x88] sm:$0xf] %vm2705, %v3062
      %v3267 = vld [vmem:[%s3180 + $0x8c] sm:$0x1]
      %v3268 = vsel %vm3189, %v3063, %v3267
      %3269 = vst [vmem:[%s3180 + $0x8c] sm:$0x1] %v3268
      %v3270 = vld [vmem:[%s3180 + $0x90] sm:$0xf]
      %v3271 = vsel %vm3183, %v3070, %v3270
      %3272 = vst [vmem:[%s3180 + $0x90] sm:$0xf] %v3271
      %3273 = vst.msk [vmem:[%s3180 + $0x94] sm:$0xf] %vm2705, %v3079
      %v3274 = vld [vmem:[%s3180 + $0x98] sm:$0x1]
      %v3275 = vsel %vm3189, %v3080, %v3274
      %3276 = vst [vmem:[%s3180 + $0x98] sm:$0x1] %v3275
      %v3277 = vld [vmem:[%s3180 + $0x9c] sm:$0xf]
      %v3278 = vsel %vm3183, %v3087, %v3277
      %3279 = vst [vmem:[%s3180 + $0x9c] sm:$0xf] %v3278
      %3280 = vst.msk [vmem:[%s3180 + $0xa0] sm:$0xf] %vm2705, %v3096
      %v3281 = vld [vmem:[%s3180 + $0xa4] sm:$0x1]
      %v3282 = vsel %vm3189, %v3097, %v3281
      %3283 = vst [vmem:[%s3180 + $0xa4] sm:$0x1] %v3282
      %v3284 = vld [vmem:[%s3180 + $0xa8] sm:$0xf]
      %v3285 = vsel %vm3183, %v3104, %v3284
      %3286 = vst [vmem:[%s3180 + $0xa8] sm:$0xf] %v3285
      %3287 = vst.msk [vmem:[%s3180 + $0xac] sm:$0xf] %vm2705, %v3113
      %v3288 = vld [vmem:[%s3180 + $0xb0] sm:$0x1]
      %v3289 = vsel %vm3189, %v3114, %v3288
      %3290 = vst [vmem:[%s3180 + $0xb0] sm:$0x1] %v3289
      %v3291 = vld [vmem:[%s3180 + $0xb4] sm:$0xf]
      %v3292 = vsel %vm3183, %v3121, %v3291
      %3293 = vst [vmem:[%s3180 + $0xb4] sm:$0xf] %v3292
      %3294 = vst.msk [vmem:[%s3180 + $0xb8] sm:$0xf] %vm2705, %v3130
      %v3295 = vld [vmem:[%s3180 + $0xbc] sm:$0x1]
      %v3296 = vsel %vm3189, %v3131, %v3295
      %3297 = vst [vmem:[%s3180 + $0xbc] sm:$0x1] %v3296
      %v3298 = vld [vmem:[#allocation2] sm:$0xf]
      %v3299 = vld [vmem:[#allocation2 + $0x4] sm:$0xf]
      %v3300 = vld [vmem:[#allocation2 + $0x8] sm:$0x1]
      %v3301 = vld [vmem:[#allocation2 + $0xc] sm:$0xf]
      %v3302 = vld [vmem:[#allocation2 + $0x10] sm:$0xf]
      %v3303 = vld [vmem:[#allocation2 + $0x14] sm:$0x1]
      %v3304 = vld [vmem:[#allocation2 + $0x18] sm:$0xf]
      %v3305 = vld [vmem:[#allocation2 + $0x1c] sm:$0xf]
      %v3306 = vld [vmem:[#allocation2 + $0x20] sm:$0x1]
      %v3307 = vld [vmem:[#allocation2 + $0x24] sm:$0xf]
      %v3308 = vld [vmem:[#allocation2 + $0x28] sm:$0xf]
      %v3309 = vld [vmem:[#allocation2 + $0x2c] sm:$0x1]
      %v3310 = vld [vmem:[#allocation2 + $0x30] sm:$0xf]
      %v3311 = vld [vmem:[#allocation2 + $0x34] sm:$0xf]
      %v3312 = vld [vmem:[#allocation2 + $0x38] sm:$0x1]
      %v3313 = vld [vmem:[#allocation2 + $0x3c] sm:$0xf]
      %v3314 = vld [vmem:[#allocation2 + $0x40] sm:$0xf]
      %v3315 = vld [vmem:[#allocation2 + $0x44] sm:$0x1]
      %v3316 = vld [vmem:[#allocation2 + $0x48] sm:$0xf]
      %v3317 = vld [vmem:[#allocation2 + $0x4c] sm:$0xf]
      %v3318 = vld [vmem:[#allocation2 + $0x50] sm:$0x1]
      %v3319 = vld [vmem:[#allocation2 + $0x54] sm:$0xf]
      %v3320 = vld [vmem:[#allocation2 + $0x58] sm:$0xf]
      %v3321 = vld [vmem:[#allocation2 + $0x5c] sm:$0x1]
      %v3322 = vld [vmem:[#allocation2 + $0x60] sm:$0xf]
      %v3323 = vld [vmem:[#allocation2 + $0x64] sm:$0xf]
      %v3324 = vld [vmem:[#allocation2 + $0x68] sm:$0x1]
      %v3325 = vld [vmem:[#allocation2 + $0x6c] sm:$0xf]
      %v3326 = vld [vmem:[#allocation2 + $0x70] sm:$0xf]
      %v3327 = vld [vmem:[#allocation2 + $0x74] sm:$0x1]
      %v3328 = vld [vmem:[#allocation2 + $0x78] sm:$0xf]
      %v3329 = vld [vmem:[#allocation2 + $0x7c] sm:$0xf]
      %v3330 = vld [vmem:[#allocation2 + $0x80] sm:$0x1]
      %v3331 = vld [vmem:[#allocation2 + $0x84] sm:$0xf]
      %v3332 = vld [vmem:[#allocation2 + $0x88] sm:$0xf]
      %v3333 = vld [vmem:[#allocation2 + $0x8c] sm:$0x1]
      %v3334 = vld [vmem:[#allocation2 + $0x90] sm:$0xf]
      %v3335 = vld [vmem:[#allocation2 + $0x94] sm:$0xf]
      %v3336 = vld [vmem:[#allocation2 + $0x98] sm:$0x1]
      %v3337 = vld [vmem:[#allocation2 + $0x9c] sm:$0xf]
      %v3338 = vld [vmem:[#allocation2 + $0xa0] sm:$0xf]
      %v3339 = vld [vmem:[#allocation2 + $0xa4] sm:$0x1]
      %v3340 = vld [vmem:[#allocation2 + $0xa8] sm:$0xf]
      %v3341 = vld [vmem:[#allocation2 + $0xac] sm:$0xf]
      %v3342 = vld [vmem:[#allocation2 + $0xb0] sm:$0x1]
      %v3343 = vld [vmem:[#allocation2 + $0xb4] sm:$0xf]
      %v3344 = vld [vmem:[#allocation2 + $0xb8] sm:$0xf]
      %v3345 = vld [vmem:[#allocation2 + $0xbc] sm:$0x1]
      %v3346 = vld [vmem:[#allocation2 + $0xc0] sm:$0xf]
      %v3347 = vld [vmem:[#allocation2 + $0xc4] sm:$0xf]
      %v3348 = vld [vmem:[#allocation2 + $0xc8] sm:$0x1]
      %v3349 = vld [vmem:[#allocation2 + $0xcc] sm:$0xf]
      %v3350 = vld [vmem:[#allocation2 + $0xd0] sm:$0xf]
      %v3351 = vld [vmem:[#allocation2 + $0xd4] sm:$0x1]
      %v3352 = vld [vmem:[%s4] sm:$0xf]
      %vm3353 = vsmask.f32 3328
      %vm3354 = vsmask.f32 7440
      %vm3355 = vmor %vm3353, %vm3354
      %v3357 = vshrl.u32 %v3298, 16
      %v3359 = vrot.slane %v3357, 4
      %v3360 = vshll.u32 %v3298, 16
      %v3362 = vrot.slane %v3360, 5
      %v3363 = vor.u32 %v3359, %v3362
      %v3364 = vrot.slane %v3363, 4
      %v3366 = vshll.u32 %v3299, 16
      %v3368 = vrot.slane %v3366, 5
      %v3369 = vsel %vm3355, %v3364, %v3368
      %v3370 = vshrl.u32 %v3299, 16
      %v3372 = vrot.slane %v3370, 4
      %v3373 = vor.u32 %v3372, %v3368
      %v3374 = vrot.slane %v3373, 4
      %v3376 = vshll.u32 %v3300, 16
      %v3378 = vrot.slane %v3376, 5
      %v3379 = vsel %vm3355, %v3374, %v3378
      %v3381 = vshrl.u32 %v3301, 16
      %v3383 = vrot.slane %v3381, 4
      %v3384 = vshll.u32 %v3301, 16
      %v3386 = vrot.slane %v3384, 5
      %v3387 = vor.u32 %v3383, %v3386
      %v3388 = vrot.slane %v3387, 4
      %v3390 = vshll.u32 %v3302, 16
      %v3392 = vrot.slane %v3390, 5
      %v3393 = vsel %vm3355, %v3388, %v3392
      %v3394 = vshrl.u32 %v3302, 16
      %v3396 = vrot.slane %v3394, 4
      %v3397 = vor.u32 %v3396, %v3392
      %v3398 = vrot.slane %v3397, 4
      %v3400 = vshll.u32 %v3303, 16
      %v3402 = vrot.slane %v3400, 5
      %v3403 = vsel %vm3355, %v3398, %v3402
      %v3405 = vshrl.u32 %v3304, 16
      %v3407 = vrot.slane %v3405, 4
      %v3408 = vshll.u32 %v3304, 16
      %v3410 = vrot.slane %v3408, 5
      %v3411 = vor.u32 %v3407, %v3410
      %v3412 = vrot.slane %v3411, 4
      %v3414 = vshll.u32 %v3305, 16
      %v3416 = vrot.slane %v3414, 5
      %v3417 = vsel %vm3355, %v3412, %v3416
      %v3418 = vshrl.u32 %v3305, 16
      %v3420 = vrot.slane %v3418, 4
      %v3421 = vor.u32 %v3420, %v3416
      %v3422 = vrot.slane %v3421, 4
      %v3424 = vshll.u32 %v3306, 16
      %v3426 = vrot.slane %v3424, 5
      %v3427 = vsel %vm3355, %v3422, %v3426
      %v3429 = vshrl.u32 %v3307, 16
      %v3431 = vrot.slane %v3429, 4
      %v3432 = vshll.u32 %v3307, 16
      %v3434 = vrot.slane %v3432, 5
      %v3435 = vor.u32 %v3431, %v3434
      %v3436 = vrot.slane %v3435, 4
      %v3438 = vshll.u32 %v3308, 16
      %v3440 = vrot.slane %v3438, 5
      %v3441 = vsel %vm3355, %v3436, %v3440
      %v3442 = vshrl.u32 %v3308, 16
      %v3444 = vrot.slane %v3442, 4
      %v3445 = vor.u32 %v3444, %v3440
      %v3446 = vrot.slane %v3445, 4
      %v3448 = vshll.u32 %v3309, 16
      %v3450 = vrot.slane %v3448, 5
      %v3451 = vsel %vm3355, %v3446, %v3450
      %v3453 = vshrl.u32 %v3310, 16
      %v3455 = vrot.slane %v3453, 4
      %v3456 = vshll.u32 %v3310, 16
      %v3458 = vrot.slane %v3456, 5
      %v3459 = vor.u32 %v3455, %v3458
      %v3460 = vrot.slane %v3459, 4
      %v3462 = vshll.u32 %v3311, 16
      %v3464 = vrot.slane %v3462, 5
      %v3465 = vsel %vm3355, %v3460, %v3464
      %v3466 = vshrl.u32 %v3311, 16
      %v3468 = vrot.slane %v3466, 4
      %v3469 = vor.u32 %v3468, %v3464
      %v3470 = vrot.slane %v3469, 4
      %v3472 = vshll.u32 %v3312, 16
      %v3474 = vrot.slane %v3472, 5
      %v3475 = vsel %vm3355, %v3470, %v3474
      %v3477 = vshrl.u32 %v3313, 16
      %v3479 = vrot.slane %v3477, 4
      %v3480 = vshll.u32 %v3313, 16
      %v3482 = vrot.slane %v3480, 5
      %v3483 = vor.u32 %v3479, %v3482
      %v3484 = vrot.slane %v3483, 4
      %v3486 = vshll.u32 %v3314, 16
      %v3488 = vrot.slane %v3486, 5
      %v3489 = vsel %vm3355, %v3484, %v3488
      %v3490 = vshrl.u32 %v3314, 16
      %v3492 = vrot.slane %v3490, 4
      %v3493 = vor.u32 %v3492, %v3488
      %v3494 = vrot.slane %v3493, 4
      %v3496 = vshll.u32 %v3315, 16
      %v3498 = vrot.slane %v3496, 5
      %v3499 = vsel %vm3355, %v3494, %v3498
      %v3501 = vshrl.u32 %v3316, 16
      %v3503 = vrot.slane %v3501, 4
      %v3504 = vshll.u32 %v3316, 16
      %v3506 = vrot.slane %v3504, 5
      %v3507 = vor.u32 %v3503, %v3506
      %v3508 = vrot.slane %v3507, 4
      %v3510 = vshll.u32 %v3317, 16
      %v3512 = vrot.slane %v3510, 5
      %v3513 = vsel %vm3355, %v3508, %v3512
      %v3514 = vshrl.u32 %v3317, 16
      %v3516 = vrot.slane %v3514, 4
      %v3517 = vor.u32 %v3516, %v3512
      %v3518 = vrot.slane %v3517, 4
      %v3520 = vshll.u32 %v3318, 16
      %v3522 = vrot.slane %v3520, 5
      %v3523 = vsel %vm3355, %v3518, %v3522
      %v3525 = vshrl.u32 %v3319, 16
      %v3527 = vrot.slane %v3525, 4
      %v3528 = vshll.u32 %v3319, 16
      %v3530 = vrot.slane %v3528, 5
      %v3531 = vor.u32 %v3527, %v3530
      %v3532 = vrot.slane %v3531, 4
      %v3534 = vshll.u32 %v3320, 16
      %v3536 = vrot.slane %v3534, 5
      %v3537 = vsel %vm3355, %v3532, %v3536
      %v3538 = vshrl.u32 %v3320, 16
      %v3540 = vrot.slane %v3538, 4
      %v3541 = vor.u32 %v3540, %v3536
      %v3542 = vrot.slane %v3541, 4
      %v3544 = vshll.u32 %v3321, 16
      %v3546 = vrot.slane %v3544, 5
      %v3547 = vsel %vm3355, %v3542, %v3546
      %v3549 = vshrl.u32 %v3322, 16
      %v3551 = vrot.slane %v3549, 4
      %v3552 = vshll.u32 %v3322, 16
      %v3554 = vrot.slane %v3552, 5
      %v3555 = vor.u32 %v3551, %v3554
      %v3556 = vrot.slane %v3555, 4
      %v3558 = vshll.u32 %v3323, 16
      %v3560 = vrot.slane %v3558, 5
      %v3561 = vsel %vm3355, %v3556, %v3560
      %v3562 = vshrl.u32 %v3323, 16
      %v3564 = vrot.slane %v3562, 4
      %v3565 = vor.u32 %v3564, %v3560
      %v3566 = vrot.slane %v3565, 4
      %v3568 = vshll.u32 %v3324, 16
      %v3570 = vrot.slane %v3568, 5
      %v3571 = vsel %vm3355, %v3566, %v3570
      %v3573 = vshrl.u32 %v3325, 16
      %v3575 = vrot.slane %v3573, 4
      %v3576 = vshll.u32 %v3325, 16
      %v3578 = vrot.slane %v3576, 5
      %v3579 = vor.u32 %v3575, %v3578
      %v3580 = vrot.slane %v3579, 4
      %v3582 = vshll.u32 %v3326, 16
      %v3584 = vrot.slane %v3582, 5
      %v3585 = vsel %vm3355, %v3580, %v3584
      %v3586 = vshrl.u32 %v3326, 16
      %v3588 = vrot.slane %v3586, 4
      %v3589 = vor.u32 %v3588, %v3584
      %v3590 = vrot.slane %v3589, 4
      %v3592 = vshll.u32 %v3327, 16
      %v3594 = vrot.slane %v3592, 5
      %v3595 = vsel %vm3355, %v3590, %v3594
      %v3597 = vshrl.u32 %v3328, 16
      %v3599 = vrot.slane %v3597, 4
      %v3600 = vshll.u32 %v3328, 16
      %v3602 = vrot.slane %v3600, 5
      %v3603 = vor.u32 %v3599, %v3602
      %v3604 = vrot.slane %v3603, 4
      %v3606 = vshll.u32 %v3329, 16
      %v3608 = vrot.slane %v3606, 5
      %v3609 = vsel %vm3355, %v3604, %v3608
      %v3610 = vshrl.u32 %v3329, 16
      %v3612 = vrot.slane %v3610, 4
      %v3613 = vor.u32 %v3612, %v3608
      %v3614 = vrot.slane %v3613, 4
      %v3616 = vshll.u32 %v3330, 16
      %v3618 = vrot.slane %v3616, 5
      %v3619 = vsel %vm3355, %v3614, %v3618
      %v3621 = vshrl.u32 %v3331, 16
      %v3623 = vrot.slane %v3621, 4
      %v3624 = vshll.u32 %v3331, 16
      %v3626 = vrot.slane %v3624, 5
      %v3627 = vor.u32 %v3623, %v3626
      %v3628 = vrot.slane %v3627, 4
      %v3630 = vshll.u32 %v3332, 16
      %v3632 = vrot.slane %v3630, 5
      %v3633 = vsel %vm3355, %v3628, %v3632
      %v3634 = vshrl.u32 %v3332, 16
      %v3636 = vrot.slane %v3634, 4
      %v3637 = vor.u32 %v3636, %v3632
      %v3638 = vrot.slane %v3637, 4
      %v3640 = vshll.u32 %v3333, 16
      %v3642 = vrot.slane %v3640, 5
      %v3643 = vsel %vm3355, %v3638, %v3642
      %v3645 = vshrl.u32 %v3334, 16
      %v3647 = vrot.slane %v3645, 4
      %v3648 = vshll.u32 %v3334, 16
      %v3650 = vrot.slane %v3648, 5
      %v3651 = vor.u32 %v3647, %v3650
      %v3652 = vrot.slane %v3651, 4
      %v3654 = vshll.u32 %v3335, 16
      %v3656 = vrot.slane %v3654, 5
      %v3657 = vsel %vm3355, %v3652, %v3656
      %v3658 = vshrl.u32 %v3335, 16
      %v3660 = vrot.slane %v3658, 4
      %v3661 = vor.u32 %v3660, %v3656
      %v3662 = vrot.slane %v3661, 4
      %v3664 = vshll.u32 %v3336, 16
      %v3666 = vrot.slane %v3664, 5
      %v3667 = vsel %vm3355, %v3662, %v3666
      %v3669 = vshrl.u32 %v3337, 16
      %v3671 = vrot.slane %v3669, 4
      %v3672 = vshll.u32 %v3337, 16
      %v3674 = vrot.slane %v3672, 5
      %v3675 = vor.u32 %v3671, %v3674
      %v3676 = vrot.slane %v3675, 4
      %v3678 = vshll.u32 %v3338, 16
      %v3680 = vrot.slane %v3678, 5
      %v3681 = vsel %vm3355, %v3676, %v3680
      %v3682 = vshrl.u32 %v3338, 16
      %v3684 = vrot.slane %v3682, 4
      %v3685 = vor.u32 %v3684, %v3680
      %v3686 = vrot.slane %v3685, 4
      %v3688 = vshll.u32 %v3339, 16
      %v3690 = vrot.slane %v3688, 5
      %v3691 = vsel %vm3355, %v3686, %v3690
      %v3693 = vshrl.u32 %v3340, 16
      %v3695 = vrot.slane %v3693, 4
      %v3696 = vshll.u32 %v3340, 16
      %v3698 = vrot.slane %v3696, 5
      %v3699 = vor.u32 %v3695, %v3698
      %v3700 = vrot.slane %v3699, 4
      %v3702 = vshll.u32 %v3341, 16
      %v3704 = vrot.slane %v3702, 5
      %v3705 = vsel %vm3355, %v3700, %v3704
      %v3706 = vshrl.u32 %v3341, 16
      %v3708 = vrot.slane %v3706, 4
      %v3709 = vor.u32 %v3708, %v3704
      %v3710 = vrot.slane %v3709, 4
      %v3712 = vshll.u32 %v3342, 16
      %v3714 = vrot.slane %v3712, 5
      %v3715 = vsel %vm3355, %v3710, %v3714
      %v3717 = vshrl.u32 %v3343, 16
      %v3719 = vrot.slane %v3717, 4
      %v3720 = vshll.u32 %v3343, 16
      %v3722 = vrot.slane %v3720, 5
      %v3723 = vor.u32 %v3719, %v3722
      %v3724 = vrot.slane %v3723, 4
      %v3726 = vshll.u32 %v3344, 16
      %v3728 = vrot.slane %v3726, 5
      %v3729 = vsel %vm3355, %v3724, %v3728
      %v3730 = vshrl.u32 %v3344, 16
      %v3732 = vrot.slane %v3730, 4
      %v3733 = vor.u32 %v3732, %v3728
      %v3734 = vrot.slane %v3733, 4
      %v3736 = vshll.u32 %v3345, 16
      %v3738 = vrot.slane %v3736, 5
      %v3739 = vsel %vm3355, %v3734, %v3738
      %s3740 = scalar_lea.vmem %s4, 4
      %v3741 = vld [vmem:[%s3740] sm:$0xf]
      %v3742 = vunpack.c.l.b16 %v3369
      %v3743 = vunpack.c.l.b16 %v3379
      %v3744 = vunpack.c.l.b16 %v3393
      %v3745 = vunpack.c.l.b16 %v3403
      %v3746 = vunpack.c.l.b16 %v3417
      %v3747 = vunpack.c.l.b16 %v3427
      %v3748 = vunpack.c.l.b16 %v3441
      %v3749 = vunpack.c.l.b16 %v3451
      %v3750 = vunpack.c.l.b16 %v3465
      %v3751 = vunpack.c.l.b16 %v3475
      %v3752 = vunpack.c.l.b16 %v3489
      %v3753 = vunpack.c.l.b16 %v3499
      %v3754 = vunpack.c.l.b16 %v3513
      %v3755 = vunpack.c.l.b16 %v3523
      %v3756 = vunpack.c.l.b16 %v3537
      %v3757 = vunpack.c.l.b16 %v3547
      %v3758 = vunpack.c.l.b16 %v3561
      %v3759 = vunpack.c.l.b16 %v3571
      %v3760 = vunpack.c.l.b16 %v3585
      %v3761 = vunpack.c.l.b16 %v3595
      %v3762 = vunpack.c.l.b16 %v3609
      %v3763 = vunpack.c.l.b16 %v3619
      %v3764 = vunpack.c.l.b16 %v3633
      %v3765 = vunpack.c.l.b16 %v3643
      %v3766 = vunpack.c.l.b16 %v3657
      %v3767 = vunpack.c.l.b16 %v3667
      %v3768 = vunpack.c.l.b16 %v3681
      %v3769 = vunpack.c.l.b16 %v3691
      %v3770 = vunpack.c.l.b16 %v3705
      %v3771 = vunpack.c.l.b16 %v3715
      %v3772 = vunpack.c.l.b16 %v3729
      %v3773 = vunpack.c.l.b16 %v3739
      %v3774 = vpack.c.b16 %v3743, %v3742
      %v3775 = vpack.c.b16 %v3745, %v3744
      %v3776 = vpack.c.b16 %v3747, %v3746
      %v3777 = vpack.c.b16 %v3749, %v3748
      %v3778 = vpack.c.b16 %v3751, %v3750
      %v3779 = vpack.c.b16 %v3753, %v3752
      %v3780 = vpack.c.b16 %v3755, %v3754
      %v3781 = vpack.c.b16 %v3757, %v3756
      %v3782 = vpack.c.b16 %v3759, %v3758
      %v3783 = vpack.c.b16 %v3761, %v3760
      %v3784 = vpack.c.b16 %v3763, %v3762
      %v3785 = vpack.c.b16 %v3765, %v3764
      %v3786 = vpack.c.b16 %v3767, %v3766
      %v3787 = vpack.c.b16 %v3769, %v3768
      %v3788 = vpack.c.b16 %v3771, %v3770
      %v3789 = vpack.c.b16 %v3773, %v3772
      %vm3790 = vcmask 64512
      %v3792 = vsel %vm3790, %v3774, 0
      %v3795 = vsel %vm3790, %v3775, 0
      %v3798 = vsel %vm3790, %v3776, 0
      %v3801 = vsel %vm3790, %v3777, 0
      %v3804 = vsel %vm3790, %v3778, 0
      %v3807 = vsel %vm3790, %v3779, 0
      %v3810 = vsel %vm3790, %v3780, 0
      %v3813 = vsel %vm3790, %v3781, 0
      %v3816 = vsel %vm3790, %v3782, 0
      %v3819 = vsel %vm3790, %v3783, 0
      %v3822 = vsel %vm3790, %v3784, 0
      %v3825 = vsel %vm3790, %v3785, 0
      %v3828 = vsel %vm3790, %v3786, 0
      %v3831 = vsel %vm3790, %v3787, 0
      %v3834 = vsel %vm3790, %v3788, 0
      %v3837 = vsel %vm3790, %v3789, 0
      %vm3839 = vcmask 1043456
      %v3841 = vsel %vm3839, %v3741, 0
      %3843 = vmatprep.subr.bf16.mxu0 0
      %3844 = vmatpush1.bf16.msra.mxu0 0
      %3845 = vmatprep.subr.bf16.mxu0 0
      %3846 = vmatpush1.bf16.msra.mxu0 0
      %3847 = vmatprep.subr.bf16.mxu0 0
      %3848 = vmatpush1.bf16.msra.mxu0 0
      %3849 = vmatprep.subr.bf16.mxu0 0
      %3850 = vmatpush1.bf16.msra.mxu0 0
      %3851 = vmatprep.subr.bf16.mxu0 0
      %3852 = vmatpush1.bf16.msra.mxu0 0
      %3853 = vmatprep.subr.bf16.mxu0 0
      %3854 = vmatpush1.bf16.msra.mxu0 0
      %3855 = vmatprep.subr.bf16.mxu0 0
      %3856 = vmatpush1.bf16.msra.mxu0 0
      %3857 = vmatprep.subr.bf16.mxu0 0
      %3858 = vmatpush1.bf16.msra.mxu0 %v3841
      %3859 = vmatprep.subr.bf16.mxu0 0
      %3860 = vmatpush2.bf16.msra.mxu0 0
      %3861 = vmatprep.subr.bf16.mxu0 0
      %3862 = vmatpush2.bf16.msra.mxu0 0
      %3863 = vmatprep.subr.bf16.mxu0 0
      %3864 = vmatpush2.bf16.msra.mxu0 0
      %3865 = vmatprep.subr.bf16.mxu0 0
      %3866 = vmatpush2.bf16.msra.mxu0 0
      %3867 = vmatprep.subr.bf16.mxu0 0
      %3868 = vmatpush2.bf16.msra.mxu0 0
      %3869 = vmatprep.subr.bf16.mxu0 0
      %3870 = vmatpush2.bf16.msra.mxu0 0
      %3871 = vmatprep.subr.bf16.mxu0 0
      %3872 = vmatpush2.bf16.msra.mxu0 0
      %3873 = vmatprep.subr.bf16.mxu0 0
      %3874 = vmatpush2.bf16.msra.mxu0 0
      %3875 = vmatprep.mubr.bf16.mxu0 0
      %3876 = vmatmul.mubr.bf16.gmra.mxu0 %v3792
      %v3877 = vpop.f32.mrf.mxu0
      %v3878 = vadd.f32 0.0, %v3877
      %v3879 = vpop.f32.mrf.mxu0
      %v3880 = vpop.f32.mrf.mxu0
      %v3881 = vadd.f32 0.0, %v3880
      %v3882 = vpop.f32.mrf.mxu0
      %3883 = vmatprep.mubr.bf16.mxu0 0
      %3884 = vmatmul.mubr.bf16.gmra.mxu0 %v3795
      %v3885 = vpop.f32.mrf.mxu0
      %v3886 = vadd.f32 0.0, %v3885
      %v3887 = vpop.f32.mrf.mxu0
      %v3888 = vpop.f32.mrf.mxu0
      %v3889 = vadd.f32 0.0, %v3888
      %v3890 = vpop.f32.mrf.mxu0
      %3891 = vmatprep.mubr.bf16.mxu0 0
      %3892 = vmatmul.mubr.bf16.gmra.mxu0 %v3798
      %v3893 = vpop.f32.mrf.mxu0
      %v3894 = vadd.f32 0.0, %v3893
      %v3895 = vpop.f32.mrf.mxu0
      %v3896 = vpop.f32.mrf.mxu0
      %v3897 = vadd.f32 0.0, %v3896
      %v3898 = vpop.f32.mrf.mxu0
      %3899 = vmatprep.mubr.bf16.mxu0 0
      %3900 = vmatmul.mubr.bf16.gmra.mxu0 %v3801
      %v3901 = vpop.f32.mrf.mxu0
      %v3902 = vadd.f32 0.0, %v3901
      %v3903 = vpop.f32.mrf.mxu0
      %v3904 = vpop.f32.mrf.mxu0
      %v3905 = vadd.f32 0.0, %v3904
      %v3906 = vpop.f32.mrf.mxu0
      %3907 = vmatprep.mubr.bf16.mxu0 0
      %3908 = vmatmul.mubr.bf16.gmra.mxu0 %v3804
      %v3909 = vpop.f32.mrf.mxu0
      %v3910 = vadd.f32 0.0, %v3909
      %v3911 = vpop.f32.mrf.mxu0
      %v3912 = vpop.f32.mrf.mxu0
      %v3913 = vadd.f32 0.0, %v3912
      %v3914 = vpop.f32.mrf.mxu0
      %3915 = vmatprep.mubr.bf16.mxu0 0
      %3916 = vmatmul.mubr.bf16.gmra.mxu0 %v3807
      %v3917 = vpop.f32.mrf.mxu0
      %v3918 = vadd.f32 0.0, %v3917
      %v3919 = vpop.f32.mrf.mxu0
      %v3920 = vpop.f32.mrf.mxu0
      %v3921 = vadd.f32 0.0, %v3920
      %v3922 = vpop.f32.mrf.mxu0
      %3923 = vmatprep.mubr.bf16.mxu0 0
      %3924 = vmatmul.mubr.bf16.gmra.mxu0 %v3810
      %v3925 = vpop.f32.mrf.mxu0
      %v3926 = vadd.f32 0.0, %v3925
      %v3927 = vpop.f32.mrf.mxu0
      %v3928 = vpop.f32.mrf.mxu0
      %v3929 = vadd.f32 0.0, %v3928
      %v3930 = vpop.f32.mrf.mxu0
      %3931 = vmatprep.mubr.bf16.mxu0 0
      %3932 = vmatmul.mubr.bf16.gmra.mxu0 %v3813
      %v3933 = vpop.f32.mrf.mxu0
      %v3934 = vadd.f32 0.0, %v3933
      %v3935 = vpop.f32.mrf.mxu0
      %v3936 = vpop.f32.mrf.mxu0
      %v3937 = vadd.f32 0.0, %v3936
      %v3938 = vpop.f32.mrf.mxu0
      %3939 = vmatprep.mubr.bf16.mxu0 0
      %3940 = vmatmul.mubr.bf16.gmra.mxu0 %v3816
      %v3941 = vpop.f32.mrf.mxu0
      %v3942 = vadd.f32 0.0, %v3941
      %v3943 = vpop.f32.mrf.mxu0
      %v3944 = vpop.f32.mrf.mxu0
      %v3945 = vadd.f32 0.0, %v3944
      %v3946 = vpop.f32.mrf.mxu0
      %3947 = vmatprep.mubr.bf16.mxu0 0
      %3948 = vmatmul.mubr.bf16.gmra.mxu0 %v3819
      %v3949 = vpop.f32.mrf.mxu0
      %v3950 = vadd.f32 0.0, %v3949
      %v3951 = vpop.f32.mrf.mxu0
      %v3952 = vpop.f32.mrf.mxu0
      %v3953 = vadd.f32 0.0, %v3952
      %v3954 = vpop.f32.mrf.mxu0
      %3955 = vmatprep.mubr.bf16.mxu0 0
      %3956 = vmatmul.mubr.bf16.gmra.mxu0 %v3822
      %v3957 = vpop.f32.mrf.mxu0
      %v3958 = vadd.f32 0.0, %v3957
      %v3959 = vpop.f32.mrf.mxu0
      %v3960 = vpop.f32.mrf.mxu0
      %v3961 = vadd.f32 0.0, %v3960
      %v3962 = vpop.f32.mrf.mxu0
      %3963 = vmatprep.mubr.bf16.mxu0 0
      %3964 = vmatmul.mubr.bf16.gmra.mxu0 %v3825
      %v3965 = vpop.f32.mrf.mxu0
      %v3966 = vadd.f32 0.0, %v3965
      %v3967 = vpop.f32.mrf.mxu0
      %v3968 = vpop.f32.mrf.mxu0
      %v3969 = vadd.f32 0.0, %v3968
      %v3970 = vpop.f32.mrf.mxu0
      %3971 = vmatprep.mubr.bf16.mxu0 0
      %3972 = vmatmul.mubr.bf16.gmra.mxu0 %v3828
      %v3973 = vpop.f32.mrf.mxu0
      %v3974 = vadd.f32 0.0, %v3973
      %v3975 = vpop.f32.mrf.mxu0
      %v3976 = vpop.f32.mrf.mxu0
      %v3977 = vadd.f32 0.0, %v3976
      %v3978 = vpop.f32.mrf.mxu0
      %3979 = vmatprep.mubr.bf16.mxu0 0
      %3980 = vmatmul.mubr.bf16.gmra.mxu0 %v3831
      %v3981 = vpop.f32.mrf.mxu0
      %v3982 = vadd.f32 0.0, %v3981
      %v3983 = vpop.f32.mrf.mxu0
      %v3984 = vpop.f32.mrf.mxu0
      %v3985 = vadd.f32 0.0, %v3984
      %v3986 = vpop.f32.mrf.mxu0
      %3987 = vmatprep.mubr.bf16.mxu0 0
      %3988 = vmatmul.mubr.bf16.gmra.mxu0 %v3834
      %v3989 = vpop.f32.mrf.mxu0
      %v3990 = vadd.f32 0.0, %v3989
      %v3991 = vpop.f32.mrf.mxu0
      %v3992 = vpop.f32.mrf.mxu0
      %v3993 = vadd.f32 0.0, %v3992
      %v3994 = vpop.f32.mrf.mxu0
      %3995 = vmatprep.mubr.bf16.mxu0 0
      %3996 = vmatmul.mubr.bf16.gmra.mxu0 %v3837
      %v3997 = vpop.f32.mrf.mxu0
      %v3998 = vadd.f32 0.0, %v3997
      %v3999 = vpop.f32.mrf.mxu0
      %v4000 = vpop.f32.mrf.mxu0
      %v4001 = vadd.f32 0.0, %v4000
      %v4002 = vpop.f32.mrf.mxu0
      %4003 = vdwg.mxu0
      %v4036 = vunpack.c.l.b16 %v3298
      %v4037 = vunpack.c.l.b16 %v3299
      %v4038 = vunpack.c.l.b16 %v3301
      %v4039 = vunpack.c.l.b16 %v3302
      %v4040 = vunpack.c.l.b16 %v3304
      %v4041 = vunpack.c.l.b16 %v3305
      %v4042 = vunpack.c.l.b16 %v3307
      %v4043 = vunpack.c.l.b16 %v3308
      %v4044 = vunpack.c.l.b16 %v3310
      %v4045 = vunpack.c.l.b16 %v3311
      %v4046 = vunpack.c.l.b16 %v3313
      %v4047 = vunpack.c.l.b16 %v3314
      %v4048 = vunpack.c.l.b16 %v3316
      %v4049 = vunpack.c.l.b16 %v3317
      %v4050 = vunpack.c.l.b16 %v3319
      %v4051 = vunpack.c.l.b16 %v3320
      %v4052 = vunpack.c.l.b16 %v3322
      %v4053 = vunpack.c.l.b16 %v3323
      %v4054 = vunpack.c.l.b16 %v3325
      %v4055 = vunpack.c.l.b16 %v3326
      %v4056 = vunpack.c.l.b16 %v3328
      %v4057 = vunpack.c.l.b16 %v3329
      %v4058 = vunpack.c.l.b16 %v3331
      %v4059 = vunpack.c.l.b16 %v3332
      %v4060 = vunpack.c.l.b16 %v3334
      %v4061 = vunpack.c.l.b16 %v3335
      %v4062 = vunpack.c.l.b16 %v3337
      %v4063 = vunpack.c.l.b16 %v3338
      %v4064 = vunpack.c.l.b16 %v3340
      %v4065 = vunpack.c.l.b16 %v3341
      %v4066 = vunpack.c.l.b16 %v3343
      %v4067 = vunpack.c.l.b16 %v3344
      %v4068 = vpack.c.b16 %v4037, %v4036
      %v4069 = vpack.c.b16 %v4039, %v4038
      %v4070 = vpack.c.b16 %v4041, %v4040
      %v4071 = vpack.c.b16 %v4043, %v4042
      %v4072 = vpack.c.b16 %v4045, %v4044
      %v4073 = vpack.c.b16 %v4047, %v4046
      %v4074 = vpack.c.b16 %v4049, %v4048
      %v4075 = vpack.c.b16 %v4051, %v4050
      %v4076 = vpack.c.b16 %v4053, %v4052
      %v4077 = vpack.c.b16 %v4055, %v4054
      %v4078 = vpack.c.b16 %v4057, %v4056
      %v4079 = vpack.c.b16 %v4059, %v4058
      %v4080 = vpack.c.b16 %v4061, %v4060
      %v4081 = vpack.c.b16 %v4063, %v4062
      %v4082 = vpack.c.b16 %v4065, %v4064
      %v4083 = vpack.c.b16 %v4067, %v4066
      %v4085 = vsel %vm3790, %v4068, 0
      %v4088 = vsel %vm3790, %v4069, 0
      %v4091 = vsel %vm3790, %v4070, 0
      %v4094 = vsel %vm3790, %v4071, 0
      %v4097 = vsel %vm3790, %v4072, 0
      %v4100 = vsel %vm3790, %v4073, 0
      %v4103 = vsel %vm3790, %v4074, 0
      %v4106 = vsel %vm3790, %v4075, 0
      %v4109 = vsel %vm3790, %v4076, 0
      %v4112 = vsel %vm3790, %v4077, 0
      %v4115 = vsel %vm3790, %v4078, 0
      %v4118 = vsel %vm3790, %v4079, 0
      %v4121 = vsel %vm3790, %v4080, 0
      %v4124 = vsel %vm3790, %v4081, 0
      %v4127 = vsel %vm3790, %v4082, 0
      %v4130 = vsel %vm3790, %v4083, 0
      %v4133 = vsel %vm3839, %v3352, 0
      %4135 = vmatprep.subr.bf16.mxu0 0
      %4136 = vmatpush1.bf16.msra.mxu0 0
      %4137 = vmatprep.subr.bf16.mxu0 0
      %4138 = vmatpush1.bf16.msra.mxu0 0
      %4139 = vmatprep.subr.bf16.mxu0 0
      %4140 = vmatpush1.bf16.msra.mxu0 0
      %4141 = vmatprep.subr.bf16.mxu0 0
      %4142 = vmatpush1.bf16.msra.mxu0 0
      %4143 = vmatprep.subr.bf16.mxu0 0
      %4144 = vmatpush1.bf16.msra.mxu0 0
      %4145 = vmatprep.subr.bf16.mxu0 0
      %4146 = vmatpush1.bf16.msra.mxu0 0
      %4147 = vmatprep.subr.bf16.mxu0 0
      %4148 = vmatpush1.bf16.msra.mxu0 0
      %4149 = vmatprep.subr.bf16.mxu0 0
      %4150 = vmatpush1.bf16.msra.mxu0 %v4133
      %4151 = vmatprep.subr.bf16.mxu0 0
      %4152 = vmatpush2.bf16.msra.mxu0 0
      %4153 = vmatprep.subr.bf16.mxu0 0
      %4154 = vmatpush2.bf16.msra.mxu0 0
      %4155 = vmatprep.subr.bf16.mxu0 0
      %4156 = vmatpush2.bf16.msra.mxu0 0
      %4157 = vmatprep.subr.bf16.mxu0 0
      %4158 = vmatpush2.bf16.msra.mxu0 0
      %4159 = vmatprep.subr.bf16.mxu0 0
      %4160 = vmatpush2.bf16.msra.mxu0 0
      %4161 = vmatprep.subr.bf16.mxu0 0
      %4162 = vmatpush2.bf16.msra.mxu0 0
      %4163 = vmatprep.subr.bf16.mxu0 0
      %4164 = vmatpush2.bf16.msra.mxu0 0
      %4165 = vmatprep.subr.bf16.mxu0 0
      %4166 = vmatpush2.bf16.msra.mxu0 0
      %4167 = vmatprep.mubr.bf16.mxu0 0
      %4168 = vmatmul.mubr.bf16.gmra.mxu0 %v4085
      %v4169 = vpop.f32.mrf.mxu0
      %v4170 = vadd.f32 %v3878, %v4169
      %v4171 = vpop.f32.mrf.mxu0
      %v4172 = vpop.f32.mrf.mxu0
      %v4173 = vadd.f32 %v3881, %v4172
      %v4174 = vpop.f32.mrf.mxu0
      %4175 = vmatprep.mubr.bf16.mxu0 0
      %4176 = vmatmul.mubr.bf16.gmra.mxu0 %v4088
      %v4177 = vpop.f32.mrf.mxu0
      %v4178 = vadd.f32 %v3886, %v4177
      %v4179 = vpop.f32.mrf.mxu0
      %v4180 = vpop.f32.mrf.mxu0
      %v4181 = vadd.f32 %v3889, %v4180
      %v4182 = vpop.f32.mrf.mxu0
      %4183 = vmatprep.mubr.bf16.mxu0 0
      %4184 = vmatmul.mubr.bf16.gmra.mxu0 %v4091
      %v4185 = vpop.f32.mrf.mxu0
      %v4186 = vadd.f32 %v3894, %v4185
      %v4187 = vpop.f32.mrf.mxu0
      %v4188 = vpop.f32.mrf.mxu0
      %v4189 = vadd.f32 %v3897, %v4188
      %v4190 = vpop.f32.mrf.mxu0
      %4191 = vmatprep.mubr.bf16.mxu0 0
      %4192 = vmatmul.mubr.bf16.gmra.mxu0 %v4094
      %v4193 = vpop.f32.mrf.mxu0
      %v4194 = vadd.f32 %v3902, %v4193
      %v4195 = vpop.f32.mrf.mxu0
      %v4196 = vpop.f32.mrf.mxu0
      %v4197 = vadd.f32 %v3905, %v4196
      %v4198 = vpop.f32.mrf.mxu0
      %4199 = vmatprep.mubr.bf16.mxu0 0
      %4200 = vmatmul.mubr.bf16.gmra.mxu0 %v4097
      %v4201 = vpop.f32.mrf.mxu0
      %v4202 = vadd.f32 %v3910, %v4201
      %v4203 = vpop.f32.mrf.mxu0
      %v4204 = vpop.f32.mrf.mxu0
      %v4205 = vadd.f32 %v3913, %v4204
      %v4206 = vpop.f32.mrf.mxu0
      %4207 = vmatprep.mubr.bf16.mxu0 0
      %4208 = vmatmul.mubr.bf16.gmra.mxu0 %v4100
      %v4209 = vpop.f32.mrf.mxu0
      %v4210 = vadd.f32 %v3918, %v4209
      %v4211 = vpop.f32.mrf.mxu0
      %v4212 = vpop.f32.mrf.mxu0
      %v4213 = vadd.f32 %v3921, %v4212
      %v4214 = vpop.f32.mrf.mxu0
      %4215 = vmatprep.mubr.bf16.mxu0 0
      %4216 = vmatmul.mubr.bf16.gmra.mxu0 %v4103
      %v4217 = vpop.f32.mrf.mxu0
      %v4218 = vadd.f32 %v3926, %v4217
      %v4219 = vpop.f32.mrf.mxu0
      %v4220 = vpop.f32.mrf.mxu0
      %v4221 = vadd.f32 %v3929, %v4220
      %v4222 = vpop.f32.mrf.mxu0
      %4223 = vmatprep.mubr.bf16.mxu0 0
      %4224 = vmatmul.mubr.bf16.gmra.mxu0 %v4106
      %v4225 = vpop.f32.mrf.mxu0
      %v4226 = vadd.f32 %v3934, %v4225
      %v4227 = vpop.f32.mrf.mxu0
      %v4228 = vpop.f32.mrf.mxu0
      %v4229 = vadd.f32 %v3937, %v4228
      %v4230 = vpop.f32.mrf.mxu0
      %4231 = vmatprep.mubr.bf16.mxu0 0
      %4232 = vmatmul.mubr.bf16.gmra.mxu0 %v4109
      %v4233 = vpop.f32.mrf.mxu0
      %v4234 = vadd.f32 %v3942, %v4233
      %v4235 = vpop.f32.mrf.mxu0
      %v4236 = vpop.f32.mrf.mxu0
      %v4237 = vadd.f32 %v3945, %v4236
      %v4238 = vpop.f32.mrf.mxu0
      %4239 = vmatprep.mubr.bf16.mxu0 0
      %4240 = vmatmul.mubr.bf16.gmra.mxu0 %v4112
      %v4241 = vpop.f32.mrf.mxu0
      %v4242 = vadd.f32 %v3950, %v4241
      %v4243 = vpop.f32.mrf.mxu0
      %v4244 = vpop.f32.mrf.mxu0
      %v4245 = vadd.f32 %v3953, %v4244
      %v4246 = vpop.f32.mrf.mxu0
      %4247 = vmatprep.mubr.bf16.mxu0 0
      %4248 = vmatmul.mubr.bf16.gmra.mxu0 %v4115
      %v4249 = vpop.f32.mrf.mxu0
      %v4250 = vadd.f32 %v3958, %v4249
      %v4251 = vpop.f32.mrf.mxu0
      %v4252 = vpop.f32.mrf.mxu0
      %v4253 = vadd.f32 %v3961, %v4252
      %v4254 = vpop.f32.mrf.mxu0
      %4255 = vmatprep.mubr.bf16.mxu0 0
      %4256 = vmatmul.mubr.bf16.gmra.mxu0 %v4118
      %v4257 = vpop.f32.mrf.mxu0
      %v4258 = vadd.f32 %v3966, %v4257
      %v4259 = vpop.f32.mrf.mxu0
      %v4260 = vpop.f32.mrf.mxu0
      %v4261 = vadd.f32 %v3969, %v4260
      %v4262 = vpop.f32.mrf.mxu0
      %4263 = vmatprep.mubr.bf16.mxu0 0
      %4264 = vmatmul.mubr.bf16.gmra.mxu0 %v4121
      %v4265 = vpop.f32.mrf.mxu0
      %v4266 = vadd.f32 %v3974, %v4265
      %v4267 = vpop.f32.mrf.mxu0
      %v4268 = vpop.f32.mrf.mxu0
      %v4269 = vadd.f32 %v3977, %v4268
      %v4270 = vpop.f32.mrf.mxu0
      %4271 = vmatprep.mubr.bf16.mxu0 0
      %4272 = vmatmul.mubr.bf16.gmra.mxu0 %v4124
      %v4273 = vpop.f32.mrf.mxu0
      %v4274 = vadd.f32 %v3982, %v4273
      %v4275 = vpop.f32.mrf.mxu0
      %v4276 = vpop.f32.mrf.mxu0
      %v4277 = vadd.f32 %v3985, %v4276
      %v4278 = vpop.f32.mrf.mxu0
      %4279 = vmatprep.mubr.bf16.mxu0 0
      %4280 = vmatmul.mubr.bf16.gmra.mxu0 %v4127
      %v4281 = vpop.f32.mrf.mxu0
      %v4282 = vadd.f32 %v3990, %v4281
      %v4283 = vpop.f32.mrf.mxu0
      %v4284 = vpop.f32.mrf.mxu0
      %v4285 = vadd.f32 %v3993, %v4284
      %v4286 = vpop.f32.mrf.mxu0
      %4287 = vmatprep.mubr.bf16.mxu0 0
      %4288 = vmatmul.mubr.bf16.gmra.mxu0 %v4130
      %v4289 = vpop.f32.mrf.mxu0
      %v4290 = vadd.f32 %v3998, %v4289
      %v4291 = vpop.f32.mrf.mxu0
      %v4292 = vpop.f32.mrf.mxu0
      %v4293 = vadd.f32 %v4001, %v4292
      %v4294 = vpop.f32.mrf.mxu0
      %4295 = vdwg.mxu0
      %vm4312 = vcmask 1042432
      %vm4313 = vcmask 1046532
      %vm4314 = vmor %vm4312, %vm4313
      %v4315 = vrot.slane %v3298, 5
      %v4316 = vrot.slane %v4315, 4
      %v4317 = vrot.slane %v3299, 5
      %v4318 = vsel %vm4314, %v4316, %v4317
      %v4319 = vrot.slane %v4317, 4
      %v4320 = vrot.slane %v3300, 5
      %v4321 = vsel %vm4314, %v4319, %v4320
      %v4322 = vrot.slane %v3301, 5
      %v4323 = vrot.slane %v4322, 4
      %v4324 = vrot.slane %v3302, 5
      %v4325 = vsel %vm4314, %v4323, %v4324
      %v4326 = vrot.slane %v4324, 4
      %v4327 = vrot.slane %v3303, 5
      %v4328 = vsel %vm4314, %v4326, %v4327
      %v4329 = vrot.slane %v3304, 5
      %v4330 = vrot.slane %v4329, 4
      %v4331 = vrot.slane %v3305, 5
      %v4332 = vsel %vm4314, %v4330, %v4331
      %v4333 = vrot.slane %v4331, 4
      %v4334 = vrot.slane %v3306, 5
      %v4335 = vsel %vm4314, %v4333, %v4334
      %v4336 = vrot.slane %v3307, 5
      %v4337 = vrot.slane %v4336, 4
      %v4338 = vrot.slane %v3308, 5
      %v4339 = vsel %vm4314, %v4337, %v4338
      %v4340 = vrot.slane %v4338, 4
      %v4341 = vrot.slane %v3309, 5
      %v4342 = vsel %vm4314, %v4340, %v4341
      %v4343 = vrot.slane %v3310, 5
      %v4344 = vrot.slane %v4343, 4
      %v4345 = vrot.slane %v3311, 5
      %v4346 = vsel %vm4314, %v4344, %v4345
      %v4347 = vrot.slane %v4345, 4
      %v4348 = vrot.slane %v3312, 5
      %v4349 = vsel %vm4314, %v4347, %v4348
      %v4350 = vrot.slane %v3313, 5
      %v4351 = vrot.slane %v4350, 4
      %v4352 = vrot.slane %v3314, 5
      %v4353 = vsel %vm4314, %v4351, %v4352
      %v4354 = vrot.slane %v4352, 4
      %v4355 = vrot.slane %v3315, 5
      %v4356 = vsel %vm4314, %v4354, %v4355
      %v4357 = vrot.slane %v3316, 5
      %v4358 = vrot.slane %v4357, 4
      %v4359 = vrot.slane %v3317, 5
      %v4360 = vsel %vm4314, %v4358, %v4359
      %v4361 = vrot.slane %v4359, 4
      %v4362 = vrot.slane %v3318, 5
      %v4363 = vsel %vm4314, %v4361, %v4362
      %v4364 = vrot.slane %v3319, 5
      %v4365 = vrot.slane %v4364, 4
      %v4366 = vrot.slane %v3320, 5
      %v4367 = vsel %vm4314, %v4365, %v4366
      %v4368 = vrot.slane %v4366, 4
      %v4369 = vrot.slane %v3321, 5
      %v4370 = vsel %vm4314, %v4368, %v4369
      %v4371 = vrot.slane %v3322, 5
      %v4372 = vrot.slane %v4371, 4
      %v4373 = vrot.slane %v3323, 5
      %v4374 = vsel %vm4314, %v4372, %v4373
      %v4375 = vrot.slane %v4373, 4
      %v4376 = vrot.slane %v3324, 5
      %v4377 = vsel %vm4314, %v4375, %v4376
      %v4378 = vrot.slane %v3325, 5
      %v4379 = vrot.slane %v4378, 4
      %v4380 = vrot.slane %v3326, 5
      %v4381 = vsel %vm4314, %v4379, %v4380
      %v4382 = vrot.slane %v4380, 4
      %v4383 = vrot.slane %v3327, 5
      %v4384 = vsel %vm4314, %v4382, %v4383
      %v4385 = vrot.slane %v3328, 5
      %v4386 = vrot.slane %v4385, 4
      %v4387 = vrot.slane %v3329, 5
      %v4388 = vsel %vm4314, %v4386, %v4387
      %v4389 = vrot.slane %v4387, 4
      %v4390 = vrot.slane %v3330, 5
      %v4391 = vsel %vm4314, %v4389, %v4390
      %v4392 = vrot.slane %v3331, 5
      %v4393 = vrot.slane %v4392, 4
      %v4394 = vrot.slane %v3332, 5
      %v4395 = vsel %vm4314, %v4393, %v4394
      %v4396 = vrot.slane %v4394, 4
      %v4397 = vrot.slane %v3333, 5
      %v4398 = vsel %vm4314, %v4396, %v4397
      %v4399 = vrot.slane %v3334, 5
      %v4400 = vrot.slane %v4399, 4
      %v4401 = vrot.slane %v3335, 5
      %v4402 = vsel %vm4314, %v4400, %v4401
      %v4403 = vrot.slane %v4401, 4
      %v4404 = vrot.slane %v3336, 5
      %v4405 = vsel %vm4314, %v4403, %v4404
      %v4406 = vrot.slane %v3337, 5
      %v4407 = vrot.slane %v4406, 4
      %v4408 = vrot.slane %v3338, 5
      %v4409 = vsel %vm4314, %v4407, %v4408
      %v4410 = vrot.slane %v4408, 4
      %v4411 = vrot.slane %v3339, 5
      %v4412 = vsel %vm4314, %v4410, %v4411
      %v4413 = vrot.slane %v3340, 5
      %v4414 = vrot.slane %v4413, 4
      %v4415 = vrot.slane %v3341, 5
      %v4416 = vsel %vm4314, %v4414, %v4415
      %v4417 = vrot.slane %v4415, 4
      %v4418 = vrot.slane %v3342, 5
      %v4419 = vsel %vm4314, %v4417, %v4418
      %v4420 = vrot.slane %v3343, 5
      %v4421 = vrot.slane %v4420, 4
      %v4422 = vrot.slane %v3344, 5
      %v4423 = vsel %vm4314, %v4421, %v4422
      %v4424 = vrot.slane %v4422, 4
      %v4425 = vrot.slane %v3345, 5
      %v4426 = vsel %vm4314, %v4424, %v4425
      %s4427 = scalar_lea.vmem %s4, 8
      %v4428 = vld [vmem:[%s4427] sm:$0xf]
      %v4429 = vunpack.c.l.b16 %v4318
      %v4430 = vunpack.c.l.b16 %v4321
      %v4431 = vunpack.c.l.b16 %v4325
      %v4432 = vunpack.c.l.b16 %v4328
      %v4433 = vunpack.c.l.b16 %v4332
      %v4434 = vunpack.c.l.b16 %v4335
      %v4435 = vunpack.c.l.b16 %v4339
      %v4436 = vunpack.c.l.b16 %v4342
      %v4437 = vunpack.c.l.b16 %v4346
      %v4438 = vunpack.c.l.b16 %v4349
      %v4439 = vunpack.c.l.b16 %v4353
      %v4440 = vunpack.c.l.b16 %v4356
      %v4441 = vunpack.c.l.b16 %v4360
      %v4442 = vunpack.c.l.b16 %v4363
      %v4443 = vunpack.c.l.b16 %v4367
      %v4444 = vunpack.c.l.b16 %v4370
      %v4445 = vunpack.c.l.b16 %v4374
      %v4446 = vunpack.c.l.b16 %v4377
      %v4447 = vunpack.c.l.b16 %v4381
      %v4448 = vunpack.c.l.b16 %v4384
      %v4449 = vunpack.c.l.b16 %v4388
      %v4450 = vunpack.c.l.b16 %v4391
      %v4451 = vunpack.c.l.b16 %v4395
      %v4452 = vunpack.c.l.b16 %v4398
      %v4453 = vunpack.c.l.b16 %v4402
      %v4454 = vunpack.c.l.b16 %v4405
      %v4455 = vunpack.c.l.b16 %v4409
      %v4456 = vunpack.c.l.b16 %v4412
      %v4457 = vunpack.c.l.b16 %v4416
      %v4458 = vunpack.c.l.b16 %v4419
      %v4459 = vunpack.c.l.b16 %v4423
      %v4460 = vunpack.c.l.b16 %v4426
      %v4461 = vpack.c.b16 %v4430, %v4429
      %v4462 = vpack.c.b16 %v4432, %v4431
      %v4463 = vpack.c.b16 %v4434, %v4433
      %v4464 = vpack.c.b16 %v4436, %v4435
      %v4465 = vpack.c.b16 %v4438, %v4437
      %v4466 = vpack.c.b16 %v4440, %v4439
      %v4467 = vpack.c.b16 %v4442, %v4441
      %v4468 = vpack.c.b16 %v4444, %v4443
      %v4469 = vpack.c.b16 %v4446, %v4445
      %v4470 = vpack.c.b16 %v4448, %v4447
      %v4471 = vpack.c.b16 %v4450, %v4449
      %v4472 = vpack.c.b16 %v4452, %v4451
      %v4473 = vpack.c.b16 %v4454, %v4453
      %v4474 = vpack.c.b16 %v4456, %v4455
      %v4475 = vpack.c.b16 %v4458, %v4457
      %v4476 = vpack.c.b16 %v4460, %v4459
      %v4478 = vsel %vm3790, %v4461, 0
      %v4481 = vsel %vm3790, %v4462, 0
      %v4484 = vsel %vm3790, %v4463, 0
      %v4487 = vsel %vm3790, %v4464, 0
      %v4490 = vsel %vm3790, %v4465, 0
      %v4493 = vsel %vm3790, %v4466, 0
      %v4496 = vsel %vm3790, %v4467, 0
      %v4499 = vsel %vm3790, %v4468, 0
      %v4502 = vsel %vm3790, %v4469, 0
      %v4505 = vsel %vm3790, %v4470, 0
      %v4508 = vsel %vm3790, %v4471, 0
      %v4511 = vsel %vm3790, %v4472, 0
      %v4514 = vsel %vm3790, %v4473, 0
      %v4517 = vsel %vm3790, %v4474, 0
      %v4520 = vsel %vm3790, %v4475, 0
      %v4523 = vsel %vm3790, %v4476, 0
      %v4526 = vsel %vm3839, %v4428, 0
      %4528 = vmatprep.subr.bf16.mxu0 0
      %4529 = vmatpush1.bf16.msra.mxu0 0
      %4530 = vmatprep.subr.bf16.mxu0 0
      %4531 = vmatpush1.bf16.msra.mxu0 0
      %4532 = vmatprep.subr.bf16.mxu0 0
      %4533 = vmatpush1.bf16.msra.mxu0 0
      %4534 = vmatprep.subr.bf16.mxu0 0
      %4535 = vmatpush1.bf16.msra.mxu0 0
      %4536 = vmatprep.subr.bf16.mxu0 0
      %4537 = vmatpush1.bf16.msra.mxu0 0
      %4538 = vmatprep.subr.bf16.mxu0 0
      %4539 = vmatpush1.bf16.msra.mxu0 0
      %4540 = vmatprep.subr.bf16.mxu0 0
      %4541 = vmatpush1.bf16.msra.mxu0 0
      %4542 = vmatprep.subr.bf16.mxu0 0
      %4543 = vmatpush1.bf16.msra.mxu0 %v4526
      %4544 = vmatprep.subr.bf16.mxu0 0
      %4545 = vmatpush2.bf16.msra.mxu0 0
      %4546 = vmatprep.subr.bf16.mxu0 0
      %4547 = vmatpush2.bf16.msra.mxu0 0
      %4548 = vmatprep.subr.bf16.mxu0 0
      %4549 = vmatpush2.bf16.msra.mxu0 0
      %4550 = vmatprep.subr.bf16.mxu0 0
      %4551 = vmatpush2.bf16.msra.mxu0 0
      %4552 = vmatprep.subr.bf16.mxu0 0
      %4553 = vmatpush2.bf16.msra.mxu0 0
      %4554 = vmatprep.subr.bf16.mxu0 0
      %4555 = vmatpush2.bf16.msra.mxu0 0
      %4556 = vmatprep.subr.bf16.mxu0 0
      %4557 = vmatpush2.bf16.msra.mxu0 0
      %4558 = vmatprep.subr.bf16.mxu0 0
      %4559 = vmatpush2.bf16.msra.mxu0 0
      %4560 = vmatprep.mubr.bf16.mxu0 0
      %4561 = vmatmul.mubr.bf16.gmra.mxu0 %v4478
      %v4562 = vpop.f32.mrf.mxu0
      %v4563 = vadd.f32 0.0, %v4562
      %v4564 = vpop.f32.mrf.mxu0
      %v4565 = vpop.f32.mrf.mxu0
      %v4566 = vadd.f32 0.0, %v4565
      %v4567 = vpop.f32.mrf.mxu0
      %4568 = vmatprep.mubr.bf16.mxu0 0
      %4569 = vmatmul.mubr.bf16.gmra.mxu0 %v4481
      %v4570 = vpop.f32.mrf.mxu0
      %v4571 = vadd.f32 0.0, %v4570
      %v4572 = vpop.f32.mrf.mxu0
      %v4573 = vpop.f32.mrf.mxu0
      %v4574 = vadd.f32 0.0, %v4573
      %v4575 = vpop.f32.mrf.mxu0
      %4576 = vmatprep.mubr.bf16.mxu0 0
      %4577 = vmatmul.mubr.bf16.gmra.mxu0 %v4484
      %v4578 = vpop.f32.mrf.mxu0
      %v4579 = vadd.f32 0.0, %v4578
      %v4580 = vpop.f32.mrf.mxu0
      %v4581 = vpop.f32.mrf.mxu0
      %v4582 = vadd.f32 0.0, %v4581
      %v4583 = vpop.f32.mrf.mxu0
      %4584 = vmatprep.mubr.bf16.mxu0 0
      %4585 = vmatmul.mubr.bf16.gmra.mxu0 %v4487
      %v4586 = vpop.f32.mrf.mxu0
      %v4587 = vadd.f32 0.0, %v4586
      %v4588 = vpop.f32.mrf.mxu0
      %v4589 = vpop.f32.mrf.mxu0
      %v4590 = vadd.f32 0.0, %v4589
      %v4591 = vpop.f32.mrf.mxu0
      %4592 = vmatprep.mubr.bf16.mxu0 0
      %4593 = vmatmul.mubr.bf16.gmra.mxu0 %v4490
      %v4594 = vpop.f32.mrf.mxu0
      %v4595 = vadd.f32 0.0, %v4594
      %v4596 = vpop.f32.mrf.mxu0
      %v4597 = vpop.f32.mrf.mxu0
      %v4598 = vadd.f32 0.0, %v4597
      %v4599 = vpop.f32.mrf.mxu0
      %4600 = vmatprep.mubr.bf16.mxu0 0
      %4601 = vmatmul.mubr.bf16.gmra.mxu0 %v4493
      %v4602 = vpop.f32.mrf.mxu0
      %v4603 = vadd.f32 0.0, %v4602
      %v4604 = vpop.f32.mrf.mxu0
      %v4605 = vpop.f32.mrf.mxu0
      %v4606 = vadd.f32 0.0, %v4605
      %v4607 = vpop.f32.mrf.mxu0
      %4608 = vmatprep.mubr.bf16.mxu0 0
      %4609 = vmatmul.mubr.bf16.gmra.mxu0 %v4496
      %v4610 = vpop.f32.mrf.mxu0
      %v4611 = vadd.f32 0.0, %v4610
      %v4612 = vpop.f32.mrf.mxu0
      %v4613 = vpop.f32.mrf.mxu0
      %v4614 = vadd.f32 0.0, %v4613
      %v4615 = vpop.f32.mrf.mxu0
      %4616 = vmatprep.mubr.bf16.mxu0 0
      %4617 = vmatmul.mubr.bf16.gmra.mxu0 %v4499
      %v4618 = vpop.f32.mrf.mxu0
      %v4619 = vadd.f32 0.0, %v4618
      %v4620 = vpop.f32.mrf.mxu0
      %v4621 = vpop.f32.mrf.mxu0
      %v4622 = vadd.f32 0.0, %v4621
      %v4623 = vpop.f32.mrf.mxu0
      %4624 = vmatprep.mubr.bf16.mxu0 0
      %4625 = vmatmul.mubr.bf16.gmra.mxu0 %v4502
      %v4626 = vpop.f32.mrf.mxu0
      %v4627 = vadd.f32 0.0, %v4626
      %v4628 = vpop.f32.mrf.mxu0
      %v4629 = vpop.f32.mrf.mxu0
      %v4630 = vadd.f32 0.0, %v4629
      %v4631 = vpop.f32.mrf.mxu0
      %4632 = vmatprep.mubr.bf16.mxu0 0
      %4633 = vmatmul.mubr.bf16.gmra.mxu0 %v4505
      %v4634 = vpop.f32.mrf.mxu0
      %v4635 = vadd.f32 0.0, %v4634
      %v4636 = vpop.f32.mrf.mxu0
      %v4637 = vpop.f32.mrf.mxu0
      %v4638 = vadd.f32 0.0, %v4637
      %v4639 = vpop.f32.mrf.mxu0
      %4640 = vmatprep.mubr.bf16.mxu0 0
      %4641 = vmatmul.mubr.bf16.gmra.mxu0 %v4508
      %v4642 = vpop.f32.mrf.mxu0
      %v4643 = vadd.f32 0.0, %v4642
      %v4644 = vpop.f32.mrf.mxu0
      %v4645 = vpop.f32.mrf.mxu0
      %v4646 = vadd.f32 0.0, %v4645
      %v4647 = vpop.f32.mrf.mxu0
      %4648 = vmatprep.mubr.bf16.mxu0 0
      %4649 = vmatmul.mubr.bf16.gmra.mxu0 %v4511
      %v4650 = vpop.f32.mrf.mxu0
      %v4651 = vadd.f32 0.0, %v4650
      %v4652 = vpop.f32.mrf.mxu0
      %v4653 = vpop.f32.mrf.mxu0
      %v4654 = vadd.f32 0.0, %v4653
      %v4655 = vpop.f32.mrf.mxu0
      %4656 = vmatprep.mubr.bf16.mxu0 0
      %4657 = vmatmul.mubr.bf16.gmra.mxu0 %v4514
      %v4658 = vpop.f32.mrf.mxu0
      %v4659 = vadd.f32 0.0, %v4658
      %v4660 = vpop.f32.mrf.mxu0
      %v4661 = vpop.f32.mrf.mxu0
      %v4662 = vadd.f32 0.0, %v4661
      %v4663 = vpop.f32.mrf.mxu0
      %4664 = vmatprep.mubr.bf16.mxu0 0
      %4665 = vmatmul.mubr.bf16.gmra.mxu0 %v4517
      %v4666 = vpop.f32.mrf.mxu0
      %v4667 = vadd.f32 0.0, %v4666
      %v4668 = vpop.f32.mrf.mxu0
      %v4669 = vpop.f32.mrf.mxu0
      %v4670 = vadd.f32 0.0, %v4669
      %v4671 = vpop.f32.mrf.mxu0
      %4672 = vmatprep.mubr.bf16.mxu0 0
      %4673 = vmatmul.mubr.bf16.gmra.mxu0 %v4520
      %v4674 = vpop.f32.mrf.mxu0
      %v4675 = vadd.f32 0.0, %v4674
      %v4676 = vpop.f32.mrf.mxu0
      %v4677 = vpop.f32.mrf.mxu0
      %v4678 = vadd.f32 0.0, %v4677
      %v4679 = vpop.f32.mrf.mxu0
      %4680 = vmatprep.mubr.bf16.mxu0 0
      %4681 = vmatmul.mubr.bf16.gmra.mxu0 %v4523
      %v4682 = vpop.f32.mrf.mxu0
      %v4683 = vadd.f32 0.0, %v4682
      %v4684 = vpop.f32.mrf.mxu0
      %v4685 = vpop.f32.mrf.mxu0
      %v4686 = vadd.f32 0.0, %v4685
      %v4687 = vpop.f32.mrf.mxu0
      %4688 = vdwg.mxu0
      %v4689 = vadd.f32 %v4170, %v4563
      %v4690 = vadd.f32 %v4173, %v4566
      %v4691 = vadd.f32 %v4178, %v4571
      %v4692 = vadd.f32 %v4181, %v4574
      %v4693 = vadd.f32 %v4186, %v4579
      %v4694 = vadd.f32 %v4189, %v4582
      %v4695 = vadd.f32 %v4194, %v4587
      %v4696 = vadd.f32 %v4197, %v4590
      %v4697 = vadd.f32 %v4202, %v4595
      %v4698 = vadd.f32 %v4205, %v4598
      %v4699 = vadd.f32 %v4210, %v4603
      %v4700 = vadd.f32 %v4213, %v4606
      %v4701 = vadd.f32 %v4218, %v4611
      %v4702 = vadd.f32 %v4221, %v4614
      %v4703 = vadd.f32 %v4226, %v4619
      %v4704 = vadd.f32 %v4229, %v4622
      %v4705 = vadd.f32 %v4234, %v4627
      %v4706 = vadd.f32 %v4237, %v4630
      %v4707 = vadd.f32 %v4242, %v4635
      %v4708 = vadd.f32 %v4245, %v4638
      %v4709 = vadd.f32 %v4250, %v4643
      %v4710 = vadd.f32 %v4253, %v4646
      %v4711 = vadd.f32 %v4258, %v4651
      %v4712 = vadd.f32 %v4261, %v4654
      %v4713 = vadd.f32 %v4266, %v4659
      %v4714 = vadd.f32 %v4269, %v4662
      %v4715 = vadd.f32 %v4274, %v4667
      %v4716 = vadd.f32 %v4277, %v4670
      %v4717 = vadd.f32 %v4282, %v4675
      %v4718 = vadd.f32 %v4285, %v4678
      %v4719 = vadd.f32 %v4290, %v4683
      %v4720 = vadd.f32 %v4293, %v4686
      %s4721 = scalar_lea.vmem %s4, 12
      %v4722 = vld [vmem:[%s4721] sm:$0xf]
      %v4725 = vunpack.c.l.b16 %v3346
      %v4726 = vunpack.c.l.b16 %v3347
      %v4727 = vpack.c.b16 %v4726, %v4725
      %v4729 = vsel %vm3790, %v4727, 0
      %v4732 = vsel %vm3839, %v4722, 0
      %4734 = vmatprep.subr.bf16.mxu0 0
      %4735 = vmatpush1.bf16.msra.mxu0 0
      %4736 = vmatprep.subr.bf16.mxu0 0
      %4737 = vmatpush1.bf16.msra.mxu0 0
      %4738 = vmatprep.subr.bf16.mxu0 0
      %4739 = vmatpush1.bf16.msra.mxu0 0
      %4740 = vmatprep.subr.bf16.mxu0 0
      %4741 = vmatpush1.bf16.msra.mxu0 0
      %4742 = vmatprep.subr.bf16.mxu0 0
      %4743 = vmatpush1.bf16.msra.mxu0 0
      %4744 = vmatprep.subr.bf16.mxu0 0
      %4745 = vmatpush1.bf16.msra.mxu0 0
      %4746 = vmatprep.subr.bf16.mxu0 0
      %4747 = vmatpush1.bf16.msra.mxu0 0
      %4748 = vmatprep.subr.bf16.mxu0 0
      %4749 = vmatpush1.bf16.msra.mxu0 %v4732
      %4750 = vmatprep.subr.bf16.mxu0 0
      %4751 = vmatpush2.bf16.msra.mxu0 0
      %4752 = vmatprep.subr.bf16.mxu0 0
      %4753 = vmatpush2.bf16.msra.mxu0 0
      %4754 = vmatprep.subr.bf16.mxu0 0
      %4755 = vmatpush2.bf16.msra.mxu0 0
      %4756 = vmatprep.subr.bf16.mxu0 0
      %4757 = vmatpush2.bf16.msra.mxu0 0
      %4758 = vmatprep.subr.bf16.mxu0 0
      %4759 = vmatpush2.bf16.msra.mxu0 0
      %4760 = vmatprep.subr.bf16.mxu0 0
      %4761 = vmatpush2.bf16.msra.mxu0 0
      %4762 = vmatprep.subr.bf16.mxu0 0
      %4763 = vmatpush2.bf16.msra.mxu0 0
      %4764 = vmatprep.subr.bf16.mxu0 0
      %4765 = vmatpush2.bf16.msra.mxu0 0
      %4766 = vmatprep.mubr.bf16.mxu0 0
      %4767 = vmatmul.mubr.bf16.gmra.mxu0 %v4088
      %v4768 = vpop.f32.mrf.mxu0
      %v4769 = vadd.f32 0.0, %v4768
      %v4770 = vpop.f32.mrf.mxu0
      %v4771 = vpop.f32.mrf.mxu0
      %v4772 = vadd.f32 0.0, %v4771
      %v4773 = vpop.f32.mrf.mxu0
      %4774 = vmatprep.mubr.bf16.mxu0 0
      %4775 = vmatmul.mubr.bf16.gmra.mxu0 %v4091
      %v4776 = vpop.f32.mrf.mxu0
      %v4777 = vadd.f32 0.0, %v4776
      %v4778 = vpop.f32.mrf.mxu0
      %v4779 = vpop.f32.mrf.mxu0
      %v4780 = vadd.f32 0.0, %v4779
      %v4781 = vpop.f32.mrf.mxu0
      %4782 = vmatprep.mubr.bf16.mxu0 0
      %4783 = vmatmul.mubr.bf16.gmra.mxu0 %v4094
      %v4784 = vpop.f32.mrf.mxu0
      %v4785 = vadd.f32 0.0, %v4784
      %v4786 = vpop.f32.mrf.mxu0
      %v4787 = vpop.f32.mrf.mxu0
      %v4788 = vadd.f32 0.0, %v4787
      %v4789 = vpop.f32.mrf.mxu0
      %4790 = vmatprep.mubr.bf16.mxu0 0
      %4791 = vmatmul.mubr.bf16.gmra.mxu0 %v4097
      %v4792 = vpop.f32.mrf.mxu0
      %v4793 = vadd.f32 0.0, %v4792
      %v4794 = vpop.f32.mrf.mxu0
      %v4795 = vpop.f32.mrf.mxu0
      %v4796 = vadd.f32 0.0, %v4795
      %v4797 = vpop.f32.mrf.mxu0
      %4798 = vmatprep.mubr.bf16.mxu0 0
      %4799 = vmatmul.mubr.bf16.gmra.mxu0 %v4100
      %v4800 = vpop.f32.mrf.mxu0
      %v4801 = vadd.f32 0.0, %v4800
      %v4802 = vpop.f32.mrf.mxu0
      %v4803 = vpop.f32.mrf.mxu0
      %v4804 = vadd.f32 0.0, %v4803
      %v4805 = vpop.f32.mrf.mxu0
      %4806 = vmatprep.mubr.bf16.mxu0 0
      %4807 = vmatmul.mubr.bf16.gmra.mxu0 %v4103
      %v4808 = vpop.f32.mrf.mxu0
      %v4809 = vadd.f32 0.0, %v4808
      %v4810 = vpop.f32.mrf.mxu0
      %v4811 = vpop.f32.mrf.mxu0
      %v4812 = vadd.f32 0.0, %v4811
      %v4813 = vpop.f32.mrf.mxu0
      %4814 = vmatprep.mubr.bf16.mxu0 0
      %4815 = vmatmul.mubr.bf16.gmra.mxu0 %v4106
      %v4816 = vpop.f32.mrf.mxu0
      %v4817 = vadd.f32 0.0, %v4816
      %v4818 = vpop.f32.mrf.mxu0
      %v4819 = vpop.f32.mrf.mxu0
      %v4820 = vadd.f32 0.0, %v4819
      %v4821 = vpop.f32.mrf.mxu0
      %4822 = vmatprep.mubr.bf16.mxu0 0
      %4823 = vmatmul.mubr.bf16.gmra.mxu0 %v4109
      %v4824 = vpop.f32.mrf.mxu0
      %v4825 = vadd.f32 0.0, %v4824
      %v4826 = vpop.f32.mrf.mxu0
      %v4827 = vpop.f32.mrf.mxu0
      %v4828 = vadd.f32 0.0, %v4827
      %v4829 = vpop.f32.mrf.mxu0
      %4830 = vmatprep.mubr.bf16.mxu0 0
      %4831 = vmatmul.mubr.bf16.gmra.mxu0 %v4112
      %v4832 = vpop.f32.mrf.mxu0
      %v4833 = vadd.f32 0.0, %v4832
      %v4834 = vpop.f32.mrf.mxu0
      %v4835 = vpop.f32.mrf.mxu0
      %v4836 = vadd.f32 0.0, %v4835
      %v4837 = vpop.f32.mrf.mxu0
      %4838 = vmatprep.mubr.bf16.mxu0 0
      %4839 = vmatmul.mubr.bf16.gmra.mxu0 %v4115
      %v4840 = vpop.f32.mrf.mxu0
      %v4841 = vadd.f32 0.0, %v4840
      %v4842 = vpop.f32.mrf.mxu0
      %v4843 = vpop.f32.mrf.mxu0
      %v4844 = vadd.f32 0.0, %v4843
      %v4845 = vpop.f32.mrf.mxu0
      %4846 = vmatprep.mubr.bf16.mxu0 0
      %4847 = vmatmul.mubr.bf16.gmra.mxu0 %v4118
      %v4848 = vpop.f32.mrf.mxu0
      %v4849 = vadd.f32 0.0, %v4848
      %v4850 = vpop.f32.mrf.mxu0
      %v4851 = vpop.f32.mrf.mxu0
      %v4852 = vadd.f32 0.0, %v4851
      %v4853 = vpop.f32.mrf.mxu0
      %4854 = vmatprep.mubr.bf16.mxu0 0
      %4855 = vmatmul.mubr.bf16.gmra.mxu0 %v4121
      %v4856 = vpop.f32.mrf.mxu0
      %v4857 = vadd.f32 0.0, %v4856
      %v4858 = vpop.f32.mrf.mxu0
      %v4859 = vpop.f32.mrf.mxu0
      %v4860 = vadd.f32 0.0, %v4859
      %v4861 = vpop.f32.mrf.mxu0
      %4862 = vmatprep.mubr.bf16.mxu0 0
      %4863 = vmatmul.mubr.bf16.gmra.mxu0 %v4124
      %v4864 = vpop.f32.mrf.mxu0
      %v4865 = vadd.f32 0.0, %v4864
      %v4866 = vpop.f32.mrf.mxu0
      %v4867 = vpop.f32.mrf.mxu0
      %v4868 = vadd.f32 0.0, %v4867
      %v4869 = vpop.f32.mrf.mxu0
      %4870 = vmatprep.mubr.bf16.mxu0 0
      %4871 = vmatmul.mubr.bf16.gmra.mxu0 %v4127
      %v4872 = vpop.f32.mrf.mxu0
      %v4873 = vadd.f32 0.0, %v4872
      %v4874 = vpop.f32.mrf.mxu0
      %v4875 = vpop.f32.mrf.mxu0
      %v4876 = vadd.f32 0.0, %v4875
      %v4877 = vpop.f32.mrf.mxu0
      %4878 = vmatprep.mubr.bf16.mxu0 0
      %4879 = vmatmul.mubr.bf16.gmra.mxu0 %v4130
      %v4880 = vpop.f32.mrf.mxu0
      %v4881 = vadd.f32 0.0, %v4880
      %v4882 = vpop.f32.mrf.mxu0
      %v4883 = vpop.f32.mrf.mxu0
      %v4884 = vadd.f32 0.0, %v4883
      %v4885 = vpop.f32.mrf.mxu0
      %4886 = vmatprep.mubr.bf16.mxu0 0
      %4887 = vmatmul.mubr.bf16.gmra.mxu0 %v4729
      %v4888 = vpop.f32.mrf.mxu0
      %v4889 = vadd.f32 0.0, %v4888
      %v4890 = vpop.f32.mrf.mxu0
      %v4891 = vpop.f32.mrf.mxu0
      %v4892 = vadd.f32 0.0, %v4891
      %v4893 = vpop.f32.mrf.mxu0
      %4894 = vdwg.mxu0
      %v4895 = vadd.f32 %v4689, %v4769
      %v4896 = vadd.f32 %v4690, %v4772
      %v4897 = vadd.f32 %v4691, %v4777
      %v4898 = vadd.f32 %v4692, %v4780
      %v4899 = vadd.f32 %v4693, %v4785
      %v4900 = vadd.f32 %v4694, %v4788
      %v4901 = vadd.f32 %v4695, %v4793
      %v4902 = vadd.f32 %v4696, %v4796
      %v4903 = vadd.f32 %v4697, %v4801
      %v4904 = vadd.f32 %v4698, %v4804
      %v4905 = vadd.f32 %v4699, %v4809
      %v4906 = vadd.f32 %v4700, %v4812
      %v4907 = vadd.f32 %v4701, %v4817
      %v4908 = vadd.f32 %v4702, %v4820
      %v4909 = vadd.f32 %v4703, %v4825
      %v4910 = vadd.f32 %v4704, %v4828
      %v4911 = vadd.f32 %v4705, %v4833
      %v4912 = vadd.f32 %v4706, %v4836
      %v4913 = vadd.f32 %v4707, %v4841
      %v4914 = vadd.f32 %v4708, %v4844
      %v4915 = vadd.f32 %v4709, %v4849
      %v4916 = vadd.f32 %v4710, %v4852
      %v4917 = vadd.f32 %v4711, %v4857
      %v4918 = vadd.f32 %v4712, %v4860
      %v4919 = vadd.f32 %v4713, %v4865
      %v4920 = vadd.f32 %v4714, %v4868
      %v4921 = vadd.f32 %v4715, %v4873
      %v4922 = vadd.f32 %v4716, %v4876
      %v4923 = vadd.f32 %v4717, %v4881
      %v4924 = vadd.f32 %v4718, %v4884
      %v4925 = vadd.f32 %v4719, %v4889
      %v4926 = vadd.f32 %v4720, %v4892
      %v4928 = vshrl.u32 %v3346, 16
      %v4930 = vrot.slane %v4928, 4
      %v4931 = vshll.u32 %v3346, 16
      %v4933 = vrot.slane %v4931, 5
      %v4934 = vor.u32 %v4930, %v4933
      %v4935 = vrot.slane %v4934, 4
      %v4937 = vshll.u32 %v3347, 16
      %v4939 = vrot.slane %v4937, 5
      %v4940 = vsel %vm3355, %v4935, %v4939
      %v4941 = vshrl.u32 %v3347, 16
      %v4943 = vrot.slane %v4941, 4
      %v4944 = vor.u32 %v4943, %v4939
      %v4945 = vrot.slane %v4944, 4
      %v4947 = vshll.u32 %v3348, 16
      %v4949 = vrot.slane %v4947, 5
      %v4950 = vsel %vm3355, %v4945, %v4949
      %s4951 = scalar_lea.vmem %s4, 16
      %v4952 = vld [vmem:[%s4951] sm:$0xf]
      %v4953 = vunpack.c.l.b16 %v4940
      %v4954 = vunpack.c.l.b16 %v4950
      %v4955 = vpack.c.b16 %v4954, %v4953
      %v4957 = vsel %vm3790, %v4955, 0
      %v4960 = vsel %vm3839, %v4952, 0
      %4962 = vmatprep.subr.bf16.mxu0 0
      %4963 = vmatpush1.bf16.msra.mxu0 0
      %4964 = vmatprep.subr.bf16.mxu0 0
      %4965 = vmatpush1.bf16.msra.mxu0 0
      %4966 = vmatprep.subr.bf16.mxu0 0
      %4967 = vmatpush1.bf16.msra.mxu0 0
      %4968 = vmatprep.subr.bf16.mxu0 0
      %4969 = vmatpush1.bf16.msra.mxu0 0
      %4970 = vmatprep.subr.bf16.mxu0 0
      %4971 = vmatpush1.bf16.msra.mxu0 0
      %4972 = vmatprep.subr.bf16.mxu0 0
      %4973 = vmatpush1.bf16.msra.mxu0 0
      %4974 = vmatprep.subr.bf16.mxu0 0
      %4975 = vmatpush1.bf16.msra.mxu0 0
      %4976 = vmatprep.subr.bf16.mxu0 0
      %4977 = vmatpush1.bf16.msra.mxu0 %v4960
      %4978 = vmatprep.subr.bf16.mxu0 0
      %4979 = vmatpush2.bf16.msra.mxu0 0
      %4980 = vmatprep.subr.bf16.mxu0 0
      %4981 = vmatpush2.bf16.msra.mxu0 0
      %4982 = vmatprep.subr.bf16.mxu0 0
      %4983 = vmatpush2.bf16.msra.mxu0 0
      %4984 = vmatprep.subr.bf16.mxu0 0
      %4985 = vmatpush2.bf16.msra.mxu0 0
      %4986 = vmatprep.subr.bf16.mxu0 0
      %4987 = vmatpush2.bf16.msra.mxu0 0
      %4988 = vmatprep.subr.bf16.mxu0 0
      %4989 = vmatpush2.bf16.msra.mxu0 0
      %4990 = vmatprep.subr.bf16.mxu0 0
      %4991 = vmatpush2.bf16.msra.mxu0 0
      %4992 = vmatprep.subr.bf16.mxu0 0
      %4993 = vmatpush2.bf16.msra.mxu0 0
      %4994 = vmatprep.mubr.bf16.mxu0 0
      %4995 = vmatmul.mubr.bf16.gmra.mxu0 %v3795
      %v4996 = vpop.f32.mrf.mxu0
      %v4997 = vadd.f32 0.0, %v4996
      %v4998 = vpop.f32.mrf.mxu0
      %v4999 = vpop.f32.mrf.mxu0
      %v5000 = vadd.f32 0.0, %v4999
      %v5001 = vpop.f32.mrf.mxu0
      %5002 = vmatprep.mubr.bf16.mxu0 0
      %5003 = vmatmul.mubr.bf16.gmra.mxu0 %v3798
      %v5004 = vpop.f32.mrf.mxu0
      %v5005 = vadd.f32 0.0, %v5004
      %v5006 = vpop.f32.mrf.mxu0
      %v5007 = vpop.f32.mrf.mxu0
      %v5008 = vadd.f32 0.0, %v5007
      %v5009 = vpop.f32.mrf.mxu0
      %5010 = vmatprep.mubr.bf16.mxu0 0
      %5011 = vmatmul.mubr.bf16.gmra.mxu0 %v3801
      %v5012 = vpop.f32.mrf.mxu0
      %v5013 = vadd.f32 0.0, %v5012
      %v5014 = vpop.f32.mrf.mxu0
      %v5015 = vpop.f32.mrf.mxu0
      %v5016 = vadd.f32 0.0, %v5015
      %v5017 = vpop.f32.mrf.mxu0
      %5018 = vmatprep.mubr.bf16.mxu0 0
      %5019 = vmatmul.mubr.bf16.gmra.mxu0 %v3804
      %v5020 = vpop.f32.mrf.mxu0
      %v5021 = vadd.f32 0.0, %v5020
      %v5022 = vpop.f32.mrf.mxu0
      %v5023 = vpop.f32.mrf.mxu0
      %v5024 = vadd.f32 0.0, %v5023
      %v5025 = vpop.f32.mrf.mxu0
      %5026 = vmatprep.mubr.bf16.mxu0 0
      %5027 = vmatmul.mubr.bf16.gmra.mxu0 %v3807
      %v5028 = vpop.f32.mrf.mxu0
      %v5029 = vadd.f32 0.0, %v5028
      %v5030 = vpop.f32.mrf.mxu0
      %v5031 = vpop.f32.mrf.mxu0
      %v5032 = vadd.f32 0.0, %v5031
      %v5033 = vpop.f32.mrf.mxu0
      %5034 = vmatprep.mubr.bf16.mxu0 0
      %5035 = vmatmul.mubr.bf16.gmra.mxu0 %v3810
      %v5036 = vpop.f32.mrf.mxu0
      %v5037 = vadd.f32 0.0, %v5036
      %v5038 = vpop.f32.mrf.mxu0
      %v5039 = vpop.f32.mrf.mxu0
      %v5040 = vadd.f32 0.0, %v5039
      %v5041 = vpop.f32.mrf.mxu0
      %5042 = vmatprep.mubr.bf16.mxu0 0
      %5043 = vmatmul.mubr.bf16.gmra.mxu0 %v3813
      %v5044 = vpop.f32.mrf.mxu0
      %v5045 = vadd.f32 0.0, %v5044
      %v5046 = vpop.f32.mrf.mxu0
      %v5047 = vpop.f32.mrf.mxu0
      %v5048 = vadd.f32 0.0, %v5047
      %v5049 = vpop.f32.mrf.mxu0
      %5050 = vmatprep.mubr.bf16.mxu0 0
      %5051 = vmatmul.mubr.bf16.gmra.mxu0 %v3816
      %v5052 = vpop.f32.mrf.mxu0
      %v5053 = vadd.f32 0.0, %v5052
      %v5054 = vpop.f32.mrf.mxu0
      %v5055 = vpop.f32.mrf.mxu0
      %v5056 = vadd.f32 0.0, %v5055
      %v5057 = vpop.f32.mrf.mxu0
      %5058 = vmatprep.mubr.bf16.mxu0 0
      %5059 = vmatmul.mubr.bf16.gmra.mxu0 %v3819
      %v5060 = vpop.f32.mrf.mxu0
      %v5061 = vadd.f32 0.0, %v5060
      %v5062 = vpop.f32.mrf.mxu0
      %v5063 = vpop.f32.mrf.mxu0
      %v5064 = vadd.f32 0.0, %v5063
      %v5065 = vpop.f32.mrf.mxu0
      %5066 = vmatprep.mubr.bf16.mxu0 0
      %5067 = vmatmul.mubr.bf16.gmra.mxu0 %v3822
      %v5068 = vpop.f32.mrf.mxu0
      %v5069 = vadd.f32 0.0, %v5068
      %v5070 = vpop.f32.mrf.mxu0
      %v5071 = vpop.f32.mrf.mxu0
      %v5072 = vadd.f32 0.0, %v5071
      %v5073 = vpop.f32.mrf.mxu0
      %5074 = vmatprep.mubr.bf16.mxu0 0
      %5075 = vmatmul.mubr.bf16.gmra.mxu0 %v3825
      %v5076 = vpop.f32.mrf.mxu0
      %v5077 = vadd.f32 0.0, %v5076
      %v5078 = vpop.f32.mrf.mxu0
      %v5079 = vpop.f32.mrf.mxu0
      %v5080 = vadd.f32 0.0, %v5079
      %v5081 = vpop.f32.mrf.mxu0
      %5082 = vmatprep.mubr.bf16.mxu0 0
      %5083 = vmatmul.mubr.bf16.gmra.mxu0 %v3828
      %v5084 = vpop.f32.mrf.mxu0
      %v5085 = vadd.f32 0.0, %v5084
      %v5086 = vpop.f32.mrf.mxu0
      %v5087 = vpop.f32.mrf.mxu0
      %v5088 = vadd.f32 0.0, %v5087
      %v5089 = vpop.f32.mrf.mxu0
      %5090 = vmatprep.mubr.bf16.mxu0 0
      %5091 = vmatmul.mubr.bf16.gmra.mxu0 %v3831
      %v5092 = vpop.f32.mrf.mxu0
      %v5093 = vadd.f32 0.0, %v5092
      %v5094 = vpop.f32.mrf.mxu0
      %v5095 = vpop.f32.mrf.mxu0
      %v5096 = vadd.f32 0.0, %v5095
      %v5097 = vpop.f32.mrf.mxu0
      %5098 = vmatprep.mubr.bf16.mxu0 0
      %5099 = vmatmul.mubr.bf16.gmra.mxu0 %v3834
      %v5100 = vpop.f32.mrf.mxu0
      %v5101 = vadd.f32 0.0, %v5100
      %v5102 = vpop.f32.mrf.mxu0
      %v5103 = vpop.f32.mrf.mxu0
      %v5104 = vadd.f32 0.0, %v5103
      %v5105 = vpop.f32.mrf.mxu0
      %5106 = vmatprep.mubr.bf16.mxu0 0
      %5107 = vmatmul.mubr.bf16.gmra.mxu0 %v3837
      %v5108 = vpop.f32.mrf.mxu0
      %v5109 = vadd.f32 0.0, %v5108
      %v5110 = vpop.f32.mrf.mxu0
      %v5111 = vpop.f32.mrf.mxu0
      %v5112 = vadd.f32 0.0, %v5111
      %v5113 = vpop.f32.mrf.mxu0
      %5114 = vmatprep.mubr.bf16.mxu0 0
      %5115 = vmatmul.mubr.bf16.gmra.mxu0 %v4957
      %v5116 = vpop.f32.mrf.mxu0
      %v5117 = vadd.f32 0.0, %v5116
      %v5118 = vpop.f32.mrf.mxu0
      %v5119 = vpop.f32.mrf.mxu0
      %v5120 = vadd.f32 0.0, %v5119
      %v5121 = vpop.f32.mrf.mxu0
      %5122 = vdwg.mxu0
      %v5123 = vadd.f32 %v4895, %v4997
      %v5124 = vadd.f32 %v4896, %v5000
      %v5125 = vadd.f32 %v4897, %v5005
      %v5126 = vadd.f32 %v4898, %v5008
      %v5127 = vadd.f32 %v4899, %v5013
      %v5128 = vadd.f32 %v4900, %v5016
      %v5129 = vadd.f32 %v4901, %v5021
      %v5130 = vadd.f32 %v4902, %v5024
      %v5131 = vadd.f32 %v4903, %v5029
      %v5132 = vadd.f32 %v4904, %v5032
      %v5133 = vadd.f32 %v4905, %v5037
      %v5134 = vadd.f32 %v4906, %v5040
      %v5135 = vadd.f32 %v4907, %v5045
      %v5136 = vadd.f32 %v4908, %v5048
      %v5137 = vadd.f32 %v4909, %v5053
      %v5138 = vadd.f32 %v4910, %v5056
      %v5139 = vadd.f32 %v4911, %v5061
      %v5140 = vadd.f32 %v4912, %v5064
      %v5141 = vadd.f32 %v4913, %v5069
      %v5142 = vadd.f32 %v4914, %v5072
      %v5143 = vadd.f32 %v4915, %v5077
      %v5144 = vadd.f32 %v4916, %v5080
      %v5145 = vadd.f32 %v4917, %v5085
      %v5146 = vadd.f32 %v4918, %v5088
      %v5147 = vadd.f32 %v4919, %v5093
      %v5148 = vadd.f32 %v4920, %v5096
      %v5149 = vadd.f32 %v4921, %v5101
      %v5150 = vadd.f32 %v4922, %v5104
      %v5151 = vadd.f32 %v4923, %v5109
      %v5152 = vadd.f32 %v4924, %v5112
      %v5153 = vadd.f32 %v4925, %v5117
      %v5154 = vadd.f32 %v4926, %v5120
      %v5156 = vrot.slane %v3346, 5
      %v5157 = vrot.slane %v5156, 4
      %v5158 = vrot.slane %v3347, 5
      %v5159 = vsel %vm4314, %v5157, %v5158
      %v5160 = vrot.slane %v5158, 4
      %v5161 = vrot.slane %v3348, 5
      %v5162 = vsel %vm4314, %v5160, %v5161
      %s5163 = scalar_lea.vmem %s4, 20
      %v5164 = vld [vmem:[%s5163] sm:$0xf]
      %v5165 = vunpack.c.l.b16 %v5159
      %v5166 = vunpack.c.l.b16 %v5162
      %v5167 = vpack.c.b16 %v5166, %v5165
      %v5169 = vsel %vm3790, %v5167, 0
      %v5172 = vsel %vm3839, %v5164, 0
      %5174 = vmatprep.subr.bf16.mxu0 0
      %5175 = vmatpush1.bf16.msra.mxu0 0
      %5176 = vmatprep.subr.bf16.mxu0 0
      %5177 = vmatpush1.bf16.msra.mxu0 0
      %5178 = vmatprep.subr.bf16.mxu0 0
      %5179 = vmatpush1.bf16.msra.mxu0 0
      %5180 = vmatprep.subr.bf16.mxu0 0
      %5181 = vmatpush1.bf16.msra.mxu0 0
      %5182 = vmatprep.subr.bf16.mxu0 0
      %5183 = vmatpush1.bf16.msra.mxu0 0
      %5184 = vmatprep.subr.bf16.mxu0 0
      %5185 = vmatpush1.bf16.msra.mxu0 0
      %5186 = vmatprep.subr.bf16.mxu0 0
      %5187 = vmatpush1.bf16.msra.mxu0 0
      %5188 = vmatprep.subr.bf16.mxu0 0
      %5189 = vmatpush1.bf16.msra.mxu0 %v5172
      %5190 = vmatprep.subr.bf16.mxu0 0
      %5191 = vmatpush2.bf16.msra.mxu0 0
      %5192 = vmatprep.subr.bf16.mxu0 0
      %5193 = vmatpush2.bf16.msra.mxu0 0
      %5194 = vmatprep.subr.bf16.mxu0 0
      %5195 = vmatpush2.bf16.msra.mxu0 0
      %5196 = vmatprep.subr.bf16.mxu0 0
      %5197 = vmatpush2.bf16.msra.mxu0 0
      %5198 = vmatprep.subr.bf16.mxu0 0
      %5199 = vmatpush2.bf16.msra.mxu0 0
      %5200 = vmatprep.subr.bf16.mxu0 0
      %5201 = vmatpush2.bf16.msra.mxu0 0
      %5202 = vmatprep.subr.bf16.mxu0 0
      %5203 = vmatpush2.bf16.msra.mxu0 0
      %5204 = vmatprep.subr.bf16.mxu0 0
      %5205 = vmatpush2.bf16.msra.mxu0 0
      %5206 = vmatprep.mubr.bf16.mxu0 0
      %5207 = vmatmul.mubr.bf16.gmra.mxu0 %v4481
      %v5208 = vpop.f32.mrf.mxu0
      %v5209 = vadd.f32 0.0, %v5208
      %v5210 = vpop.f32.mrf.mxu0
      %v5211 = vpop.f32.mrf.mxu0
      %v5212 = vadd.f32 0.0, %v5211
      %v5213 = vpop.f32.mrf.mxu0
      %5214 = vmatprep.mubr.bf16.mxu0 0
      %5215 = vmatmul.mubr.bf16.gmra.mxu0 %v4484
      %v5216 = vpop.f32.mrf.mxu0
      %v5217 = vadd.f32 0.0, %v5216
      %v5218 = vpop.f32.mrf.mxu0
      %v5219 = vpop.f32.mrf.mxu0
      %v5220 = vadd.f32 0.0, %v5219
      %v5221 = vpop.f32.mrf.mxu0
      %5222 = vmatprep.mubr.bf16.mxu0 0
      %5223 = vmatmul.mubr.bf16.gmra.mxu0 %v4487
      %v5224 = vpop.f32.mrf.mxu0
      %v5225 = vadd.f32 0.0, %v5224
      %v5226 = vpop.f32.mrf.mxu0
      %v5227 = vpop.f32.mrf.mxu0
      %v5228 = vadd.f32 0.0, %v5227
      %v5229 = vpop.f32.mrf.mxu0
      %5230 = vmatprep.mubr.bf16.mxu0 0
      %5231 = vmatmul.mubr.bf16.gmra.mxu0 %v4490
      %v5232 = vpop.f32.mrf.mxu0
      %v5233 = vadd.f32 0.0, %v5232
      %v5234 = vpop.f32.mrf.mxu0
      %v5235 = vpop.f32.mrf.mxu0
      %v5236 = vadd.f32 0.0, %v5235
      %v5237 = vpop.f32.mrf.mxu0
      %5238 = vmatprep.mubr.bf16.mxu0 0
      %5239 = vmatmul.mubr.bf16.gmra.mxu0 %v4493
      %v5240 = vpop.f32.mrf.mxu0
      %v5241 = vadd.f32 0.0, %v5240
      %v5242 = vpop.f32.mrf.mxu0
      %v5243 = vpop.f32.mrf.mxu0
      %v5244 = vadd.f32 0.0, %v5243
      %v5245 = vpop.f32.mrf.mxu0
      %5246 = vmatprep.mubr.bf16.mxu0 0
      %5247 = vmatmul.mubr.bf16.gmra.mxu0 %v4496
      %v5248 = vpop.f32.mrf.mxu0
      %v5249 = vadd.f32 0.0, %v5248
      %v5250 = vpop.f32.mrf.mxu0
      %v5251 = vpop.f32.mrf.mxu0
      %v5252 = vadd.f32 0.0, %v5251
      %v5253 = vpop.f32.mrf.mxu0
      %5254 = vmatprep.mubr.bf16.mxu0 0
      %5255 = vmatmul.mubr.bf16.gmra.mxu0 %v4499
      %v5256 = vpop.f32.mrf.mxu0
      %v5257 = vadd.f32 0.0, %v5256
      %v5258 = vpop.f32.mrf.mxu0
      %v5259 = vpop.f32.mrf.mxu0
      %v5260 = vadd.f32 0.0, %v5259
      %v5261 = vpop.f32.mrf.mxu0
      %5262 = vmatprep.mubr.bf16.mxu0 0
      %5263 = vmatmul.mubr.bf16.gmra.mxu0 %v4502
      %v5264 = vpop.f32.mrf.mxu0
      %v5265 = vadd.f32 0.0, %v5264
      %v5266 = vpop.f32.mrf.mxu0
      %v5267 = vpop.f32.mrf.mxu0
      %v5268 = vadd.f32 0.0, %v5267
      %v5269 = vpop.f32.mrf.mxu0
      %5270 = vmatprep.mubr.bf16.mxu0 0
      %5271 = vmatmul.mubr.bf16.gmra.mxu0 %v4505
      %v5272 = vpop.f32.mrf.mxu0
      %v5273 = vadd.f32 0.0, %v5272
      %v5274 = vpop.f32.mrf.mxu0
      %v5275 = vpop.f32.mrf.mxu0
      %v5276 = vadd.f32 0.0, %v5275
      %v5277 = vpop.f32.mrf.mxu0
      %5278 = vmatprep.mubr.bf16.mxu0 0
      %5279 = vmatmul.mubr.bf16.gmra.mxu0 %v4508
      %v5280 = vpop.f32.mrf.mxu0
      %v5281 = vadd.f32 0.0, %v5280
      %v5282 = vpop.f32.mrf.mxu0
      %v5283 = vpop.f32.mrf.mxu0
      %v5284 = vadd.f32 0.0, %v5283
      %v5285 = vpop.f32.mrf.mxu0
      %5286 = vmatprep.mubr.bf16.mxu0 0
      %5287 = vmatmul.mubr.bf16.gmra.mxu0 %v4511
      %v5288 = vpop.f32.mrf.mxu0
      %v5289 = vadd.f32 0.0, %v5288
      %v5290 = vpop.f32.mrf.mxu0
      %v5291 = vpop.f32.mrf.mxu0
      %v5292 = vadd.f32 0.0, %v5291
      %v5293 = vpop.f32.mrf.mxu0
      %5294 = vmatprep.mubr.bf16.mxu0 0
      %5295 = vmatmul.mubr.bf16.gmra.mxu0 %v4514
      %v5296 = vpop.f32.mrf.mxu0
      %v5297 = vadd.f32 0.0, %v5296
      %v5298 = vpop.f32.mrf.mxu0
      %v5299 = vpop.f32.mrf.mxu0
      %v5300 = vadd.f32 0.0, %v5299
      %v5301 = vpop.f32.mrf.mxu0
      %5302 = vmatprep.mubr.bf16.mxu0 0
      %5303 = vmatmul.mubr.bf16.gmra.mxu0 %v4517
      %v5304 = vpop.f32.mrf.mxu0
      %v5305 = vadd.f32 0.0, %v5304
      %v5306 = vpop.f32.mrf.mxu0
      %v5307 = vpop.f32.mrf.mxu0
      %v5308 = vadd.f32 0.0, %v5307
      %v5309 = vpop.f32.mrf.mxu0
      %5310 = vmatprep.mubr.bf16.mxu0 0
      %5311 = vmatmul.mubr.bf16.gmra.mxu0 %v4520
      %v5312 = vpop.f32.mrf.mxu0
      %v5313 = vadd.f32 0.0, %v5312
      %v5314 = vpop.f32.mrf.mxu0
      %v5315 = vpop.f32.mrf.mxu0
      %v5316 = vadd.f32 0.0, %v5315
      %v5317 = vpop.f32.mrf.mxu0
      %5318 = vmatprep.mubr.bf16.mxu0 0
      %5319 = vmatmul.mubr.bf16.gmra.mxu0 %v4523
      %v5320 = vpop.f32.mrf.mxu0
      %v5321 = vadd.f32 0.0, %v5320
      %v5322 = vpop.f32.mrf.mxu0
      %v5323 = vpop.f32.mrf.mxu0
      %v5324 = vadd.f32 0.0, %v5323
      %v5325 = vpop.f32.mrf.mxu0
      %5326 = vmatprep.mubr.bf16.mxu0 0
      %5327 = vmatmul.mubr.bf16.gmra.mxu0 %v5169
      %v5328 = vpop.f32.mrf.mxu0
      %v5329 = vadd.f32 0.0, %v5328
      %v5330 = vpop.f32.mrf.mxu0
      %v5331 = vpop.f32.mrf.mxu0
      %v5332 = vadd.f32 0.0, %v5331
      %v5333 = vpop.f32.mrf.mxu0
      %5334 = vdwg.mxu0
      %v5335 = vadd.f32 %v5123, %v5209
      %v5336 = vadd.f32 %v5124, %v5212
      %v5337 = vadd.f32 %v5125, %v5217
      %v5338 = vadd.f32 %v5126, %v5220
      %v5339 = vadd.f32 %v5127, %v5225
      %v5340 = vadd.f32 %v5128, %v5228
      %v5341 = vadd.f32 %v5129, %v5233
      %v5342 = vadd.f32 %v5130, %v5236
      %v5343 = vadd.f32 %v5131, %v5241
      %v5344 = vadd.f32 %v5132, %v5244
      %v5345 = vadd.f32 %v5133, %v5249
      %v5346 = vadd.f32 %v5134, %v5252
      %v5347 = vadd.f32 %v5135, %v5257
      %v5348 = vadd.f32 %v5136, %v5260
      %v5349 = vadd.f32 %v5137, %v5265
      %v5350 = vadd.f32 %v5138, %v5268
      %v5351 = vadd.f32 %v5139, %v5273
      %v5352 = vadd.f32 %v5140, %v5276
      %v5353 = vadd.f32 %v5141, %v5281
      %v5354 = vadd.f32 %v5142, %v5284
      %v5355 = vadd.f32 %v5143, %v5289
      %v5356 = vadd.f32 %v5144, %v5292
      %v5357 = vadd.f32 %v5145, %v5297
      %v5358 = vadd.f32 %v5146, %v5300
      %v5359 = vadd.f32 %v5147, %v5305
      %v5360 = vadd.f32 %v5148, %v5308
      %v5361 = vadd.f32 %v5149, %v5313
      %v5362 = vadd.f32 %v5150, %v5316
      %v5363 = vadd.f32 %v5151, %v5321
      %v5364 = vadd.f32 %v5152, %v5324
      %v5365 = vadd.f32 %v5153, %v5329
      %v5366 = vadd.f32 %v5154, %v5332
      %s5367 = scalar_lea.vmem %s4, 24
      %v5368 = vld [vmem:[%s5367] sm:$0xf]
      %v5371 = vunpack.c.l.b16 %v3349
      %v5372 = vunpack.c.l.b16 %v3350
      %v5373 = vpack.c.b16 %v5372, %v5371
      %v5375 = vsel %vm3790, %v5373, 0
      %v5378 = vsel %vm3839, %v5368, 0
      %5380 = vmatprep.subr.bf16.mxu0 0
      %5381 = vmatpush1.bf16.msra.mxu0 0
      %5382 = vmatprep.subr.bf16.mxu0 0
      %5383 = vmatpush1.bf16.msra.mxu0 0
      %5384 = vmatprep.subr.bf16.mxu0 0
      %5385 = vmatpush1.bf16.msra.mxu0 0
      %5386 = vmatprep.subr.bf16.mxu0 0
      %5387 = vmatpush1.bf16.msra.mxu0 0
      %5388 = vmatprep.subr.bf16.mxu0 0
      %5389 = vmatpush1.bf16.msra.mxu0 0
      %5390 = vmatprep.subr.bf16.mxu0 0
      %5391 = vmatpush1.bf16.msra.mxu0 0
      %5392 = vmatprep.subr.bf16.mxu0 0
      %5393 = vmatpush1.bf16.msra.mxu0 0
      %5394 = vmatprep.subr.bf16.mxu0 0
      %5395 = vmatpush1.bf16.msra.mxu0 %v5378
      %5396 = vmatprep.subr.bf16.mxu0 0
      %5397 = vmatpush2.bf16.msra.mxu0 0
      %5398 = vmatprep.subr.bf16.mxu0 0
      %5399 = vmatpush2.bf16.msra.mxu0 0
      %5400 = vmatprep.subr.bf16.mxu0 0
      %5401 = vmatpush2.bf16.msra.mxu0 0
      %5402 = vmatprep.subr.bf16.mxu0 0
      %5403 = vmatpush2.bf16.msra.mxu0 0
      %5404 = vmatprep.subr.bf16.mxu0 0
      %5405 = vmatpush2.bf16.msra.mxu0 0
      %5406 = vmatprep.subr.bf16.mxu0 0
      %5407 = vmatpush2.bf16.msra.mxu0 0
      %5408 = vmatprep.subr.bf16.mxu0 0
      %5409 = vmatpush2.bf16.msra.mxu0 0
      %5410 = vmatprep.subr.bf16.mxu0 0
      %5411 = vmatpush2.bf16.msra.mxu0 0
      %5412 = vmatprep.mubr.bf16.mxu0 0
      %5413 = vmatmul.mubr.bf16.gmra.mxu0 %v4091
      %v5414 = vpop.f32.mrf.mxu0
      %v5415 = vadd.f32 0.0, %v5414
      %v5416 = vpop.f32.mrf.mxu0
      %v5417 = vpop.f32.mrf.mxu0
      %v5418 = vadd.f32 0.0, %v5417
      %v5419 = vpop.f32.mrf.mxu0
      %5420 = vmatprep.mubr.bf16.mxu0 0
      %5421 = vmatmul.mubr.bf16.gmra.mxu0 %v4094
      %v5422 = vpop.f32.mrf.mxu0
      %v5423 = vadd.f32 0.0, %v5422
      %v5424 = vpop.f32.mrf.mxu0
      %v5425 = vpop.f32.mrf.mxu0
      %v5426 = vadd.f32 0.0, %v5425
      %v5427 = vpop.f32.mrf.mxu0
      %5428 = vmatprep.mubr.bf16.mxu0 0
      %5429 = vmatmul.mubr.bf16.gmra.mxu0 %v4097
      %v5430 = vpop.f32.mrf.mxu0
      %v5431 = vadd.f32 0.0, %v5430
      %v5432 = vpop.f32.mrf.mxu0
      %v5433 = vpop.f32.mrf.mxu0
      %v5434 = vadd.f32 0.0, %v5433
      %v5435 = vpop.f32.mrf.mxu0
      %5436 = vmatprep.mubr.bf16.mxu0 0
      %5437 = vmatmul.mubr.bf16.gmra.mxu0 %v4100
      %v5438 = vpop.f32.mrf.mxu0
      %v5439 = vadd.f32 0.0, %v5438
      %v5440 = vpop.f32.mrf.mxu0
      %v5441 = vpop.f32.mrf.mxu0
      %v5442 = vadd.f32 0.0, %v5441
      %v5443 = vpop.f32.mrf.mxu0
      %5444 = vmatprep.mubr.bf16.mxu0 0
      %5445 = vmatmul.mubr.bf16.gmra.mxu0 %v4103
      %v5446 = vpop.f32.mrf.mxu0
      %v5447 = vadd.f32 0.0, %v5446
      %v5448 = vpop.f32.mrf.mxu0
      %v5449 = vpop.f32.mrf.mxu0
      %v5450 = vadd.f32 0.0, %v5449
      %v5451 = vpop.f32.mrf.mxu0
      %5452 = vmatprep.mubr.bf16.mxu0 0
      %5453 = vmatmul.mubr.bf16.gmra.mxu0 %v4106
      %v5454 = vpop.f32.mrf.mxu0
      %v5455 = vadd.f32 0.0, %v5454
      %v5456 = vpop.f32.mrf.mxu0
      %v5457 = vpop.f32.mrf.mxu0
      %v5458 = vadd.f32 0.0, %v5457
      %v5459 = vpop.f32.mrf.mxu0
      %5460 = vmatprep.mubr.bf16.mxu0 0
      %5461 = vmatmul.mubr.bf16.gmra.mxu0 %v4109
      %v5462 = vpop.f32.mrf.mxu0
      %v5463 = vadd.f32 0.0, %v5462
      %v5464 = vpop.f32.mrf.mxu0
      %v5465 = vpop.f32.mrf.mxu0
      %v5466 = vadd.f32 0.0, %v5465
      %v5467 = vpop.f32.mrf.mxu0
      %5468 = vmatprep.mubr.bf16.mxu0 0
      %5469 = vmatmul.mubr.bf16.gmra.mxu0 %v4112
      %v5470 = vpop.f32.mrf.mxu0
      %v5471 = vadd.f32 0.0, %v5470
      %v5472 = vpop.f32.mrf.mxu0
      %v5473 = vpop.f32.mrf.mxu0
      %v5474 = vadd.f32 0.0, %v5473
      %v5475 = vpop.f32.mrf.mxu0
      %5476 = vmatprep.mubr.bf16.mxu0 0
      %5477 = vmatmul.mubr.bf16.gmra.mxu0 %v4115
      %v5478 = vpop.f32.mrf.mxu0
      %v5479 = vadd.f32 0.0, %v5478
      %v5480 = vpop.f32.mrf.mxu0
      %v5481 = vpop.f32.mrf.mxu0
      %v5482 = vadd.f32 0.0, %v5481
      %v5483 = vpop.f32.mrf.mxu0
      %5484 = vmatprep.mubr.bf16.mxu0 0
      %5485 = vmatmul.mubr.bf16.gmra.mxu0 %v4118
      %v5486 = vpop.f32.mrf.mxu0
      %v5487 = vadd.f32 0.0, %v5486
      %v5488 = vpop.f32.mrf.mxu0
      %v5489 = vpop.f32.mrf.mxu0
      %v5490 = vadd.f32 0.0, %v5489
      %v5491 = vpop.f32.mrf.mxu0
      %5492 = vmatprep.mubr.bf16.mxu0 0
      %5493 = vmatmul.mubr.bf16.gmra.mxu0 %v4121
      %v5494 = vpop.f32.mrf.mxu0
      %v5495 = vadd.f32 0.0, %v5494
      %v5496 = vpop.f32.mrf.mxu0
      %v5497 = vpop.f32.mrf.mxu0
      %v5498 = vadd.f32 0.0, %v5497
      %v5499 = vpop.f32.mrf.mxu0
      %5500 = vmatprep.mubr.bf16.mxu0 0
      %5501 = vmatmul.mubr.bf16.gmra.mxu0 %v4124
      %v5502 = vpop.f32.mrf.mxu0
      %v5503 = vadd.f32 0.0, %v5502
      %v5504 = vpop.f32.mrf.mxu0
      %v5505 = vpop.f32.mrf.mxu0
      %v5506 = vadd.f32 0.0, %v5505
      %v5507 = vpop.f32.mrf.mxu0
      %5508 = vmatprep.mubr.bf16.mxu0 0
      %5509 = vmatmul.mubr.bf16.gmra.mxu0 %v4127
      %v5510 = vpop.f32.mrf.mxu0
      %v5511 = vadd.f32 0.0, %v5510
      %v5512 = vpop.f32.mrf.mxu0
      %v5513 = vpop.f32.mrf.mxu0
      %v5514 = vadd.f32 0.0, %v5513
      %v5515 = vpop.f32.mrf.mxu0
      %5516 = vmatprep.mubr.bf16.mxu0 0
      %5517 = vmatmul.mubr.bf16.gmra.mxu0 %v4130
      %v5518 = vpop.f32.mrf.mxu0
      %v5519 = vadd.f32 0.0, %v5518
      %v5520 = vpop.f32.mrf.mxu0
      %v5521 = vpop.f32.mrf.mxu0
      %v5522 = vadd.f32 0.0, %v5521
      %v5523 = vpop.f32.mrf.mxu0
      %5524 = vmatprep.mubr.bf16.mxu0 0
      %5525 = vmatmul.mubr.bf16.gmra.mxu0 %v4729
      %v5526 = vpop.f32.mrf.mxu0
      %v5527 = vadd.f32 0.0, %v5526
      %v5528 = vpop.f32.mrf.mxu0
      %v5529 = vpop.f32.mrf.mxu0
      %v5530 = vadd.f32 0.0, %v5529
      %v5531 = vpop.f32.mrf.mxu0
      %5532 = vmatprep.mubr.bf16.mxu0 0
      %5533 = vmatmul.mubr.bf16.gmra.mxu0 %v5375
      %v5534 = vpop.f32.mrf.mxu0
      %v5535 = vadd.f32 0.0, %v5534
      %v5536 = vpop.f32.mrf.mxu0
      %v5537 = vpop.f32.mrf.mxu0
      %v5538 = vadd.f32 0.0, %v5537
      %v5539 = vpop.f32.mrf.mxu0
      %5540 = vdwg.mxu0
      %v5541 = vadd.f32 %v5335, %v5415
      %v5542 = vadd.f32 %v5336, %v5418
      %v5543 = vadd.f32 %v5337, %v5423
      %v5544 = vadd.f32 %v5338, %v5426
      %v5545 = vadd.f32 %v5339, %v5431
      %v5546 = vadd.f32 %v5340, %v5434
      %v5547 = vadd.f32 %v5341, %v5439
      %v5548 = vadd.f32 %v5342, %v5442
      %v5549 = vadd.f32 %v5343, %v5447
      %v5550 = vadd.f32 %v5344, %v5450
      %v5551 = vadd.f32 %v5345, %v5455
      %v5552 = vadd.f32 %v5346, %v5458
      %v5553 = vadd.f32 %v5347, %v5463
      %v5554 = vadd.f32 %v5348, %v5466
      %v5555 = vadd.f32 %v5349, %v5471
      %v5556 = vadd.f32 %v5350, %v5474
      %v5557 = vadd.f32 %v5351, %v5479
      %v5558 = vadd.f32 %v5352, %v5482
      %v5559 = vadd.f32 %v5353, %v5487
      %v5560 = vadd.f32 %v5354, %v5490
      %v5561 = vadd.f32 %v5355, %v5495
      %v5562 = vadd.f32 %v5356, %v5498
      %v5563 = vadd.f32 %v5357, %v5503
      %v5564 = vadd.f32 %v5358, %v5506
      %v5565 = vadd.f32 %v5359, %v5511
      %v5566 = vadd.f32 %v5360, %v5514
      %v5567 = vadd.f32 %v5361, %v5519
      %v5568 = vadd.f32 %v5362, %v5522
      %v5569 = vadd.f32 %v5363, %v5527
      %v5570 = vadd.f32 %v5364, %v5530
      %v5571 = vadd.f32 %v5365, %v5535
      %v5572 = vadd.f32 %v5366, %v5538
      %v5574 = vshrl.u32 %v3349, 16
      %v5576 = vrot.slane %v5574, 4
      %v5577 = vshll.u32 %v3349, 16
      %v5579 = vrot.slane %v5577, 5
      %v5580 = vor.u32 %v5576, %v5579
      %v5581 = vrot.slane %v5580, 4
      %v5583 = vshll.u32 %v3350, 16
      %v5585 = vrot.slane %v5583, 5
      %v5586 = vsel %vm3355, %v5581, %v5585
      %v5587 = vshrl.u32 %v3350, 16
      %v5589 = vrot.slane %v5587, 4
      %v5590 = vor.u32 %v5589, %v5585
      %v5591 = vrot.slane %v5590, 4
      %v5593 = vshll.u32 %v3351, 16
      %v5595 = vrot.slane %v5593, 5
      %v5596 = vsel %vm3355, %v5591, %v5595
      %s5597 = scalar_lea.vmem %s4, 28
      %v5598 = vld [vmem:[%s5597] sm:$0xf]
      %v5599 = vunpack.c.l.b16 %v5586
      %v5600 = vunpack.c.l.b16 %v5596
      %v5601 = vpack.c.b16 %v5600, %v5599
      %v5603 = vsel %vm3790, %v5601, 0
      %v5606 = vsel %vm3839, %v5598, 0
      %5608 = vmatprep.subr.bf16.mxu0 0
      %5609 = vmatpush1.bf16.msra.mxu0 0
      %5610 = vmatprep.subr.bf16.mxu0 0
      %5611 = vmatpush1.bf16.msra.mxu0 0
      %5612 = vmatprep.subr.bf16.mxu0 0
      %5613 = vmatpush1.bf16.msra.mxu0 0
      %5614 = vmatprep.subr.bf16.mxu0 0
      %5615 = vmatpush1.bf16.msra.mxu0 0
      %5616 = vmatprep.subr.bf16.mxu0 0
      %5617 = vmatpush1.bf16.msra.mxu0 0
      %5618 = vmatprep.subr.bf16.mxu0 0
      %5619 = vmatpush1.bf16.msra.mxu0 0
      %5620 = vmatprep.subr.bf16.mxu0 0
      %5621 = vmatpush1.bf16.msra.mxu0 0
      %5622 = vmatprep.subr.bf16.mxu0 0
      %5623 = vmatpush1.bf16.msra.mxu0 %v5606
      %5624 = vmatprep.subr.bf16.mxu0 0
      %5625 = vmatpush2.bf16.msra.mxu0 0
      %5626 = vmatprep.subr.bf16.mxu0 0
      %5627 = vmatpush2.bf16.msra.mxu0 0
      %5628 = vmatprep.subr.bf16.mxu0 0
      %5629 = vmatpush2.bf16.msra.mxu0 0
      %5630 = vmatprep.subr.bf16.mxu0 0
      %5631 = vmatpush2.bf16.msra.mxu0 0
      %5632 = vmatprep.subr.bf16.mxu0 0
      %5633 = vmatpush2.bf16.msra.mxu0 0
      %5634 = vmatprep.subr.bf16.mxu0 0
      %5635 = vmatpush2.bf16.msra.mxu0 0
      %5636 = vmatprep.subr.bf16.mxu0 0
      %5637 = vmatpush2.bf16.msra.mxu0 0
      %5638 = vmatprep.subr.bf16.mxu0 0
      %5639 = vmatpush2.bf16.msra.mxu0 0
      %5640 = vmatprep.mubr.bf16.mxu0 0
      %5641 = vmatmul.mubr.bf16.gmra.mxu0 %v3798
      %v5642 = vpop.f32.mrf.mxu0
      %v5643 = vadd.f32 0.0, %v5642
      %v5644 = vpop.f32.mrf.mxu0
      %v5645 = vpop.f32.mrf.mxu0
      %v5646 = vadd.f32 0.0, %v5645
      %v5647 = vpop.f32.mrf.mxu0
      %5648 = vmatprep.mubr.bf16.mxu0 0
      %5649 = vmatmul.mubr.bf16.gmra.mxu0 %v3801
      %v5650 = vpop.f32.mrf.mxu0
      %v5651 = vadd.f32 0.0, %v5650
      %v5652 = vpop.f32.mrf.mxu0
      %v5653 = vpop.f32.mrf.mxu0
      %v5654 = vadd.f32 0.0, %v5653
      %v5655 = vpop.f32.mrf.mxu0
      %5656 = vmatprep.mubr.bf16.mxu0 0
      %5657 = vmatmul.mubr.bf16.gmra.mxu0 %v3804
      %v5658 = vpop.f32.mrf.mxu0
      %v5659 = vadd.f32 0.0, %v5658
      %v5660 = vpop.f32.mrf.mxu0
      %v5661 = vpop.f32.mrf.mxu0
      %v5662 = vadd.f32 0.0, %v5661
      %v5663 = vpop.f32.mrf.mxu0
      %5664 = vmatprep.mubr.bf16.mxu0 0
      %5665 = vmatmul.mubr.bf16.gmra.mxu0 %v3807
      %v5666 = vpop.f32.mrf.mxu0
      %v5667 = vadd.f32 0.0, %v5666
      %v5668 = vpop.f32.mrf.mxu0
      %v5669 = vpop.f32.mrf.mxu0
      %v5670 = vadd.f32 0.0, %v5669
      %v5671 = vpop.f32.mrf.mxu0
      %5672 = vmatprep.mubr.bf16.mxu0 0
      %5673 = vmatmul.mubr.bf16.gmra.mxu0 %v3810
      %v5674 = vpop.f32.mrf.mxu0
      %v5675 = vadd.f32 0.0, %v5674
      %v5676 = vpop.f32.mrf.mxu0
      %v5677 = vpop.f32.mrf.mxu0
      %v5678 = vadd.f32 0.0, %v5677
      %v5679 = vpop.f32.mrf.mxu0
      %5680 = vmatprep.mubr.bf16.mxu0 0
      %5681 = vmatmul.mubr.bf16.gmra.mxu0 %v3813
      %v5682 = vpop.f32.mrf.mxu0
      %v5683 = vadd.f32 0.0, %v5682
      %v5684 = vpop.f32.mrf.mxu0
      %v5685 = vpop.f32.mrf.mxu0
      %v5686 = vadd.f32 0.0, %v5685
      %v5687 = vpop.f32.mrf.mxu0
      %5688 = vmatprep.mubr.bf16.mxu0 0
      %5689 = vmatmul.mubr.bf16.gmra.mxu0 %v3816
      %v5690 = vpop.f32.mrf.mxu0
      %v5691 = vadd.f32 0.0, %v5690
      %v5692 = vpop.f32.mrf.mxu0
      %v5693 = vpop.f32.mrf.mxu0
      %v5694 = vadd.f32 0.0, %v5693
      %v5695 = vpop.f32.mrf.mxu0
      %5696 = vmatprep.mubr.bf16.mxu0 0
      %5697 = vmatmul.mubr.bf16.gmra.mxu0 %v3819
      %v5698 = vpop.f32.mrf.mxu0
      %v5699 = vadd.f32 0.0, %v5698
      %v5700 = vpop.f32.mrf.mxu0
      %v5701 = vpop.f32.mrf.mxu0
      %v5702 = vadd.f32 0.0, %v5701
      %v5703 = vpop.f32.mrf.mxu0
      %5704 = vmatprep.mubr.bf16.mxu0 0
      %5705 = vmatmul.mubr.bf16.gmra.mxu0 %v3822
      %v5706 = vpop.f32.mrf.mxu0
      %v5707 = vadd.f32 0.0, %v5706
      %v5708 = vpop.f32.mrf.mxu0
      %v5709 = vpop.f32.mrf.mxu0
      %v5710 = vadd.f32 0.0, %v5709
      %v5711 = vpop.f32.mrf.mxu0
      %5712 = vmatprep.mubr.bf16.mxu0 0
      %5713 = vmatmul.mubr.bf16.gmra.mxu0 %v3825
      %v5714 = vpop.f32.mrf.mxu0
      %v5715 = vadd.f32 0.0, %v5714
      %v5716 = vpop.f32.mrf.mxu0
      %v5717 = vpop.f32.mrf.mxu0
      %v5718 = vadd.f32 0.0, %v5717
      %v5719 = vpop.f32.mrf.mxu0
      %5720 = vmatprep.mubr.bf16.mxu0 0
      %5721 = vmatmul.mubr.bf16.gmra.mxu0 %v3828
      %v5722 = vpop.f32.mrf.mxu0
      %v5723 = vadd.f32 0.0, %v5722
      %v5724 = vpop.f32.mrf.mxu0
      %v5725 = vpop.f32.mrf.mxu0
      %v5726 = vadd.f32 0.0, %v5725
      %v5727 = vpop.f32.mrf.mxu0
      %5728 = vmatprep.mubr.bf16.mxu0 0
      %5729 = vmatmul.mubr.bf16.gmra.mxu0 %v3831
      %v5730 = vpop.f32.mrf.mxu0
      %v5731 = vadd.f32 0.0, %v5730
      %v5732 = vpop.f32.mrf.mxu0
      %v5733 = vpop.f32.mrf.mxu0
      %v5734 = vadd.f32 0.0, %v5733
      %v5735 = vpop.f32.mrf.mxu0
      %5736 = vmatprep.mubr.bf16.mxu0 0
      %5737 = vmatmul.mubr.bf16.gmra.mxu0 %v3834
      %v5738 = vpop.f32.mrf.mxu0
      %v5739 = vadd.f32 0.0, %v5738
      %v5740 = vpop.f32.mrf.mxu0
      %v5741 = vpop.f32.mrf.mxu0
      %v5742 = vadd.f32 0.0, %v5741
      %v5743 = vpop.f32.mrf.mxu0
      %5744 = vmatprep.mubr.bf16.mxu0 0
      %5745 = vmatmul.mubr.bf16.gmra.mxu0 %v3837
      %v5746 = vpop.f32.mrf.mxu0
      %v5747 = vadd.f32 0.0, %v5746
      %v5748 = vpop.f32.mrf.mxu0
      %v5749 = vpop.f32.mrf.mxu0
      %v5750 = vadd.f32 0.0, %v5749
      %v5751 = vpop.f32.mrf.mxu0
      %5752 = vmatprep.mubr.bf16.mxu0 0
      %5753 = vmatmul.mubr.bf16.gmra.mxu0 %v4957
      %v5754 = vpop.f32.mrf.mxu0
      %v5755 = vadd.f32 0.0, %v5754
      %v5756 = vpop.f32.mrf.mxu0
      %v5757 = vpop.f32.mrf.mxu0
      %v5758 = vadd.f32 0.0, %v5757
      %v5759 = vpop.f32.mrf.mxu0
      %5760 = vmatprep.mubr.bf16.mxu0 0
      %5761 = vmatmul.mubr.bf16.gmra.mxu0 %v5603
      %v5762 = vpop.f32.mrf.mxu0
      %v5763 = vadd.f32 0.0, %v5762
      %v5764 = vpop.f32.mrf.mxu0
      %v5765 = vpop.f32.mrf.mxu0
      %v5766 = vadd.f32 0.0, %v5765
      %v5767 = vpop.f32.mrf.mxu0
      %5768 = vdwg.mxu0
      %v5769 = vadd.f32 %v5541, %v5643
      %v5770 = vadd.f32 %v5542, %v5646
      %v5771 = vadd.f32 %v5543, %v5651
      %v5772 = vadd.f32 %v5544, %v5654
      %v5773 = vadd.f32 %v5545, %v5659
      %v5774 = vadd.f32 %v5546, %v5662
      %v5775 = vadd.f32 %v5547, %v5667
      %v5776 = vadd.f32 %v5548, %v5670
      %v5777 = vadd.f32 %v5549, %v5675
      %v5778 = vadd.f32 %v5550, %v5678
      %v5779 = vadd.f32 %v5551, %v5683
      %v5780 = vadd.f32 %v5552, %v5686
      %v5781 = vadd.f32 %v5553, %v5691
      %v5782 = vadd.f32 %v5554, %v5694
      %v5783 = vadd.f32 %v5555, %v5699
      %v5784 = vadd.f32 %v5556, %v5702
      %v5785 = vadd.f32 %v5557, %v5707
      %v5786 = vadd.f32 %v5558, %v5710
      %v5787 = vadd.f32 %v5559, %v5715
      %v5788 = vadd.f32 %v5560, %v5718
      %v5789 = vadd.f32 %v5561, %v5723
      %v5790 = vadd.f32 %v5562, %v5726
      %v5791 = vadd.f32 %v5563, %v5731
      %v5792 = vadd.f32 %v5564, %v5734
      %v5793 = vadd.f32 %v5565, %v5739
      %v5794 = vadd.f32 %v5566, %v5742
      %v5795 = vadd.f32 %v5567, %v5747
      %v5796 = vadd.f32 %v5568, %v5750
      %v5797 = vadd.f32 %v5569, %v5755
      %v5798 = vadd.f32 %v5570, %v5758
      %v5799 = vadd.f32 %v5571, %v5763
      %v5800 = vadd.f32 %v5572, %v5766
      %v5802 = vrot.slane %v3349, 5
      %v5803 = vrot.slane %v5802, 4
      %v5804 = vrot.slane %v3350, 5
      %v5805 = vsel %vm4314, %v5803, %v5804
      %v5806 = vrot.slane %v5804, 4
      %v5807 = vrot.slane %v3351, 5
      %v5808 = vsel %vm4314, %v5806, %v5807
      %s5809 = scalar_lea.vmem %s4, 32
      %v5810 = vld [vmem:[%s5809] sm:$0xf]
      %v5811 = vunpack.c.l.b16 %v5805
      %v5812 = vunpack.c.l.b16 %v5808
      %v5813 = vpack.c.b16 %v5812, %v5811
      %v5815 = vsel %vm3790, %v5813, 0
      %v5818 = vsel %vm3839, %v5810, 0
      %5820 = vmatprep.subr.bf16.mxu0 0
      %5821 = vmatpush1.bf16.msra.mxu0 0
      %5822 = vmatprep.subr.bf16.mxu0 0
      %5823 = vmatpush1.bf16.msra.mxu0 0
      %5824 = vmatprep.subr.bf16.mxu0 0
      %5825 = vmatpush1.bf16.msra.mxu0 0
      %5826 = vmatprep.subr.bf16.mxu0 0
      %5827 = vmatpush1.bf16.msra.mxu0 0
      %5828 = vmatprep.subr.bf16.mxu0 0
      %5829 = vmatpush1.bf16.msra.mxu0 0
      %5830 = vmatprep.subr.bf16.mxu0 0
      %5831 = vmatpush1.bf16.msra.mxu0 0
      %5832 = vmatprep.subr.bf16.mxu0 0
      %5833 = vmatpush1.bf16.msra.mxu0 0
      %5834 = vmatprep.subr.bf16.mxu0 0
      %5835 = vmatpush1.bf16.msra.mxu0 %v5818
      %5836 = vmatprep.subr.bf16.mxu0 0
      %5837 = vmatpush2.bf16.msra.mxu0 0
      %5838 = vmatprep.subr.bf16.mxu0 0
      %5839 = vmatpush2.bf16.msra.mxu0 0
      %5840 = vmatprep.subr.bf16.mxu0 0
      %5841 = vmatpush2.bf16.msra.mxu0 0
      %5842 = vmatprep.subr.bf16.mxu0 0
      %5843 = vmatpush2.bf16.msra.mxu0 0
      %5844 = vmatprep.subr.bf16.mxu0 0
      %5845 = vmatpush2.bf16.msra.mxu0 0
      %5846 = vmatprep.subr.bf16.mxu0 0
      %5847 = vmatpush2.bf16.msra.mxu0 0
      %5848 = vmatprep.subr.bf16.mxu0 0
      %5849 = vmatpush2.bf16.msra.mxu0 0
      %5850 = vmatprep.subr.bf16.mxu0 0
      %5851 = vmatpush2.bf16.msra.mxu0 0
      %5852 = vmatprep.mubr.bf16.mxu0 0
      %5853 = vmatmul.mubr.bf16.gmra.mxu0 %v4484
      %v5854 = vpop.f32.mrf.mxu0
      %v5855 = vadd.f32 0.0, %v5854
      %v5856 = vpop.f32.mrf.mxu0
      %v5857 = vpop.f32.mrf.mxu0
      %v5858 = vadd.f32 0.0, %v5857
      %v5859 = vpop.f32.mrf.mxu0
      %5860 = vmatprep.mubr.bf16.mxu0 0
      %5861 = vmatmul.mubr.bf16.gmra.mxu0 %v4487
      %v5862 = vpop.f32.mrf.mxu0
      %v5863 = vadd.f32 0.0, %v5862
      %v5864 = vpop.f32.mrf.mxu0
      %v5865 = vpop.f32.mrf.mxu0
      %v5866 = vadd.f32 0.0, %v5865
      %v5867 = vpop.f32.mrf.mxu0
      %5868 = vmatprep.mubr.bf16.mxu0 0
      %5869 = vmatmul.mubr.bf16.gmra.mxu0 %v4490
      %v5870 = vpop.f32.mrf.mxu0
      %v5871 = vadd.f32 0.0, %v5870
      %v5872 = vpop.f32.mrf.mxu0
      %v5873 = vpop.f32.mrf.mxu0
      %v5874 = vadd.f32 0.0, %v5873
      %v5875 = vpop.f32.mrf.mxu0
      %5876 = vmatprep.mubr.bf16.mxu0 0
      %5877 = vmatmul.mubr.bf16.gmra.mxu0 %v4493
      %v5878 = vpop.f32.mrf.mxu0
      %v5879 = vadd.f32 0.0, %v5878
      %v5880 = vpop.f32.mrf.mxu0
      %v5881 = vpop.f32.mrf.mxu0
      %v5882 = vadd.f32 0.0, %v5881
      %v5883 = vpop.f32.mrf.mxu0
      %5884 = vmatprep.mubr.bf16.mxu0 0
      %5885 = vmatmul.mubr.bf16.gmra.mxu0 %v4496
      %v5886 = vpop.f32.mrf.mxu0
      %v5887 = vadd.f32 0.0, %v5886
      %v5888 = vpop.f32.mrf.mxu0
      %v5889 = vpop.f32.mrf.mxu0
      %v5890 = vadd.f32 0.0, %v5889
      %v5891 = vpop.f32.mrf.mxu0
      %5892 = vmatprep.mubr.bf16.mxu0 0
      %5893 = vmatmul.mubr.bf16.gmra.mxu0 %v4499
      %v5894 = vpop.f32.mrf.mxu0
      %v5895 = vadd.f32 0.0, %v5894
      %v5896 = vpop.f32.mrf.mxu0
      %v5897 = vpop.f32.mrf.mxu0
      %v5898 = vadd.f32 0.0, %v5897
      %v5899 = vpop.f32.mrf.mxu0
      %5900 = vmatprep.mubr.bf16.mxu0 0
      %5901 = vmatmul.mubr.bf16.gmra.mxu0 %v4502
      %v5902 = vpop.f32.mrf.mxu0
      %v5903 = vadd.f32 0.0, %v5902
      %v5904 = vpop.f32.mrf.mxu0
      %v5905 = vpop.f32.mrf.mxu0
      %v5906 = vadd.f32 0.0, %v5905
      %v5907 = vpop.f32.mrf.mxu0
      %5908 = vmatprep.mubr.bf16.mxu0 0
      %5909 = vmatmul.mubr.bf16.gmra.mxu0 %v4505
      %v5910 = vpop.f32.mrf.mxu0
      %v5911 = vadd.f32 0.0, %v5910
      %v5912 = vpop.f32.mrf.mxu0
      %v5913 = vpop.f32.mrf.mxu0
      %v5914 = vadd.f32 0.0, %v5913
      %v5915 = vpop.f32.mrf.mxu0
      %5916 = vmatprep.mubr.bf16.mxu0 0
      %5917 = vmatmul.mubr.bf16.gmra.mxu0 %v4508
      %v5918 = vpop.f32.mrf.mxu0
      %v5919 = vadd.f32 0.0, %v5918
      %v5920 = vpop.f32.mrf.mxu0
      %v5921 = vpop.f32.mrf.mxu0
      %v5922 = vadd.f32 0.0, %v5921
      %v5923 = vpop.f32.mrf.mxu0
      %5924 = vmatprep.mubr.bf16.mxu0 0
      %5925 = vmatmul.mubr.bf16.gmra.mxu0 %v4511
      %v5926 = vpop.f32.mrf.mxu0
      %v5927 = vadd.f32 0.0, %v5926
      %v5928 = vpop.f32.mrf.mxu0
      %v5929 = vpop.f32.mrf.mxu0
      %v5930 = vadd.f32 0.0, %v5929
      %v5931 = vpop.f32.mrf.mxu0
      %5932 = vmatprep.mubr.bf16.mxu0 0
      %5933 = vmatmul.mubr.bf16.gmra.mxu0 %v4514
      %v5934 = vpop.f32.mrf.mxu0
      %v5935 = vadd.f32 0.0, %v5934
      %v5936 = vpop.f32.mrf.mxu0
      %v5937 = vpop.f32.mrf.mxu0
      %v5938 = vadd.f32 0.0, %v5937
      %v5939 = vpop.f32.mrf.mxu0
      %5940 = vmatprep.mubr.bf16.mxu0 0
      %5941 = vmatmul.mubr.bf16.gmra.mxu0 %v4517
      %v5942 = vpop.f32.mrf.mxu0
      %v5943 = vadd.f32 0.0, %v5942
      %v5944 = vpop.f32.mrf.mxu0
      %v5945 = vpop.f32.mrf.mxu0
      %v5946 = vadd.f32 0.0, %v5945
      %v5947 = vpop.f32.mrf.mxu0
      %5948 = vmatprep.mubr.bf16.mxu0 0
      %5949 = vmatmul.mubr.bf16.gmra.mxu0 %v4520
      %v5950 = vpop.f32.mrf.mxu0
      %v5951 = vadd.f32 0.0, %v5950
      %v5952 = vpop.f32.mrf.mxu0
      %v5953 = vpop.f32.mrf.mxu0
      %v5954 = vadd.f32 0.0, %v5953
      %v5955 = vpop.f32.mrf.mxu0
      %5956 = vmatprep.mubr.bf16.mxu0 0
      %5957 = vmatmul.mubr.bf16.gmra.mxu0 %v4523
      %v5958 = vpop.f32.mrf.mxu0
      %v5959 = vadd.f32 0.0, %v5958
      %v5960 = vpop.f32.mrf.mxu0
      %v5961 = vpop.f32.mrf.mxu0
      %v5962 = vadd.f32 0.0, %v5961
      %v5963 = vpop.f32.mrf.mxu0
      %5964 = vmatprep.mubr.bf16.mxu0 0
      %5965 = vmatmul.mubr.bf16.gmra.mxu0 %v5169
      %v5966 = vpop.f32.mrf.mxu0
      %v5967 = vadd.f32 0.0, %v5966
      %v5968 = vpop.f32.mrf.mxu0
      %v5969 = vpop.f32.mrf.mxu0
      %v5970 = vadd.f32 0.0, %v5969
      %v5971 = vpop.f32.mrf.mxu0
      %5972 = vmatprep.mubr.bf16.mxu0 0
      %5973 = vmatmul.mubr.bf16.gmra.mxu0 %v5815
      %v5974 = vpop.f32.mrf.mxu0
      %v5975 = vadd.f32 0.0, %v5974
      %v5976 = vpop.f32.mrf.mxu0
      %v5977 = vpop.f32.mrf.mxu0
      %v5978 = vadd.f32 0.0, %v5977
      %v5979 = vpop.f32.mrf.mxu0
      %5980 = vdwg.mxu0
      %v5981 = vadd.f32 %v5769, %v5855
      %v5982 = vadd.f32 %v5770, %v5858
      %v5983 = vadd.f32 %v5771, %v5863
      %v5984 = vadd.f32 %v5772, %v5866
      %v5985 = vadd.f32 %v5773, %v5871
      %v5986 = vadd.f32 %v5774, %v5874
      %v5987 = vadd.f32 %v5775, %v5879
      %v5988 = vadd.f32 %v5776, %v5882
      %v5989 = vadd.f32 %v5777, %v5887
      %v5990 = vadd.f32 %v5778, %v5890
      %v5991 = vadd.f32 %v5779, %v5895
      %v5992 = vadd.f32 %v5780, %v5898
      %v5993 = vadd.f32 %v5781, %v5903
      %v5994 = vadd.f32 %v5782, %v5906
      %v5995 = vadd.f32 %v5783, %v5911
      %v5996 = vadd.f32 %v5784, %v5914
      %v5997 = vadd.f32 %v5785, %v5919
      %v5998 = vadd.f32 %v5786, %v5922
      %v5999 = vadd.f32 %v5787, %v5927
      %v6000 = vadd.f32 %v5788, %v5930
      %v6001 = vadd.f32 %v5789, %v5935
      %v6002 = vadd.f32 %v5790, %v5938
      %v6003 = vadd.f32 %v5791, %v5943
      %v6004 = vadd.f32 %v5792, %v5946
      %v6005 = vadd.f32 %v5793, %v5951
      %v6006 = vadd.f32 %v5794, %v5954
      %v6007 = vadd.f32 %v5795, %v5959
      %v6008 = vadd.f32 %v5796, %v5962
      %v6009 = vadd.f32 %v5797, %v5967
      %v6010 = vadd.f32 %v5798, %v5970
      %v6011 = vadd.f32 %v5799, %v5975
      %v6012 = vadd.f32 %v5800, %v5978
      %v6013 = vld [vmem:[%s5] sm:$0x1]
      %v6015 = vlaneseq
      %v6016 = vshrl.u32 %v6015, 7
      %v6017 = vsub.s32 0, %v6016
      %v6018 = vrot.slane %v6013, %v6017
      %v6020 = vmul.f32 %v5981, %v6018
      %v6021 = vmul.f32 %v5982, %v6018
      %v6022 = vmul.f32 %v5983, %v6018
      %v6023 = vmul.f32 %v5984, %v6018
      %v6024 = vmul.f32 %v5985, %v6018
      %v6025 = vmul.f32 %v5986, %v6018
      %v6026 = vmul.f32 %v5987, %v6018
      %v6027 = vmul.f32 %v5988, %v6018
      %v6028 = vmul.f32 %v5989, %v6018
      %v6029 = vmul.f32 %v5990, %v6018
      %v6030 = vmul.f32 %v5991, %v6018
      %v6031 = vmul.f32 %v5992, %v6018
      %v6032 = vmul.f32 %v5993, %v6018
      %v6033 = vmul.f32 %v5994, %v6018
      %v6034 = vmul.f32 %v5995, %v6018
      %v6035 = vmul.f32 %v5996, %v6018
      %v6036 = vmul.f32 %v5997, %v6018
      %v6037 = vmul.f32 %v5998, %v6018
      %v6038 = vmul.f32 %v5999, %v6018
      %v6039 = vmul.f32 %v6000, %v6018
      %v6040 = vmul.f32 %v6001, %v6018
      %v6041 = vmul.f32 %v6002, %v6018
      %v6042 = vmul.f32 %v6003, %v6018
      %v6043 = vmul.f32 %v6004, %v6018
      %v6044 = vmul.f32 %v6005, %v6018
      %v6045 = vmul.f32 %v6006, %v6018
      %v6046 = vmul.f32 %v6007, %v6018
      %v6047 = vmul.f32 %v6008, %v6018
      %v6048 = vmul.f32 %v6009, %v6018
      %v6049 = vmul.f32 %v6010, %v6018
      %v6050 = vmul.f32 %v6011, %v6018
      %v6051 = vmul.f32 %v6012, %v6018
      %v6052 = vld [vmem:[%s6] sm:$0x1]
      %v6054 = vlaneseq
      %v6055 = vshrl.u32 %v6054, 7
      %v6056 = vsub.s32 0, %v6055
      %v6057 = vrot.slane %v6052, %v6056
      %v6059 = vadd.f32 %v6020, %v6057
      %v6060 = vadd.f32 %v6021, %v6057
      %v6061 = vadd.f32 %v6022, %v6057
      %v6062 = vadd.f32 %v6023, %v6057
      %v6063 = vadd.f32 %v6024, %v6057
      %v6064 = vadd.f32 %v6025, %v6057
      %v6065 = vadd.f32 %v6026, %v6057
      %v6066 = vadd.f32 %v6027, %v6057
      %v6067 = vadd.f32 %v6028, %v6057
      %v6068 = vadd.f32 %v6029, %v6057
      %v6069 = vadd.f32 %v6030, %v6057
      %v6070 = vadd.f32 %v6031, %v6057
      %v6071 = vadd.f32 %v6032, %v6057
      %v6072 = vadd.f32 %v6033, %v6057
      %v6073 = vadd.f32 %v6034, %v6057
      %v6074 = vadd.f32 %v6035, %v6057
      %v6075 = vadd.f32 %v6036, %v6057
      %v6076 = vadd.f32 %v6037, %v6057
      %v6077 = vadd.f32 %v6038, %v6057
      %v6078 = vadd.f32 %v6039, %v6057
      %v6079 = vadd.f32 %v6040, %v6057
      %v6080 = vadd.f32 %v6041, %v6057
      %v6081 = vadd.f32 %v6042, %v6057
      %v6082 = vadd.f32 %v6043, %v6057
      %v6083 = vadd.f32 %v6044, %v6057
      %v6084 = vadd.f32 %v6045, %v6057
      %v6085 = vadd.f32 %v6046, %v6057
      %v6086 = vadd.f32 %v6047, %v6057
      %v6087 = vadd.f32 %v6048, %v6057
      %v6088 = vadd.f32 %v6049, %v6057
      %v6089 = vadd.f32 %v6050, %v6057
      %v6090 = vadd.f32 %v6051, %v6057
      %v6091 = vmax.f32 %v6059, 0.0
      %v6092 = vmax.f32 %v6060, 0.0
      %v6093 = vmax.f32 %v6061, 0.0
      %v6094 = vmax.f32 %v6062, 0.0
      %v6095 = vmax.f32 %v6063, 0.0
      %v6096 = vmax.f32 %v6064, 0.0
      %v6097 = vmax.f32 %v6065, 0.0
      %v6098 = vmax.f32 %v6066, 0.0
      %v6099 = vmax.f32 %v6067, 0.0
      %v6100 = vmax.f32 %v6068, 0.0
      %v6101 = vmax.f32 %v6069, 0.0
      %v6102 = vmax.f32 %v6070, 0.0
      %v6103 = vmax.f32 %v6071, 0.0
      %v6104 = vmax.f32 %v6072, 0.0
      %v6105 = vmax.f32 %v6073, 0.0
      %v6106 = vmax.f32 %v6074, 0.0
      %v6107 = vmax.f32 %v6075, 0.0
      %v6108 = vmax.f32 %v6076, 0.0
      %v6109 = vmax.f32 %v6077, 0.0
      %v6110 = vmax.f32 %v6078, 0.0
      %v6111 = vmax.f32 %v6079, 0.0
      %v6112 = vmax.f32 %v6080, 0.0
      %v6113 = vmax.f32 %v6081, 0.0
      %v6114 = vmax.f32 %v6082, 0.0
      %v6115 = vmax.f32 %v6083, 0.0
      %v6116 = vmax.f32 %v6084, 0.0
      %v6117 = vmax.f32 %v6085, 0.0
      %v6118 = vmax.f32 %v6086, 0.0
      %v6119 = vmax.f32 %v6087, 0.0
      %v6120 = vmax.f32 %v6088, 0.0
      %v6121 = vmax.f32 %v6089, 0.0
      %v6122 = vmax.f32 %v6090, 0.0
      %vm6171 = vcmask 1046528
      %v6172 = vrot.slane %v337, 1
      %v6173 = vrot.slane %v338, 1
      %v6174 = vsel %vm6171, %v6172, %v6173
      %v6175 = vrot.slane %v339, 1
      %v6176 = vsel %vm6171, %v6173, %v6175
      %v6177 = vrot.slane %v340, 1
      %v6178 = vrot.slane %v341, 1
      %v6179 = vsel %vm6171, %v6177, %v6178
      %v6180 = vrot.slane %v342, 1
      %v6181 = vsel %vm6171, %v6178, %v6180
      %v6182 = vrot.slane %v343, 1
      %v6183 = vrot.slane %v344, 1
      %v6184 = vsel %vm6171, %v6182, %v6183
      %v6185 = vrot.slane %v345, 1
      %v6186 = vsel %vm6171, %v6183, %v6185
      %v6187 = vrot.slane %v346, 1
      %v6188 = vrot.slane %v347, 1
      %v6189 = vsel %vm6171, %v6187, %v6188
      %v6190 = vrot.slane %v348, 1
      %v6191 = vsel %vm6171, %v6188, %v6190
      %v6192 = vrot.slane %v349, 1
      %v6193 = vrot.slane %v350, 1
      %v6194 = vsel %vm6171, %v6192, %v6193
      %v6195 = vrot.slane %v351, 1
      %v6196 = vsel %vm6171, %v6193, %v6195
      %v6197 = vrot.slane %v352, 1
      %v6198 = vrot.slane %v353, 1
      %v6199 = vsel %vm6171, %v6197, %v6198
      %v6200 = vrot.slane %v354, 1
      %v6201 = vsel %vm6171, %v6198, %v6200
      %v6202 = vrot.slane %v355, 1
      %v6203 = vrot.slane %v356, 1
      %v6204 = vsel %vm6171, %v6202, %v6203
      %v6205 = vrot.slane %v357, 1
      %v6206 = vsel %vm6171, %v6203, %v6205
      %v6207 = vrot.slane %v358, 1
      %v6208 = vrot.slane %v359, 1
      %v6209 = vsel %vm6171, %v6207, %v6208
      %v6210 = vrot.slane %v360, 1
      %v6211 = vsel %vm6171, %v6208, %v6210
      %v6212 = vrot.slane %v361, 1
      %v6213 = vrot.slane %v362, 1
      %v6214 = vsel %vm6171, %v6212, %v6213
      %v6215 = vrot.slane %v363, 1
      %v6216 = vsel %vm6171, %v6213, %v6215
      %v6217 = vrot.slane %v364, 1
      %v6218 = vrot.slane %v365, 1
      %v6219 = vsel %vm6171, %v6217, %v6218
      %v6220 = vrot.slane %v366, 1
      %v6221 = vsel %vm6171, %v6218, %v6220
      %v6222 = vrot.slane %v367, 1
      %v6223 = vrot.slane %v368, 1
      %v6224 = vsel %vm6171, %v6222, %v6223
      %v6225 = vrot.slane %v369, 1
      %v6226 = vsel %vm6171, %v6223, %v6225
      %v6227 = vrot.slane %v370, 1
      %v6228 = vrot.slane %v371, 1
      %v6229 = vsel %vm6171, %v6227, %v6228
      %v6230 = vrot.slane %v372, 1
      %v6231 = vsel %vm6171, %v6228, %v6230
      %v6232 = vrot.slane %v373, 1
      %v6233 = vrot.slane %v374, 1
      %v6234 = vsel %vm6171, %v6232, %v6233
      %v6235 = vrot.slane %v375, 1
      %v6236 = vsel %vm6171, %v6233, %v6235
      %v6237 = vrot.slane %v376, 1
      %v6238 = vrot.slane %v377, 1
      %v6239 = vsel %vm6171, %v6237, %v6238
      %v6240 = vrot.slane %v378, 1
      %v6241 = vsel %vm6171, %v6238, %v6240
      %v6242 = vrot.slane %v379, 1
      %v6243 = vrot.slane %v380, 1
      %v6244 = vsel %vm6171, %v6242, %v6243
      %v6245 = vrot.slane %v381, 1
      %v6246 = vsel %vm6171, %v6243, %v6245
      %v6247 = vrot.slane %v382, 1
      %v6248 = vrot.slane %v383, 1
      %v6249 = vsel %vm6171, %v6247, %v6248
      %v6250 = vrot.slane %v384, 1
      %v6251 = vsel %vm6171, %v6248, %v6250
      %v6284 = vpack.c.bf16 %v6176, %v6174
      %v6285 = vpack.c.bf16 %v6181, %v6179
      %v6286 = vpack.c.bf16 %v6186, %v6184
      %v6287 = vpack.c.bf16 %v6191, %v6189
      %v6288 = vpack.c.bf16 %v6196, %v6194
      %v6289 = vpack.c.bf16 %v6201, %v6199
      %v6290 = vpack.c.bf16 %v6206, %v6204
      %v6291 = vpack.c.bf16 %v6211, %v6209
      %v6292 = vpack.c.bf16 %v6216, %v6214
      %v6293 = vpack.c.bf16 %v6221, %v6219
      %v6294 = vpack.c.bf16 %v6226, %v6224
      %v6295 = vpack.c.bf16 %v6231, %v6229
      %v6296 = vpack.c.bf16 %v6236, %v6234
      %v6297 = vpack.c.bf16 %v6241, %v6239
      %v6298 = vpack.c.bf16 %v6246, %v6244
      %v6299 = vpack.c.bf16 %v6251, %v6249
      %v6300 = vld [vmem:[%s7] sm:$0x3]
      %v6301 = vld [vmem:[%s8] sm:$0x1]
      %v6303 = vlaneseq
      %v6304 = vshrl.u32 %v6303, 7
      %v6305 = vsub.s32 0, %v6304
      %v6306 = vrot.slane %v6301, %v6305
      %v6309 = vsel %vm620, %v6284, 0
      %v6312 = vsel %vm620, %v6285, 0
      %v6315 = vsel %vm620, %v6286, 0
      %v6318 = vsel %vm620, %v6287, 0
      %v6321 = vsel %vm620, %v6288, 0
      %v6324 = vsel %vm620, %v6289, 0
      %v6327 = vsel %vm620, %v6290, 0
      %v6330 = vsel %vm620, %v6291, 0
      %v6333 = vsel %vm620, %v6292, 0
      %v6336 = vsel %vm620, %v6293, 0
      %v6339 = vsel %vm620, %v6294, 0
      %v6342 = vsel %vm620, %v6295, 0
      %v6345 = vsel %vm620, %v6296, 0
      %v6348 = vsel %vm620, %v6297, 0
      %v6351 = vsel %vm620, %v6298, 0
      %v6354 = vsel %vm620, %v6299, 0
      %v6357 = vsel %vm669, %v6300, 0
      %6359 = vmatprep.subr.bf16.mxu0 0
      %6360 = vmatpush1.bf16.msra.mxu0 0
      %6361 = vmatprep.subr.bf16.mxu0 0
      %6362 = vmatpush1.bf16.msra.mxu0 0
      %6363 = vmatprep.subr.bf16.mxu0 0
      %6364 = vmatpush1.bf16.msra.mxu0 0
      %6365 = vmatprep.subr.bf16.mxu0 0
      %6366 = vmatpush1.bf16.msra.mxu0 0
      %6367 = vmatprep.subr.bf16.mxu0 0
      %6368 = vmatpush1.bf16.msra.mxu0 0
      %6369 = vmatprep.subr.bf16.mxu0 0
      %6370 = vmatpush1.bf16.msra.mxu0 0
      %6371 = vmatprep.subr.bf16.mxu0 0
      %6372 = vmatpush1.bf16.msra.mxu0 0
      %6373 = vmatprep.subr.bf16.mxu0 0
      %6374 = vmatpush1.bf16.msra.mxu0 %v6357
      %6375 = vmatprep.subr.bf16.mxu0 0
      %6376 = vmatpush2.bf16.msra.mxu0 0
      %6377 = vmatprep.subr.bf16.mxu0 0
      %6378 = vmatpush2.bf16.msra.mxu0 0
      %6379 = vmatprep.subr.bf16.mxu0 0
      %6380 = vmatpush2.bf16.msra.mxu0 0
      %6381 = vmatprep.subr.bf16.mxu0 0
      %6382 = vmatpush2.bf16.msra.mxu0 0
      %6383 = vmatprep.subr.bf16.mxu0 0
      %6384 = vmatpush2.bf16.msra.mxu0 0
      %6385 = vmatprep.subr.bf16.mxu0 0
      %6386 = vmatpush2.bf16.msra.mxu0 0
      %6387 = vmatprep.subr.bf16.mxu0 0
      %6388 = vmatpush2.bf16.msra.mxu0 0
      %6389 = vmatprep.subr.bf16.mxu0 0
      %6390 = vmatpush2.bf16.msra.mxu0 0
      %6391 = vmatprep.mubr.bf16.mxu0 0
      %6392 = vmatmul.mubr.bf16.gmra.mxu0 %v6309
      %v6393 = vpop.f32.mrf.mxu0
      %v6394 = vadd.f32 %v6306, %v6393
      %v6395 = vpop.f32.mrf.mxu0
      %v6396 = vpop.f32.mrf.mxu0
      %v6397 = vadd.f32 %v6306, %v6396
      %v6398 = vpop.f32.mrf.mxu0
      %6399 = vmatprep.mubr.bf16.mxu0 0
      %6400 = vmatmul.mubr.bf16.gmra.mxu0 %v6312
      %v6401 = vpop.f32.mrf.mxu0
      %v6402 = vadd.f32 %v6306, %v6401
      %v6403 = vpop.f32.mrf.mxu0
      %v6404 = vpop.f32.mrf.mxu0
      %v6405 = vadd.f32 %v6306, %v6404
      %v6406 = vpop.f32.mrf.mxu0
      %6407 = vmatprep.mubr.bf16.mxu0 0
      %6408 = vmatmul.mubr.bf16.gmra.mxu0 %v6315
      %v6409 = vpop.f32.mrf.mxu0
      %v6410 = vadd.f32 %v6306, %v6409
      %v6411 = vpop.f32.mrf.mxu0
      %v6412 = vpop.f32.mrf.mxu0
      %v6413 = vadd.f32 %v6306, %v6412
      %v6414 = vpop.f32.mrf.mxu0
      %6415 = vmatprep.mubr.bf16.mxu0 0
      %6416 = vmatmul.mubr.bf16.gmra.mxu0 %v6318
      %v6417 = vpop.f32.mrf.mxu0
      %v6418 = vadd.f32 %v6306, %v6417
      %v6419 = vpop.f32.mrf.mxu0
      %v6420 = vpop.f32.mrf.mxu0
      %v6421 = vadd.f32 %v6306, %v6420
      %v6422 = vpop.f32.mrf.mxu0
      %6423 = vmatprep.mubr.bf16.mxu0 0
      %6424 = vmatmul.mubr.bf16.gmra.mxu0 %v6321
      %v6425 = vpop.f32.mrf.mxu0
      %v6426 = vadd.f32 %v6306, %v6425
      %v6427 = vpop.f32.mrf.mxu0
      %v6428 = vpop.f32.mrf.mxu0
      %v6429 = vadd.f32 %v6306, %v6428
      %v6430 = vpop.f32.mrf.mxu0
      %6431 = vmatprep.mubr.bf16.mxu0 0
      %6432 = vmatmul.mubr.bf16.gmra.mxu0 %v6324
      %v6433 = vpop.f32.mrf.mxu0
      %v6434 = vadd.f32 %v6306, %v6433
      %v6435 = vpop.f32.mrf.mxu0
      %v6436 = vpop.f32.mrf.mxu0
      %v6437 = vadd.f32 %v6306, %v6436
      %v6438 = vpop.f32.mrf.mxu0
      %6439 = vmatprep.mubr.bf16.mxu0 0
      %6440 = vmatmul.mubr.bf16.gmra.mxu0 %v6327
      %v6441 = vpop.f32.mrf.mxu0
      %v6442 = vadd.f32 %v6306, %v6441
      %v6443 = vpop.f32.mrf.mxu0
      %v6444 = vpop.f32.mrf.mxu0
      %v6445 = vadd.f32 %v6306, %v6444
      %v6446 = vpop.f32.mrf.mxu0
      %6447 = vmatprep.mubr.bf16.mxu0 0
      %6448 = vmatmul.mubr.bf16.gmra.mxu0 %v6330
      %v6449 = vpop.f32.mrf.mxu0
      %v6450 = vadd.f32 %v6306, %v6449
      %v6451 = vpop.f32.mrf.mxu0
      %v6452 = vpop.f32.mrf.mxu0
      %v6453 = vadd.f32 %v6306, %v6452
      %v6454 = vpop.f32.mrf.mxu0
      %6455 = vmatprep.mubr.bf16.mxu0 0
      %6456 = vmatmul.mubr.bf16.gmra.mxu0 %v6333
      %v6457 = vpop.f32.mrf.mxu0
      %v6458 = vadd.f32 %v6306, %v6457
      %v6459 = vpop.f32.mrf.mxu0
      %v6460 = vpop.f32.mrf.mxu0
      %v6461 = vadd.f32 %v6306, %v6460
      %v6462 = vpop.f32.mrf.mxu0
      %6463 = vmatprep.mubr.bf16.mxu0 0
      %6464 = vmatmul.mubr.bf16.gmra.mxu0 %v6336
      %v6465 = vpop.f32.mrf.mxu0
      %v6466 = vadd.f32 %v6306, %v6465
      %v6467 = vpop.f32.mrf.mxu0
      %v6468 = vpop.f32.mrf.mxu0
      %v6469 = vadd.f32 %v6306, %v6468
      %v6470 = vpop.f32.mrf.mxu0
      %6471 = vmatprep.mubr.bf16.mxu0 0
      %6472 = vmatmul.mubr.bf16.gmra.mxu0 %v6339
      %v6473 = vpop.f32.mrf.mxu0
      %v6474 = vadd.f32 %v6306, %v6473
      %v6475 = vpop.f32.mrf.mxu0
      %v6476 = vpop.f32.mrf.mxu0
      %v6477 = vadd.f32 %v6306, %v6476
      %v6478 = vpop.f32.mrf.mxu0
      %6479 = vmatprep.mubr.bf16.mxu0 0
      %6480 = vmatmul.mubr.bf16.gmra.mxu0 %v6342
      %v6481 = vpop.f32.mrf.mxu0
      %v6482 = vadd.f32 %v6306, %v6481
      %v6483 = vpop.f32.mrf.mxu0
      %v6484 = vpop.f32.mrf.mxu0
      %v6485 = vadd.f32 %v6306, %v6484
      %v6486 = vpop.f32.mrf.mxu0
      %6487 = vmatprep.mubr.bf16.mxu0 0
      %6488 = vmatmul.mubr.bf16.gmra.mxu0 %v6345
      %v6489 = vpop.f32.mrf.mxu0
      %v6490 = vadd.f32 %v6306, %v6489
      %v6491 = vpop.f32.mrf.mxu0
      %v6492 = vpop.f32.mrf.mxu0
      %v6493 = vadd.f32 %v6306, %v6492
      %v6494 = vpop.f32.mrf.mxu0
      %6495 = vmatprep.mubr.bf16.mxu0 0
      %6496 = vmatmul.mubr.bf16.gmra.mxu0 %v6348
      %v6497 = vpop.f32.mrf.mxu0
      %v6498 = vadd.f32 %v6306, %v6497
      %v6499 = vpop.f32.mrf.mxu0
      %v6500 = vpop.f32.mrf.mxu0
      %v6501 = vadd.f32 %v6306, %v6500
      %v6502 = vpop.f32.mrf.mxu0
      %6503 = vmatprep.mubr.bf16.mxu0 0
      %6504 = vmatmul.mubr.bf16.gmra.mxu0 %v6351
      %v6505 = vpop.f32.mrf.mxu0
      %v6506 = vadd.f32 %v6306, %v6505
      %v6507 = vpop.f32.mrf.mxu0
      %v6508 = vpop.f32.mrf.mxu0
      %v6509 = vadd.f32 %v6306, %v6508
      %v6510 = vpop.f32.mrf.mxu0
      %6511 = vmatprep.mubr.bf16.mxu0 0
      %6512 = vmatmul.mubr.bf16.gmra.mxu0 %v6354
      %v6513 = vpop.f32.mrf.mxu0
      %v6514 = vadd.f32 %v6306, %v6513
      %v6515 = vpop.f32.mrf.mxu0
      %v6516 = vpop.f32.mrf.mxu0
      %v6517 = vadd.f32 %v6306, %v6516
      %v6518 = vpop.f32.mrf.mxu0
      %6519 = vdwg.mxu0
      %v6520 = vadd.f32 %v6091, %v6394
      %v6521 = vadd.f32 %v6092, %v6397
      %v6522 = vadd.f32 %v6093, %v6402
      %v6523 = vadd.f32 %v6094, %v6405
      %v6524 = vadd.f32 %v6095, %v6410
      %v6525 = vadd.f32 %v6096, %v6413
      %v6526 = vadd.f32 %v6097, %v6418
      %v6527 = vadd.f32 %v6098, %v6421
      %v6528 = vadd.f32 %v6099, %v6426
      %v6529 = vadd.f32 %v6100, %v6429
      %v6530 = vadd.f32 %v6101, %v6434
      %v6531 = vadd.f32 %v6102, %v6437
      %v6532 = vadd.f32 %v6103, %v6442
      %v6533 = vadd.f32 %v6104, %v6445
      %v6534 = vadd.f32 %v6105, %v6450
      %v6535 = vadd.f32 %v6106, %v6453
      %v6536 = vadd.f32 %v6107, %v6458
      %v6537 = vadd.f32 %v6108, %v6461
      %v6538 = vadd.f32 %v6109, %v6466
      %v6539 = vadd.f32 %v6110, %v6469
      %v6540 = vadd.f32 %v6111, %v6474
      %v6541 = vadd.f32 %v6112, %v6477
      %v6542 = vadd.f32 %v6113, %v6482
      %v6543 = vadd.f32 %v6114, %v6485
      %v6544 = vadd.f32 %v6115, %v6490
      %v6545 = vadd.f32 %v6116, %v6493
      %v6546 = vadd.f32 %v6117, %v6498
      %v6547 = vadd.f32 %v6118, %v6501
      %v6548 = vadd.f32 %v6119, %v6506
      %v6549 = vadd.f32 %v6120, %v6509
      %v6550 = vadd.f32 %v6121, %v6514
      %v6551 = vadd.f32 %v6122, %v6517
      %6552 = vst.msk [vmem:[%s332] sm:$0xff] %vm3790, %v6520
      %6553 = vst.msk [vmem:[%s332 + $0x8] sm:$0xff] %vm3790, %v6521
      %6554 = vst.msk [vmem:[%s332 + $0x10] sm:$0xff] %vm3790, %v6522
      %6555 = vst.msk [vmem:[%s332 + $0x18] sm:$0xff] %vm3790, %v6523
      %6556 = vst.msk [vmem:[%s332 + $0x20] sm:$0xff] %vm3790, %v6524
      %6557 = vst.msk [vmem:[%s332 + $0x28] sm:$0xff] %vm3790, %v6525
      %6558 = vst.msk [vmem:[%s332 + $0x30] sm:$0xff] %vm3790, %v6526
      %6559 = vst.msk [vmem:[%s332 + $0x38] sm:$0xff] %vm3790, %v6527
      %6560 = vst.msk [vmem:[%s332 + $0x40] sm:$0xff] %vm3790, %v6528
      %6561 = vst.msk [vmem:[%s332 + $0x48] sm:$0xff] %vm3790, %v6529
      %6562 = vst.msk [vmem:[%s332 + $0x50] sm:$0xff] %vm3790, %v6530
      %6563 = vst.msk [vmem:[%s332 + $0x58] sm:$0xff] %vm3790, %v6531
      %6564 = vst.msk [vmem:[%s332 + $0x60] sm:$0xff] %vm3790, %v6532
      %6565 = vst.msk [vmem:[%s332 + $0x68] sm:$0xff] %vm3790, %v6533
      %6566 = vst.msk [vmem:[%s332 + $0x70] sm:$0xff] %vm3790, %v6534
      %6567 = vst.msk [vmem:[%s332 + $0x78] sm:$0xff] %vm3790, %v6535
      %6568 = vst.msk [vmem:[%s332 + $0x80] sm:$0xff] %vm3790, %v6536
      %6569 = vst.msk [vmem:[%s332 + $0x88] sm:$0xff] %vm3790, %v6537
      %6570 = vst.msk [vmem:[%s332 + $0x90] sm:$0xff] %vm3790, %v6538
      %6571 = vst.msk [vmem:[%s332 + $0x98] sm:$0xff] %vm3790, %v6539
      %6572 = vst.msk [vmem:[%s332 + $0xa0] sm:$0xff] %vm3790, %v6540
      %6573 = vst.msk [vmem:[%s332 + $0xa8] sm:$0xff] %vm3790, %v6541
      %6574 = vst.msk [vmem:[%s332 + $0xb0] sm:$0xff] %vm3790, %v6542
      %6575 = vst.msk [vmem:[%s332 + $0xb8] sm:$0xff] %vm3790, %v6543
      %6576 = vst.msk [vmem:[%s332 + $0xc0] sm:$0xff] %vm3790, %v6544
      %6577 = vst.msk [vmem:[%s332 + $0xc8] sm:$0xff] %vm3790, %v6545
      %6578 = vst.msk [vmem:[%s332 + $0xd0] sm:$0xff] %vm3790, %v6546
      %6579 = vst.msk [vmem:[%s332 + $0xd8] sm:$0xff] %vm3790, %v6547
      %6580 = vst.msk [vmem:[%s332 + $0xe0] sm:$0xff] %vm3790, %v6548
      %6581 = vst.msk [vmem:[%s332 + $0xe8] sm:$0xff] %vm3790, %v6549
      %6582 = vst.msk [vmem:[%s332 + $0xf0] sm:$0xff] %vm3790, %v6550
      %6583 = vst.msk [vmem:[%s332 + $0xf8] sm:$0xff] %vm3790, %v6551
      %p6584 = scmp.lt.s32.totalorder %s20, 1
      %s6585 = scalar_select %p6584, %s20, 1
      %s6586 = smul.addr %s6585, 32
      %s6587 = smul.addr %s6586, 8
      %s6588 = scalar_lea.vmem %s9, %s6587
      // Predicated region
      $region57: #{conv_block_res_forward.1} parent=55 // pred_check
        %p6589 = pneg %p232
      $region58: #{conv_block_res_forward.1} parent=55 // pred_check_branch
        %6591 = sbr.rel (%p6589) target = $region60
      $region59: #{conv_block_res_forward.1} parent=55 // pred_region
        _
      $region60: #{conv_block_res_forward.1} parent=55 // pred_fallthru
        _
    $region56: #{conv_block_res_forward.1} parent=5 // pred_fallthru
      _
    %p6592 = scmp.le.s32.totalorder 2, %s15
    // Predicated region
    $region61: #{conv_block_res_forward.1} parent=5 // pred_check
      %p6593 = pneg %p6592
    $region62: #{conv_block_res_forward.1} parent=5 // pred_check_branch
      %6595 = sbr.rel (%p6593) target = $region64
    $region63: #{conv_block_res_forward.1} parent=5 // pred_region
      %s6596 = ssub.s32 %s15, 2
      // Predicated region
      $region65: #{conv_block_res_forward.1} parent=63 // pred_check
        %p6597 = pneg %p238
      $region66: #{conv_block_res_forward.1} parent=63 // pred_check_branch
        %6599 = sbr.rel (%p6597) target = $region68
      $region67: #{conv_block_res_forward.1} parent=63 // pred_region
        %p6600 = scmp.lt.s32.totalorder %s21, 1
        %s6601 = scalar_select %p6600, %s21, 1
        %s6602 = smul.addr %s6601, 32
        %s6603 = smul.addr %s6602, 8
        %s6604 = scalar_lea.vmem %s9, %s6603
      $region68: #{conv_block_res_forward.1} parent=63 // pred_fallthru
        _
    $region64: #{conv_block_res_forward.1} parent=5 // pred_fallthru
      _
  $region6: #{conv_block_res_forward.1} parent=0 // loop_footer
    %s19 = sadd.s32 1, %s15
  $region7: #{conv_block_res_forward.1} parent=0 // loop_footer_branch
    %14 = sbr.rel target = $region3
  $region8: #{conv_block_res_forward.1} parent=0 // loop_exit
    _

</llo_original>
